<compile_context>
chip_gen: v7x
topology: tpu7x:2x2x1
jax: 0.10.0
libtpu: 0.0.40
codegen_flags: <defaults>
</compile_context>

<pallas_src>
import functools
import math

import jax
import jax.numpy as jnp
from jax.experimental import pallas as pl
from jax.experimental.pallas import tpu as pltpu


# ----------------------------------------------------------------------------
# Small gridless helper (tiny ops: TIE encoders, head)
# ----------------------------------------------------------------------------
def _vmem_spec():
    return pl.BlockSpec(memory_space=pltpu.MemorySpace.VMEM)


def _call(kernel, out_shape, *args):
    return pl.pallas_call(
        kernel,
        out_shape=out_shape,
        in_specs=[_vmem_spec() for _ in args],
        out_specs=_vmem_spec(),
    )(*args)


# ----------------------------------------------------------------------------
# Kernels
# ----------------------------------------------------------------------------
def _linear_kernel(x_ref, w_ref, b_ref, o_ref):
    o_ref[...] = (
        jnp.dot(x_ref[...], w_ref[...], preferred_element_type=jnp.float32)
        + b_ref[...]
    ).astype(o_ref.dtype)


def _ie1_kernel(x_ref, w_ref, b_ref, g_ref, be_ref, o_ref):
    # Linear(1->D) as a VPU broadcast MAC (contraction dim 1 would waste the MXU),
    # then LayerNorm (f32 stats) and ReLU.
    y = x_ref[...] * w_ref[...] + b_ref[...]                      # (N, D) f32
    mu = jnp.mean(y, axis=-1, keepdims=True)
    var = jnp.mean(jnp.square(y - mu), axis=-1, keepdims=True)
    yn = (y - mu) * jax.lax.rsqrt(var + 1e-5) * g_ref[...] + be_ref[...]
    o_ref[...] = jnp.maximum(yn, 0.0).astype(o_ref.dtype)


def _ie2_kernel(x_ref, w_ref, b_ref, g_ref, be_ref, o_ref):
    # Linear(2->D) as two VPU broadcast MACs, then LayerNorm + ReLU.
    x = x_ref[...]
    y = x[:, 0:1] * w_ref[0:1, :] + x[:, 1:2] * w_ref[1:2, :] + b_ref[...]
    mu = jnp.mean(y, axis=-1, keepdims=True)
    var = jnp.mean(jnp.square(y - mu), axis=-1, keepdims=True)
    yn = (y - mu) * jax.lax.rsqrt(var + 1e-5) * g_ref[...] + be_ref[...]
    o_ref[...] = jnp.maximum(yn, 0.0).astype(o_ref.dtype)


def _encoder_layer_kernel(x_ref, mb_ref, wqkv_ref, bqkv_ref, wo_ref, bo_ref,
                          ln1g_ref, ln1b_ref, w1_ref, fb1_ref, w2_ref, fb2_ref,
                          ln2g_ref, ln2b_ref, o_ref, *, num_heads):
    # One fused transformer encoder layer for a single batch element:
    #   QKV (fused weight) -> per-head attention (masked softmax) -> out proj
    #   -> add+LN -> FFN -> add+LN   (post-LN, matching nn.TransformerEncoderLayer style)
    x = x_ref[0]                                   # (S, D) bf16
    S, D = x.shape
    H = num_heads
    Dh = D // H
    mb = mb_ref[0]                                 # (1, S) additive key-padding bias, f32

    # Fused QKV projection; the 1/sqrt(Dh) scale is pre-folded into the Q slice of wqkv.
    qkv = jnp.dot(x, wqkv_ref[...], preferred_element_type=jnp.float32) + bqkv_ref[...]

    heads = []
    for h in range(H):                             # H is small & static -> unrolled
        lo = h * Dh
        qh = qkv[:, lo:lo + Dh].astype(jnp.bfloat16)
        kh = qkv[:, D + lo:D + lo + Dh].astype(jnp.bfloat16)
        vh = qkv[:, 2 * D + lo:2 * D + lo + Dh].astype(jnp.bfloat16)
        s = jax.lax.dot_general(qh, kh, (((1,), (1,)), ((), ())),
                                preferred_element_type=jnp.float32)   # (S, S)
        s = s + mb                                 # broadcast key mask over query rows
        s = s - jnp.max(s, axis=-1, keepdims=True)
        p = jnp.exp(s)
        p = p * pl.reciprocal(jnp.sum(p, axis=-1, keepdims=True), approx=True)
        heads.append(jnp.dot(p.astype(jnp.bfloat16), vh,
                             preferred_element_type=jnp.float32))     # (S, Dh)

    ctx = jnp.concatenate(heads, axis=1).astype(jnp.bfloat16)          # (S, D)
    attn = jnp.dot(ctx, wo_ref[...], preferred_element_type=jnp.float32) + bo_ref[...]

    # residual 1 + LayerNorm (f32)
    y = attn + x.astype(jnp.float32)
    mu = jnp.mean(y, axis=-1, keepdims=True)
    var = jnp.mean(jnp.square(y - mu), axis=-1, keepdims=True)
    x1 = (y - mu) * jax.lax.rsqrt(var + 1e-5) * ln1g_ref[...] + ln1b_ref[...]

    # FFN
    hdn = jnp.dot(x1.astype(jnp.bfloat16), w1_ref[...],
                  preferred_element_type=jnp.float32) + fb1_ref[...]
    hdn = jnp.maximum(hdn, 0.0)
    ff = jnp.dot(hdn.astype(jnp.bfloat16), w2_ref[...],
                 preferred_element_type=jnp.float32) + fb2_ref[...]

    # residual 2 + LayerNorm (f32)
    y2 = ff + x1
    mu2 = jnp.mean(y2, axis=-1, keepdims=True)
    var2 = jnp.mean(jnp.square(y2 - mu2), axis=-1, keepdims=True)
    x2 = (y2 - mu2) * jax.lax.rsqrt(var2 + 1e-5) * ln2g_ref[...] + ln2b_ref[...]
    o_ref[0] = x2.astype(o_ref.dtype)


def _head_kernel(cls_ref, demo_ref, lng_ref, lnb_ref, w1a_ref, w1b_ref, b1_ref,
                 bng_ref, bnb_ref, bnm_ref, bnv_ref, w2_ref, b2_ref, o_ref):
    # LayerNorm(final_cls) -> [concat with demo realized as split-weight matmuls]
    # -> Linear -> BatchNorm1d (eval, running stats) -> ReLU -> Linear
    c = cls_ref[...].astype(jnp.float32)
    mu = jnp.mean(c, axis=-1, keepdims=True)
    var = jnp.mean(jnp.square(c - mu), axis=-1, keepdims=True)
    cn = (c - mu) * jax.lax.rsqrt(var + 1e-5) * lng_ref[...] + lnb_ref[...]

    h = (jnp.dot(cn.astype(jnp.bfloat16), w1a_ref[...], preferred_element_type=jnp.float32)
         + jnp.dot(demo_ref[...], w1b_ref[...], preferred_element_type=jnp.float32)
         + b1_ref[...])
    h = (h - bnm_ref[...]) * jax.lax.rsqrt(bnv_ref[...] + 1e-5) * bng_ref[...] + bnb_ref[...]
    h = jnp.maximum(h, 0.0)
    o_ref[...] = jnp.dot(h.astype(jnp.bfloat16), w2_ref[...],
                         preferred_element_type=jnp.float32) + b2_ref[...]


# ----------------------------------------------------------------------------
# Kernel wrappers
# ----------------------------------------------------------------------------
def linear_rows(x2d, w, b, *, tm=256):
    """Row-tiled bf16 linear: grid over rows, weights resident across grid steps."""
    n, k = x2d.shape
    dout = w.shape[1]
    tm = min(tm, n)
    return pl.pallas_call(
        _linear_kernel,
        out_shape=jax.ShapeDtypeStruct((n, dout), jnp.bfloat16),
        grid=(pl.cdiv(n, tm),),
        in_specs=[pl.BlockSpec((tm, k), lambda i: (i, 0)),
                  pl.BlockSpec((k, dout), lambda i: (0, 0)),
                  pl.BlockSpec((1, dout), lambda i: (0, 0))],
        out_specs=pl.BlockSpec((tm, dout), lambda i: (i, 0)),
        compiler_params=pltpu.CompilerParams(dimension_semantics=("parallel",)),
    )(x2d, w, b)


def ie1(x_col, p):
    n, d = x_col.shape[0], p["w"].shape[1]
    return _call(_ie1_kernel, jax.ShapeDtypeStruct((n, d), jnp.bfloat16),
                 x_col, p["w"], p["b"], p["ln_g"], p["ln_b"])


def ie2(x2, p):
    n, d = x2.shape[0], p["w"].shape[1]
    return _call(_ie2_kernel, jax.ShapeDtypeStruct((n, d), jnp.bfloat16),
                 x2, p["w"], p["b"], p["ln_g"], p["ln_b"])


def encoder_layer(x_bsd, mask_bias, lp, num_heads):
    B, S, D = x_bsd.shape
    dff = lp["w1"].shape[1]
    kern = functools.partial(_encoder_layer_kernel, num_heads=num_heads)
    return pl.pallas_call(
        kern,
        out_shape=jax.ShapeDtypeStruct((B, S, D), jnp.bfloat16),
        grid=(B,),
        in_specs=[
            pl.BlockSpec((1, S, D), lambda b: (b, 0, 0)),      # x
            pl.BlockSpec((1, 1, S), lambda b: (b, 0, 0)),      # additive mask bias
            pl.BlockSpec((D, 3 * D), lambda b: (0, 0)),        # wqkv (bf16)
            pl.BlockSpec((1, 3 * D), lambda b: (0, 0)),        # bqkv (f32)
            pl.BlockSpec((D, D), lambda b: (0, 0)),            # wo
            pl.BlockSpec((1, D), lambda b: (0, 0)),            # bo
            pl.BlockSpec((1, D), lambda b: (0, 0)),            # ln1 gamma
            pl.BlockSpec((1, D), lambda b: (0, 0)),            # ln1 beta
            pl.BlockSpec((D, dff), lambda b: (0, 0)),          # w1
            pl.BlockSpec((1, dff), lambda b: (0, 0)),          # b1
            pl.BlockSpec((dff, D), lambda b: (0, 0)),          # w2
            pl.BlockSpec((1, D), lambda b: (0, 0)),            # b2
            pl.BlockSpec((1, D), lambda b: (0, 0)),            # ln2 gamma
            pl.BlockSpec((1, D), lambda b: (0, 0)),            # ln2 beta
        ],
        out_specs=pl.BlockSpec((1, S, D), lambda b: (b, 0, 0)),
        compiler_params=pltpu.CompilerParams(dimension_semantics=("parallel",)),
    )(x_bsd, mask_bias, lp["wqkv"], lp["bqkv"], lp["wo"], lp["bo"],
      lp["ln1_g"], lp["ln1_b"], lp["w1"], lp["b1"], lp["w2"], lp["b2"],
      lp["ln2_g"], lp["ln2_b"])


def head(final_cls, demo_emb, ln_g, ln_b, p):
    B = final_cls.shape[0]
    dout = p["w2"].shape[1]
    return _call(_head_kernel, jax.ShapeDtypeStruct((B, dout), jnp.float32),
                 final_cls, demo_emb, ln_g, ln_b, p["w1a"], p["w1b"], p["b1"],
                 p["bn_g"], p["bn_b"], p["bn_m"], p["bn_v"], p["w2"], p["b2"])


# ----------------------------------------------------------------------------
# Parameter init (deterministic, PyTorch-Linear-style uniform; weights bf16)
# ----------------------------------------------------------------------------
def _uniform_linear(key, din, dout):
    k1, k2 = jax.random.split(key)
    lim = 1.0 / math.sqrt(din)
    w = jax.random.uniform(k1, (din, dout), jnp.float32, -lim, lim)
    b = jax.random.uniform(k2, (1, dout), jnp.float32, -lim, lim)
    return w, b


def _init_ie(key, din, dout):
    w, b = _uniform_linear(key, din, dout)
    return {"w": w, "b": b,
            "ln_g": jnp.ones((1, dout), jnp.float32),
            "ln_b": jnp.zeros((1, dout), jnp.float32)}


def init_params(key, model_dim, num_heads, num_layers, patch_dim, n_img_patches):
    D = model_dim
    Dh = D // num_heads
    keys = jax.random.split(key, 16 + num_layers)
    ki = iter(keys)
    params = {
        "ie_vslt": _init_ie(next(ki), 1, D),
        "ie_time": _init_ie(next(ki), 1, D),
        "ie_demo": _init_ie(next(ki), 2, D),
        "ie_feat": (jax.random.normal(next(ki), (20, D), jnp.float32) * 0.02
                    ).astype(jnp.bfloat16),
        "img_pos": (jax.random.normal(next(ki), (1, n_img_patches, D), jnp.float32) * 0.02
                    ).astype(jnp.bfloat16),
        "cls_token": (jax.random.normal(next(ki), (1, 1, D), jnp.float32) * 0.02
                      ).astype(jnp.bfloat16),
        "ln_final_g": jnp.ones((1, D), jnp.float32),
        "ln_final_b": jnp.zeros((1, D), jnp.float32),
        "layers": [],
    }
    tw, tb = _uniform_linear(next(ki), 768, D)
    params["txt_w"], params["txt_b"] = tw.astype(jnp.bfloat16), tb
    pw, pb = _uniform_linear(next(ki), patch_dim, D)
    params["patch_w"], params["patch_b"] = pw.astype(jnp.bfloat16), pb

    d_ff = 4 * D
    scale = 1.0 / math.sqrt(Dh)
    for _ in range(num_layers):
        lk = jax.random.split(next(ki), 6)
        wq, bq = _uniform_linear(lk[0], D, D)
        wk, bk = _uniform_linear(lk[1], D, D)
        wv, bv = _uniform_linear(lk[2], D, D)
        wo, bo = _uniform_linear(lk[3], D, D)
        w1, b1 = _uniform_linear(lk[4], D, d_ff)
        w2, b2 = _uniform_linear(lk[5], d_ff, D)
        # Fused QKV weight; the attention scale is folded into the Q slice once here.
        wqkv = jnp.concatenate([wq * scale, wk, wv], axis=1).astype(jnp.bfloat16)
        bqkv = jnp.concatenate([bq * scale, bk, bv], axis=1)
        params["layers"].append({
            "wqkv": wqkv, "bqkv": bqkv,
            "wo": wo.astype(jnp.bfloat16), "bo": bo,
            "w1": w1.astype(jnp.bfloat16), "b1": b1,
            "w2": w2.astype(jnp.bfloat16), "b2": b2,
            "ln1_g": jnp.ones((1, D), jnp.float32), "ln1_b": jnp.zeros((1, D), jnp.float32),
            "ln2_g": jnp.ones((1, D), jnp.float32), "ln2_b": jnp.zeros((1, D), jnp.float32),
        })

    fw1, fb1 = _uniform_linear(next(ki), 2 * D, D)
    fw2, fb2 = _uniform_linear(next(ki), D, 2)
    params["fc"] = {
        "w1a": fw1[:D].astype(jnp.bfloat16),    # multiplies LayerNorm(final_cls)
        "w1b": fw1[D:].astype(jnp.bfloat16),    # multiplies demo_embedding
        "b1": fb1,
        "w2": fw2.astype(jnp.bfloat16), "b2": fb2,
        "bn_g": jnp.ones((1, D), jnp.float32), "bn_b": jnp.zeros((1, D), jnp.float32),
        "bn_m": jnp.zeros((1, D), jnp.float32), "bn_v": jnp.ones((1, D), jnp.float32),
    }
    return params


# ----------------------------------------------------------------------------
# Model glue
# ----------------------------------------------------------------------------
def sinusoidal_pe(length, d):
    pos = jnp.arange(length, dtype=jnp.float32)[:, None]
    i = jnp.arange(d, dtype=jnp.float32)[None, :]
    angle = pos / jnp.power(10000.0, (2.0 * jnp.floor(i / 2.0)) / d)
    return jnp.where((jnp.arange(d)[None, :] % 2) == 0, jnp.sin(angle), jnp.cos(angle))


def tri_mt_v1_forward(params, x, age, gen, input_lengths, txts, txt_lengths,
                      img, img_time, txt_time, *, num_heads, patch_size):
    B, Lv, _ = x.shape
    D = params["cls_token"].shape[-1]
    Lt = txts.shape[1]

    # ---- vslt TIE embedding --------------------------------------------------
    value_embedding = ie1(x[:, :, 1].reshape(B * Lv, 1), params["ie_vslt"])
    time_embedding = ie1(x[:, :, 0].reshape(B * Lv, 1), params["ie_time"])
    feat_idx = x[:, :, 2].astype(jnp.int32)
    feat_embedding = jnp.take(params["ie_feat"], feat_idx, axis=0)            # (B,Lv,D)
    vslt_embedding = (value_embedding + time_embedding).reshape(B, Lv, D) + feat_embedding

    demographic = jnp.concatenate([age[:, None], gen[:, None]], axis=1)       # (B,2)
    demo_embedding = ie2(demographic, params["ie_demo"])                      # (B,D) bf16

    # ---- txt embedding (biobert features -> Linear) --------------------------
    txt_embedding = linear_rows(txts.reshape(B * Lt, 768).astype(jnp.bfloat16),
                                params["txt_w"], params["txt_b"]).reshape(B, Lt, D)

    # ---- img patch embedding --------------------------------------------------
    Bh, C, Hh, Wh = img.shape
    ph = pw = patch_size
    nH, nW = Hh // ph, Wh // pw
    patches = (img.reshape(B, C, nH, ph, nW, pw)
                  .transpose(0, 2, 4, 1, 3, 5)
                  .reshape(B, nH * nW, C * ph * pw))
    Li = nH * nW
    img_embedding = linear_rows(patches.reshape(B * Li, C * ph * pw).astype(jnp.bfloat16),
                                params["patch_w"], params["patch_b"]).reshape(B, Li, D)
    img_embedding = img_embedding + params["img_pos"]

    # ---- imgtxt_time == 1 : add time + feat-type embeddings -------------------
    img_time_emb = ie1(img_time[:, None], params["ie_time"])[:, None, :]
    txt_time_emb = ie1(txt_time[:, None], params["ie_time"])[:, None, :]
    img_embedding = img_embedding + img_time_emb + params["ie_feat"][18][None, None, :]
    txt_embedding = txt_embedding + txt_time_emb + params["ie_feat"][19][None, None, :]

    # ---- fusion transformer (CLS + vslt + img + txt) ---------------------------
    # use_pe = [False, False, True] -> sinusoidal PE on txt tokens only
    txt_embedding = txt_embedding + sinusoidal_pe(Lt, D)[None].astype(jnp.bfloat16)
    cls = jnp.broadcast_to(params["cls_token"], (B, 1, D))
    seq = jnp.concatenate([cls, vslt_embedding, img_embedding, txt_embedding], axis=1)
    S = seq.shape[1]

    # key-padding mask as additive bias, computed ONCE and reused by every layer
    valid_cls = jnp.ones((B, 1), bool)
    valid_v = jnp.arange(Lv)[None, :] < input_lengths[:, None]
    valid_i = jnp.ones((B, Li), bool)
    valid_t = jnp.arange(Lt)[None, :] < jnp.minimum(txt_lengths + 2, Lt)[:, None]
    valid = jnp.concatenate([valid_cls, valid_v, valid_i, valid_t], axis=1)   # (B,S)
    mask_bias = jnp.where(valid, 0.0, -1e30).astype(jnp.float32)[:, None, :]  # (B,1,S)

    ctx = seq.astype(jnp.bfloat16)
    for lp in params["layers"]:
        ctx = encoder_layer(ctx, mask_bias, lp, num_heads)

    # ---- head ------------------------------------------------------------------
    final_cls = ctx[:, 0, :]                                                  # (B, D)
    output = head(final_cls, demo_embedding,
                  params["ln_final_g"], params["ln_final_b"], params["fc"])   # (B, 2)
    return output[:, 0], None, None


# ----------------------------------------------------------------------------
# Demo
# ----------------------------------------------------------------------------
if __name__ == "__main__":
    key = jax.random.PRNGKey(0)
    B, Lv, Lt, D, H, LAYERS = 2, 8, 4, 32, 4, 2
    IMG_HW, PATCH = 16, 8

    kx, kv, kf, ka, kg, kt, ki, kt1, kt2, kp = jax.random.split(key, 10)
    times = jnp.linspace(0.0, 1.0, Lv)[None, :].repeat(B, axis=0)
    values = jax.random.normal(kv, (B, Lv))
    feats = jax.random.randint(kf, (B, Lv), 0, 20).astype(jnp.float32)
    x = jnp.stack([times, values, feats], axis=-1)                            # (B, Lv, 3)

    age = jax.random.uniform(ka, (B,))
    gen = jax.random.bernoulli(kg, 0.5, (B,)).astype(jnp.float32)
    input_lengths = jnp.array([8, 5], jnp.int32)
    txts = jax.random.normal(kt, (B, Lt, 768))                                # biobert feats
    txt_lengths = jnp.array([2, 1], jnp.int32)
    img = jax.random.normal(ki, (B, 1, IMG_HW, IMG_HW))                       # NCHW
    img_time = jax.random.uniform(kt1, (B,))
    txt_time = jax.random.uniform(kt2, (B,))

    params = init_params(kp, model_dim=D, num_heads=H, num_layers=LAYERS,
                         patch_dim=PATCH * PATCH, n_img_patches=(IMG_HW // PATCH) ** 2)

    fwd = jax.jit(functools.partial(tri_mt_v1_forward, num_heads=H, patch_size=PATCH))
    out, out2, out3 = fwd(params, x, age, gen, input_lengths, txts, txt_lengths,
                          img, img_time, txt_time)
    jax.block_until_ready(out)
    assert out.shape == (B,)
    assert bool(jnp.all(jnp.isfinite(out)))
    print("KERNEL_OK")
</pallas_src>

<mosaic_0001>
module attributes {stable_mosaic.version = 11 : i64} {
  func.func @_linear_kernel(%arg0: i32, %arg1: memref<8x768xbf16, #tpu.memory_space<vmem>>, %arg2: memref<768x32xbf16, #tpu.memory_space<vmem>>, %arg3: memref<1x32xf32, #tpu.memory_space<vmem>>, %arg4: memref<8x32xbf16, #tpu.memory_space<vmem>>) attributes {dimension_semantics = [#tpu.dimension_semantics<parallel>], iteration_bounds = array<i64: 1>, scalar_prefetch = 0 : i64, scratch_operands = 0 : i64, tpu.core_type = #tpu.core_type<tc>, window_params = [{transform_indices = @transform_0, window_bounds = array<i64: 8, 768>}, {pipeline_mode = #tpu.pipeline_mode<synchronous>, transform_indices = @transform_1, window_bounds = array<i64: 768, 32>}, {pipeline_mode = #tpu.pipeline_mode<synchronous>, transform_indices = @transform_2, window_bounds = array<i64: 1, 32>}, {transform_indices = @transform_3, window_bounds = array<i64: 8, 32>}]} {
    %c0 = arith.constant 0 : index
    %c0_0 = arith.constant 0 : index
    %0 = vector.load %arg1[%c0, %c0_0] : memref<8x768xbf16, #tpu.memory_space<vmem>>, vector<8x768xbf16>
    %c0_1 = arith.constant 0 : index
    %c0_2 = arith.constant 0 : index
    %1 = vector.load %arg2[%c0_1, %c0_2] : memref<768x32xbf16, #tpu.memory_space<vmem>>, vector<768x32xbf16>
    %cst = arith.constant dense<0.000000e+00> : vector<8x32xf32>
    %2 = tpu.matmul %0, %1, %cst {dimension_numbers = #tpu.dot_dimension_numbers<[1], [0], [0], [1], [0, 0, 1, 1], [], []>} : vector<8x768xbf16>, vector<768x32xbf16>, vector<8x32xf32> -> vector<8x32xf32>
    %c0_3 = arith.constant 0 : index
    %c0_4 = arith.constant 0 : index
    %3 = vector.load %arg3[%c0_3, %c0_4] : memref<1x32xf32, #tpu.memory_space<vmem>>, vector<1x32xf32>
    %4 = vector.broadcast %3 : vector<1x32xf32> to vector<8x32xf32>
    %5 = arith.addf %2, %4 : vector<8x32xf32>
    %6 = arith.truncf %5 : vector<8x32xf32> to vector<8x32xbf16>
    %c0_5 = arith.constant 0 : index
    %c0_6 = arith.constant 0 : index
    %7 = vector.load %arg4[%c0_5, %c0_6] : memref<8x32xbf16, #tpu.memory_space<vmem>>, vector<8x32xbf16>
    tpu.vector_store %arg4[%c0_5, %c0_6], %6 {strides = array<i32>} : memref<8x32xbf16, #tpu.memory_space<vmem>>, vector<8x32xbf16>,
    return
  }
  func.func @transform_0(%arg0: i32) -> (i32, i32) {
    %c0_i32 = arith.constant 0 : i32
    %c0_i32_0 = arith.constant 0 : i32
    return %arg0, %c0_i32 : i32, i32
  }
  func.func @transform_1(%arg0: i32) -> (i32, i32) {
    %c0_i32 = arith.constant 0 : i32
    %c0_i32_0 = arith.constant 0 : i32
    %c0_i32_1 = arith.constant 0 : i32
    return %c0_i32, %c0_i32_0 : i32, i32
  }
  func.func @transform_2(%arg0: i32) -> (i32, i32) {
    %c0_i32 = arith.constant 0 : i32
    %c0_i32_0 = arith.constant 0 : i32
    %c0_i32_1 = arith.constant 0 : i32
    return %c0_i32, %c0_i32_0 : i32, i32
  }
  func.func @transform_3(%arg0: i32) -> (i32, i32) {
    %c0_i32 = arith.constant 0 : i32
    %c0_i32_0 = arith.constant 0 : i32
    return %arg0, %c0_i32 : i32, i32
  }
}

module attributes {stable_mosaic.version = 11 : i64} {
  func.func @_ie1_kernel(%arg0: memref<2x1xf32, #tpu.memory_space<vmem>>, %arg1: memref<1x32xf32, #tpu.memory_space<vmem>>, %arg2: memref<1x32xf32, #tpu.memory_space<vmem>>, %arg3: memref<1x32xf32, #tpu.memory_space<vmem>>, %arg4: memref<1x32xf32, #tpu.memory_space<vmem>>, %arg5: memref<2x32xbf16, #tpu.memory_space<vmem>>) attributes {dimension_semantics = [], scalar_prefetch = 0 : i64, scratch_operands = 0 : i64, tpu.core_type = #tpu.core_type<tc>} {
    %c0 = arith.constant 0 : index
    %c0_0 = arith.constant 0 : index
    %0 = vector.load %arg0[%c0, %c0_0] : memref<2x1xf32, #tpu.memory_space<vmem>>, vector<2x1xf32>
    %c0_1 = arith.constant 0 : index
    %c0_2 = arith.constant 0 : index
    %1 = vector.load %arg1[%c0_1, %c0_2] : memref<1x32xf32, #tpu.memory_space<vmem>>, vector<1x32xf32>
    %2 = vector.broadcast %0 : vector<2x1xf32> to vector<2x32xf32>
    %3 = vector.broadcast %1 : vector<1x32xf32> to vector<2x32xf32>
    %4 = arith.mulf %2, %3 : vector<2x32xf32>
    %c0_3 = arith.constant 0 : index
    %c0_4 = arith.constant 0 : index
    %5 = vector.load %arg2[%c0_3, %c0_4] : memref<1x32xf32, #tpu.memory_space<vmem>>, vector<1x32xf32>
    %6 = vector.broadcast %5 : vector<1x32xf32> to vector<2x32xf32>
    %7 = arith.addf %4, %6 : vector<2x32xf32>
    %cst = arith.constant dense<0.000000e+00> : vector<2xf32>
    %8 = vector.multi_reduction <add>, %7, %cst [1] : vector<2x32xf32> to vector<2xf32>
    %9 = vector.shape_cast %8 : vector<2xf32> to vector<2x1xf32>
    %cst_5 = arith.constant 3.200000e+01 : f32
    %10 = vector.broadcast %cst_5 : f32 to vector<2x1xf32>
    %11 = arith.divf %9, %10 : vector<2x1xf32>
    %12 = vector.broadcast %11 : vector<2x1xf32> to vector<2x32xf32>
    %13 = arith.subf %7, %12 : vector<2x32xf32>
    %14 = arith.mulf %13, %13 : vector<2x32xf32>
    %cst_6 = arith.constant dense<0.000000e+00> : vector<2xf32>
    %15 = vector.multi_reduction <add>, %14, %cst_6 [1] : vector<2x32xf32> to vector<2xf32>
    %16 = vector.shape_cast %15 : vector<2xf32> to vector<2x1xf32>
    %cst_7 = arith.constant 3.200000e+01 : f32
    %17 = vector.broadcast %cst_7 : f32 to vector<2x1xf32>
    %18 = arith.divf %16, %17 : vector<2x1xf32>
    %19 = vector.broadcast %11 : vector<2x1xf32> to vector<2x32xf32>
    %20 = arith.subf %7, %19 : vector<2x32xf32>
    %cst_8 = arith.constant 9.99999974E-6 : f32
    %21 = vector.broadcast %cst_8 : f32 to vector<2x1xf32>
    %22 = arith.addf %18, %21 : vector<2x1xf32>
    %23 = math.rsqrt %22 : vector<2x1xf32>
    %24 = vector.broadcast %23 : vector<2x1xf32> to vector<2x32xf32>
    %25 = arith.mulf %20, %24 : vector<2x32xf32>
    %c0_9 = arith.constant 0 : index
    %c0_10 = arith.constant 0 : index
    %26 = vector.load %arg3[%c0_9, %c0_10] : memref<1x32xf32, #tpu.memory_space<vmem>>, vector<1x32xf32>
    %27 = vector.broadcast %26 : vector<1x32xf32> to vector<2x32xf32>
    %28 = arith.mulf %25, %27 : vector<2x32xf32>
    %c0_11 = arith.constant 0 : index
    %c0_12 = arith.constant 0 : index
    %29 = vector.load %arg4[%c0_11, %c0_12] : memref<1x32xf32, #tpu.memory_space<vmem>>, vector<1x32xf32>
    %30 = vector.broadcast %29 : vector<1x32xf32> to vector<2x32xf32>
    %31 = arith.addf %28, %30 : vector<2x32xf32>
    %cst_13 = arith.constant 0.000000e+00 : f32
    %32 = vector.broadcast %cst_13 : f32 to vector<2x32xf32>
    %33 = arith.maximumf %31, %32 : vector<2x32xf32>
    %34 = arith.truncf %33 : vector<2x32xf32> to vector<2x32xbf16>
    %c0_14 = arith.constant 0 : index
    %c0_15 = arith.constant 0 : index
    %35 = vector.load %arg5[%c0_14, %c0_15] : memref<2x32xbf16, #tpu.memory_space<vmem>>, vector<2x32xbf16>
    tpu.vector_store %arg5[%c0_14, %c0_15], %34 {strides = array<i32>} : memref<2x32xbf16, #tpu.memory_space<vmem>>, vector<2x32xbf16>,
    return
  }
}

module attributes {stable_mosaic.version = 11 : i64} {
  func.func @_linear_kernel(%arg0: i32, %arg1: memref<8x64xbf16, #tpu.memory_space<vmem>>, %arg2: memref<64x32xbf16, #tpu.memory_space<vmem>>, %arg3: memref<1x32xf32, #tpu.memory_space<vmem>>, %arg4: memref<8x32xbf16, #tpu.memory_space<vmem>>) attributes {dimension_semantics = [#tpu.dimension_semantics<parallel>], iteration_bounds = array<i64: 1>, scalar_prefetch = 0 : i64, scratch_operands = 0 : i64, tpu.core_type = #tpu.core_type<tc>, window_params = [{transform_indices = @transform_0, window_bounds = array<i64: 8, 64>}, {pipeline_mode = #tpu.pipeline_mode<synchronous>, transform_indices = @transform_1, window_bounds = array<i64: 64, 32>}, {pipeline_mode = #tpu.pipeline_mode<synchronous>, transform_indices = @transform_2, window_bounds = array<i64: 1, 32>}, {transform_indices = @transform_3, window_bounds = array<i64: 8, 32>}]} {
    %c0 = arith.constant 0 : index
    %c0_0 = arith.constant 0 : index
    %0 = vector.load %arg1[%c0, %c0_0] : memref<8x64xbf16, #tpu.memory_space<vmem>>, vector<8x64xbf16>
    %c0_1 = arith.constant 0 : index
    %c0_2 = arith.constant 0 : index
    %1 = vector.load %arg2[%c0_1, %c0_2] : memref<64x32xbf16, #tpu.memory_space<vmem>>, vector<64x32xbf16>
    %cst = arith.constant dense<0.000000e+00> : vector<8x32xf32>
    %2 = tpu.matmul %0, %1, %cst {dimension_numbers = #tpu.dot_dimension_numbers<[1], [0], [0], [1], [0, 0, 1, 1], [], []>} : vector<8x64xbf16>, vector<64x32xbf16>, vector<8x32xf32> -> vector<8x32xf32>
    %c0_3 = arith.constant 0 : index
    %c0_4 = arith.constant 0 : index
    %3 = vector.load %arg3[%c0_3, %c0_4] : memref<1x32xf32, #tpu.memory_space<vmem>>, vector<1x32xf32>
    %4 = vector.broadcast %3 : vector<1x32xf32> to vector<8x32xf32>
    %5 = arith.addf %2, %4 : vector<8x32xf32>
    %6 = arith.truncf %5 : vector<8x32xf32> to vector<8x32xbf16>
    %c0_5 = arith.constant 0 : index
    %c0_6 = arith.constant 0 : index
    %7 = vector.load %arg4[%c0_5, %c0_6] : memref<8x32xbf16, #tpu.memory_space<vmem>>, vector<8x32xbf16>
    tpu.vector_store %arg4[%c0_5, %c0_6], %6 {strides = array<i32>} : memref<8x32xbf16, #tpu.memory_space<vmem>>, vector<8x32xbf16>,
    return
  }
  func.func @transform_0(%arg0: i32) -> (i32, i32) {
    %c0_i32 = arith.constant 0 : i32
    %c0_i32_0 = arith.constant 0 : i32
    return %arg0, %c0_i32 : i32, i32
  }
  func.func @transform_1(%arg0: i32) -> (i32, i32) {
    %c0_i32 = arith.constant 0 : i32
    %c0_i32_0 = arith.constant 0 : i32
    %c0_i32_1 = arith.constant 0 : i32
    return %c0_i32, %c0_i32_0 : i32, i32
  }
  func.func @transform_2(%arg0: i32) -> (i32, i32) {
    %c0_i32 = arith.constant 0 : i32
    %c0_i32_0 = arith.constant 0 : i32
    %c0_i32_1 = arith.constant 0 : i32
    return %c0_i32, %c0_i32_0 : i32, i32
  }
  func.func @transform_3(%arg0: i32) -> (i32, i32) {
    %c0_i32 = arith.constant 0 : i32
    %c0_i32_0 = arith.constant 0 : i32
    return %arg0, %c0_i32 : i32, i32
  }
}

module attributes {stable_mosaic.version = 11 : i64} {
  func.func @_ie1_kernel(%arg0: memref<16x1xf32, #tpu.memory_space<vmem>>, %arg1: memref<1x32xf32, #tpu.memory_space<vmem>>, %arg2: memref<1x32xf32, #tpu.memory_space<vmem>>, %arg3: memref<1x32xf32, #tpu.memory_space<vmem>>, %arg4: memref<1x32xf32, #tpu.memory_space<vmem>>, %arg5: memref<16x32xbf16, #tpu.memory_space<vmem>>) attributes {dimension_semantics = [], scalar_prefetch = 0 : i64, scratch_operands = 0 : i64, tpu.core_type = #tpu.core_type<tc>} {
    %c0 = arith.constant 0 : index
    %c0_0 = arith.constant 0 : index
    %0 = vector.load %arg0[%c0, %c0_0] : memref<16x1xf32, #tpu.memory_space<vmem>>, vector<16x1xf32>
    %c0_1 = arith.constant 0 : index
    %c0_2 = arith.constant 0 : index
    %1 = vector.load %arg1[%c0_1, %c0_2] : memref<1x32xf32, #tpu.memory_space<vmem>>, vector<1x32xf32>
    %2 = vector.broadcast %0 : vector<16x1xf32> to vector<16x32xf32>
    %3 = vector.broadcast %1 : vector<1x32xf32> to vector<16x32xf32>
    %4 = arith.mulf %2, %3 : vector<16x32xf32>
    %c0_3 = arith.constant 0 : index
    %c0_4 = arith.constant 0 : index
    %5 = vector.load %arg2[%c0_3, %c0_4] : memref<1x32xf32, #tpu.memory_space<vmem>>, vector<1x32xf32>
    %6 = vector.broadcast %5 : vector<1x32xf32> to vector<16x32xf32>
    %7 = arith.addf %4, %6 : vector<16x32xf32>
    %cst = arith.constant dense<0.000000e+00> : vector<16xf32>
    %8 = vector.multi_reduction <add>, %7, %cst [1] : vector<16x32xf32> to vector<16xf32>
    %9 = vector.shape_cast %8 : vector<16xf32> to vector<16x1xf32>
    %cst_5 = arith.constant 3.200000e+01 : f32
    %10 = vector.broadcast %cst_5 : f32 to vector<16x1xf32>
    %11 = arith.divf %9, %10 : vector<16x1xf32>
    %12 = vector.broadcast %11 : vector<16x1xf32> to vector<16x32xf32>
    %13 = arith.subf %7, %12 : vector<16x32xf32>
    %14 = arith.mulf %13, %13 : vector<16x32xf32>
    %cst_6 = arith.constant dense<0.000000e+00> : vector<16xf32>
    %15 = vector.multi_reduction <add>, %14, %cst_6 [1] : vector<16x32xf32> to vector<16xf32>
    %16 = vector.shape_cast %15 : vector<16xf32> to vector<16x1xf32>
    %cst_7 = arith.constant 3.200000e+01 : f32
    %17 = vector.broadcast %cst_7 : f32 to vector<16x1xf32>
    %18 = arith.divf %16, %17 : vector<16x1xf32>
    %19 = vector.broadcast %11 : vector<16x1xf32> to vector<16x32xf32>
    %20 = arith.subf %7, %19 : vector<16x32xf32>
    %cst_8 = arith.constant 9.99999974E-6 : f32
    %21 = vector.broadcast %cst_8 : f32 to vector<16x1xf32>
    %22 = arith.addf %18, %21 : vector<16x1xf32>
    %23 = math.rsqrt %22 : vector<16x1xf32>
    %24 = vector.broadcast %23 : vector<16x1xf32> to vector<16x32xf32>
    %25 = arith.mulf %20, %24 : vector<16x32xf32>
    %c0_9 = arith.constant 0 : index
    %c0_10 = arith.constant 0 : index
    %26 = vector.load %arg3[%c0_9, %c0_10] : memref<1x32xf32, #tpu.memory_space<vmem>>, vector<1x32xf32>
    %27 = vector.broadcast %26 : vector<1x32xf32> to vector<16x32xf32>
    %28 = arith.mulf %25, %27 : vector<16x32xf32>
    %c0_11 = arith.constant 0 : index
    %c0_12 = arith.constant 0 : index
    %29 = vector.load %arg4[%c0_11, %c0_12] : memref<1x32xf32, #tpu.memory_space<vmem>>, vector<1x32xf32>
    %30 = vector.broadcast %29 : vector<1x32xf32> to vector<16x32xf32>
    %31 = arith.addf %28, %30 : vector<16x32xf32>
    %cst_13 = arith.constant 0.000000e+00 : f32
    %32 = vector.broadcast %cst_13 : f32 to vector<16x32xf32>
    %33 = arith.maximumf %31, %32 : vector<16x32xf32>
    %34 = arith.truncf %33 : vector<16x32xf32> to vector<16x32xbf16>
    %c0_14 = arith.constant 0 : index
    %c0_15 = arith.constant 0 : index
    %35 = vector.load %arg5[%c0_14, %c0_15] : memref<16x32xbf16, #tpu.memory_space<vmem>>, vector<16x32xbf16>
    tpu.vector_store %arg5[%c0_14, %c0_15], %34 {strides = array<i32>} : memref<16x32xbf16, #tpu.memory_space<vmem>>, vector<16x32xbf16>,
    return
  }
}

module attributes {stable_mosaic.version = 11 : i64} {
  func.func @_encoder_layer_kernel(%arg0: i32, %arg1: memref<1x17x32xbf16, #tpu.memory_space<vmem>>, %arg2: memref<1x1x17xf32, #tpu.memory_space<vmem>>, %arg3: memref<32x96xbf16, #tpu.memory_space<vmem>>, %arg4: memref<1x96xf32, #tpu.memory_space<vmem>>, %arg5: memref<32x32xbf16, #tpu.memory_space<vmem>>, %arg6: memref<1x32xf32, #tpu.memory_space<vmem>>, %arg7: memref<1x32xf32, #tpu.memory_space<vmem>>, %arg8: memref<1x32xf32, #tpu.memory_space<vmem>>, %arg9: memref<32x128xbf16, #tpu.memory_space<vmem>>, %arg10: memref<1x128xf32, #tpu.memory_space<vmem>>, %arg11: memref<128x32xbf16, #tpu.memory_space<vmem>>, %arg12: memref<1x32xf32, #tpu.memory_space<vmem>>, %arg13: memref<1x32xf32, #tpu.memory_space<vmem>>, %arg14: memref<1x32xf32, #tpu.memory_space<vmem>>, %arg15: memref<1x17x32xbf16, #tpu.memory_space<vmem>>) attributes {dimension_semantics = [#tpu.dimension_semantics<parallel>], iteration_bounds = array<i64: 2>, scalar_prefetch = 0 : i64, scratch_operands = 0 : i64, tpu.core_type = #tpu.core_type<tc>, window_params = [{transform_indices = @transform_0, window_bounds = array<i64: 1, 17, 32>}, {transform_indices = @transform_1, window_bounds = array<i64: 1, 1, 17>}, {pipeline_mode = #tpu.pipeline_mode<synchronous>, transform_indices = @transform_2, window_bounds = array<i64: 32, 96>}, {pipeline_mode = #tpu.pipeline_mode<synchronous>, transform_indices = @transform_3, window_bounds = array<i64: 1, 96>}, {pipeline_mode = #tpu.pipeline_mode<synchronous>, transform_indices = @transform_4, window_bounds = array<i64: 32, 32>}, {pipeline_mode = #tpu.pipeline_mode<synchronous>, transform_indices = @transform_5, window_bounds = array<i64: 1, 32>}, {pipeline_mode = #tpu.pipeline_mode<synchronous>, transform_indices = @transform_6, window_bounds = array<i64: 1, 32>}, {pipeline_mode = #tpu.pipeline_mode<synchronous>, transform_indices = @transform_7, window_bounds = array<i64: 1, 32>}, {pipeline_mode = #tpu.pipeline_mode<synchronous>, transform_indices = @transform_8, window_bounds = array<i64: 32, 128>}, {pipeline_mode = #tpu.pipeline_mode<synchronous>, transform_indices = @transform_9, window_bounds = array<i64: 1, 128>}, {pipeline_mode = #tpu.pipeline_mode<synchronous>, transform_indices = @transform_10, window_bounds = array<i64: 128, 32>}, {pipeline_mode = #tpu.pipeline_mode<synchronous>, transform_indices = @transform_11, window_bounds = array<i64: 1, 32>}, {pipeline_mode = #tpu.pipeline_mode<synchronous>, transform_indices = @transform_12, window_bounds = array<i64: 1, 32>}, {pipeline_mode = #tpu.pipeline_mode<synchronous>, transform_indices = @transform_13, window_bounds = array<i64: 1, 32>}, {transform_indices = @transform_14, window_bounds = array<i64: 1, 17, 32>}]} {
    %c0 = arith.constant 0 : index
    %c0_0 = arith.constant 0 : index
    %c0_1 = arith.constant 0 : index
    %0 = vector.load %arg1[%c0, %c0_0, %c0_1] : memref<1x17x32xbf16, #tpu.memory_space<vmem>>, vector<1x17x32xbf16>
    %1 = vector.shape_cast %0 : vector<1x17x32xbf16> to vector<17x32xbf16>
    %c0_2 = arith.constant 0 : index
    %c0_3 = arith.constant 0 : index
    %c0_4 = arith.constant 0 : index
    %2 = vector.load %arg2[%c0_2, %c0_3, %c0_4] : memref<1x1x17xf32, #tpu.memory_space<vmem>>, vector<1x1x17xf32>
    %3 = vector.shape_cast %2 : vector<1x1x17xf32> to vector<1x17xf32>
    %c0_5 = arith.constant 0 : index
    %c0_6 = arith.constant 0 : index
    %4 = vector.load %arg3[%c0_5, %c0_6] : memref<32x96xbf16, #tpu.memory_space<vmem>>, vector<32x96xbf16>
    %cst = arith.constant dense<0.000000e+00> : vector<17x96xf32>
    %5 = tpu.matmul %1, %4, %cst {dimension_numbers = #tpu.dot_dimension_numbers<[1], [0], [0], [1], [0, 0, 1, 1], [], []>} : vector<17x32xbf16>, vector<32x96xbf16>, vector<17x96xf32> -> vector<17x96xf32>
    %c0_7 = arith.constant 0 : index
    %c0_8 = arith.constant 0 : index
    %6 = vector.load %arg4[%c0_7, %c0_8] : memref<1x96xf32, #tpu.memory_space<vmem>>, vector<1x96xf32>
    %7 = vector.broadcast %6 : vector<1x96xf32> to vector<17x96xf32>
    %8 = arith.addf %5, %7 : vector<17x96xf32>
    %9 = vector.extract_strided_slice %8 {offsets = [0, 0], sizes = [17, 8], strides = [1, 1]} : vector<17x96xf32> to vector<17x8xf32>
    %10 = arith.truncf %9 : vector<17x8xf32> to vector<17x8xbf16>
    %11 = vector.extract_strided_slice %8 {offsets = [0, 32], sizes = [17, 8], strides = [1, 1]} : vector<17x96xf32> to vector<17x8xf32>
    %12 = arith.truncf %11 : vector<17x8xf32> to vector<17x8xbf16>
    %13 = vector.extract_strided_slice %8 {offsets = [0, 64], sizes = [17, 8], strides = [1, 1]} : vector<17x96xf32> to vector<17x8xf32>
    %14 = arith.truncf %13 : vector<17x8xf32> to vector<17x8xbf16>
    %cst_9 = arith.constant dense<0.000000e+00> : vector<17x17xf32>
    %15 = tpu.matmul %10, %12, %cst_9 {dimension_numbers = #tpu.dot_dimension_numbers<[1], [1], [0], [0], [0, 0, 1, 0], [], []>} : vector<17x8xbf16>, vector<17x8xbf16>, vector<17x17xf32> -> vector<17x17xf32>
    %16 = vector.broadcast %3 : vector<1x17xf32> to vector<17x17xf32>
    %17 = arith.addf %15, %16 : vector<17x17xf32>
    %cst_10 = arith.constant dense<0xFF800000> : vector<17xf32>
    %18 = vector.multi_reduction <maximumf>, %17, %cst_10 [1] : vector<17x17xf32> to vector<17xf32>
    %19 = vector.shape_cast %18 : vector<17xf32> to vector<17x1xf32>
    %20 = vector.broadcast %19 : vector<17x1xf32> to vector<17x17xf32>
    %21 = arith.subf %17, %20 : vector<17x17xf32>
    %22 = math.exp %21 : vector<17x17xf32>
    %cst_11 = arith.constant dense<0.000000e+00> : vector<17xf32>
    %23 = vector.multi_reduction <add>, %22, %cst_11 [1] : vector<17x17xf32> to vector<17xf32>
    %24 = vector.shape_cast %23 : vector<17xf32> to vector<17x1xf32>
    %25 = tpu.reciprocal %24 {approx = true} : vector<17x1xf32> -> vector<17x1xf32>
    %26 = vector.broadcast %25 : vector<17x1xf32> to vector<17x17xf32>
    %27 = arith.mulf %22, %26 : vector<17x17xf32>
    %28 = arith.truncf %27 : vector<17x17xf32> to vector<17x17xbf16>
    %cst_12 = arith.constant dense<0.000000e+00> : vector<17x8xf32>
    %29 = tpu.matmul %28, %14, %cst_12 {dimension_numbers = #tpu.dot_dimension_numbers<[1], [0], [0], [1], [0, 0, 1, 1], [], []>} : vector<17x17xbf16>, vector<17x8xbf16>, vector<17x8xf32> -> vector<17x8xf32>
    %30 = vector.extract_strided_slice %8 {offsets = [0, 8], sizes = [17, 8], strides = [1, 1]} : vector<17x96xf32> to vector<17x8xf32>
    %31 = arith.truncf %30 : vector<17x8xf32> to vector<17x8xbf16>
    %32 = vector.extract_strided_slice %8 {offsets = [0, 40], sizes = [17, 8], strides = [1, 1]} : vector<17x96xf32> to vector<17x8xf32>
    %33 = arith.truncf %32 : vector<17x8xf32> to vector<17x8xbf16>
    %34 = vector.extract_strided_slice %8 {offsets = [0, 72], sizes = [17, 8], strides = [1, 1]} : vector<17x96xf32> to vector<17x8xf32>
    %35 = arith.truncf %34 : vector<17x8xf32> to vector<17x8xbf16>
    %cst_13 = arith.constant dense<0.000000e+00> : vector<17x17xf32>
    %36 = tpu.matmul %31, %33, %cst_13 {dimension_numbers = #tpu.dot_dimension_numbers<[1], [1], [0], [0], [0, 0, 1, 0], [], []>} : vector<17x8xbf16>, vector<17x8xbf16>, vector<17x17xf32> -> vector<17x17xf32>
    %37 = vector.broadcast %3 : vector<1x17xf32> to vector<17x17xf32>
    %38 = arith.addf %36, %37 : vector<17x17xf32>
    %cst_14 = arith.constant dense<0xFF800000> : vector<17xf32>
    %39 = vector.multi_reduction <maximumf>, %38, %cst_14 [1] : vector<17x17xf32> to vector<17xf32>
    %40 = vector.shape_cast %39 : vector<17xf32> to vector<17x1xf32>
    %41 = vector.broadcast %40 : vector<17x1xf32> to vector<17x17xf32>
    %42 = arith.subf %38, %41 : vector<17x17xf32>
    %43 = math.exp %42 : vector<17x17xf32>
    %cst_15 = arith.constant dense<0.000000e+00> : vector<17xf32>
    %44 = vector.multi_reduction <add>, %43, %cst_15 [1] : vector<17x17xf32> to vector<17xf32>
    %45 = vector.shape_cast %44 : vector<17xf32> to vector<17x1xf32>
    %46 = tpu.reciprocal %45 {approx = true} : vector<17x1xf32> -> vector<17x1xf32>
    %47 = vector.broadcast %46 : vector<17x1xf32> to vector<17x17xf32>
    %48 = arith.mulf %43, %47 : vector<17x17xf32>
    %49 = arith.truncf %48 : vector<17x17xf32> to vector<17x17xbf16>
    %cst_16 = arith.constant dense<0.000000e+00> : vector<17x8xf32>
    %50 = tpu.matmul %49, %35, %cst_16 {dimension_numbers = #tpu.dot_dimension_numbers<[1], [0], [0], [1], [0, 0, 1, 1], [], []>} : vector<17x17xbf16>, vector<17x8xbf16>, vector<17x8xf32> -> vector<17x8xf32>
    %51 = vector.extract_strided_slice %8 {offsets = [0, 16], sizes = [17, 8], strides = [1, 1]} : vector<17x96xf32> to vector<17x8xf32>
    %52 = arith.truncf %51 : vector<17x8xf32> to vector<17x8xbf16>
    %53 = vector.extract_strided_slice %8 {offsets = [0, 48], sizes = [17, 8], strides = [1, 1]} : vector<17x96xf32> to vector<17x8xf32>
    %54 = arith.truncf %53 : vector<17x8xf32> to vector<17x8xbf16>
    %55 = vector.extract_strided_slice %8 {offsets = [0, 80], sizes = [17, 8], strides = [1, 1]} : vector<17x96xf32> to vector<17x8xf32>
    %56 = arith.truncf %55 : vector<17x8xf32> to vector<17x8xbf16>
    %cst_17 = arith.constant dense<0.000000e+00> : vector<17x17xf32>
    %57 = tpu.matmul %52, %54, %cst_17 {dimension_numbers = #tpu.dot_dimension_numbers<[1], [1], [0], [0], [0, 0, 1, 0], [], []>} : vector<17x8xbf16>, vector<17x8xbf16>, vector<17x17xf32> -> vector<17x17xf32>
    %58 = vector.broadcast %3 : vector<1x17xf32> to vector<17x17xf32>
    %59 = arith.addf %57, %58 : vector<17x17xf32>
    %cst_18 = arith.constant dense<0xFF800000> : vector<17xf32>
    %60 = vector.multi_reduction <maximumf>, %59, %cst_18 [1] : vector<17x17xf32> to vector<17xf32>
    %61 = vector.shape_cast %60 : vector<17xf32> to vector<17x1xf32>
    %62 = vector.broadcast %61 : vector<17x1xf32> to vector<17x17xf32>
    %63 = arith.subf %59, %62 : vector<17x17xf32>
    %64 = math.exp %63 : vector<17x17xf32>
    %cst_19 = arith.constant dense<0.000000e+00> : vector<17xf32>
    %65 = vector.multi_reduction <add>, %64, %cst_19 [1] : vector<17x17xf32> to vector<17xf32>
    %66 = vector.shape_cast %65 : vector<17xf32> to vector<17x1xf32>
    %67 = tpu.reciprocal %66 {approx = true} : vector<17x1xf32> -> vector<17x1xf32>
    %68 = vector.broadcast %67 : vector<17x1xf32> to vector<17x17xf32>
    %69 = arith.mulf %64, %68 : vector<17x17xf32>
    %70 = arith.truncf %69 : vector<17x17xf32> to vector<17x17xbf16>
    %cst_20 = arith.constant dense<0.000000e+00> : vector<17x8xf32>
    %71 = tpu.matmul %70, %56, %cst_20 {dimension_numbers = #tpu.dot_dimension_numbers<[1], [0], [0], [1], [0, 0, 1, 1], [], []>} : vector<17x17xbf16>, vector<17x8xbf16>, vector<17x8xf32> -> vector<17x8xf32>
    %72 = vector.extract_strided_slice %8 {offsets = [0, 24], sizes = [17, 8], strides = [1, 1]} : vector<17x96xf32> to vector<17x8xf32>
    %73 = arith.truncf %72 : vector<17x8xf32> to vector<17x8xbf16>
    %74 = vector.extract_strided_slice %8 {offsets = [0, 56], sizes = [17, 8], strides = [1, 1]} : vector<17x96xf32> to vector<17x8xf32>
    %75 = arith.truncf %74 : vector<17x8xf32> to vector<17x8xbf16>
    %76 = vector.extract_strided_slice %8 {offsets = [0, 88], sizes = [17, 8], strides = [1, 1]} : vector<17x96xf32> to vector<17x8xf32>
    %77 = arith.truncf %76 : vector<17x8xf32> to vector<17x8xbf16>
    %cst_21 = arith.constant dense<0.000000e+00> : vector<17x17xf32>
    %78 = tpu.matmul %73, %75, %cst_21 {dimension_numbers = #tpu.dot_dimension_numbers<[1], [1], [0], [0], [0, 0, 1, 0], [], []>} : vector<17x8xbf16>, vector<17x8xbf16>, vector<17x17xf32> -> vector<17x17xf32>
    %79 = vector.broadcast %3 : vector<1x17xf32> to vector<17x17xf32>
    %80 = arith.addf %78, %79 : vector<17x17xf32>
    %cst_22 = arith.constant dense<0xFF800000> : vector<17xf32>
    %81 = vector.multi_reduction <maximumf>, %80, %cst_22 [1] : vector<17x17xf32> to vector<17xf32>
    %82 = vector.shape_cast %81 : vector<17xf32> to vector<17x1xf32>
    %83 = vector.broadcast %82 : vector<17x1xf32> to vector<17x17xf32>
    %84 = arith.subf %80, %83 : vector<17x17xf32>
    %85 = math.exp %84 : vector<17x17xf32>
    %cst_23 = arith.constant dense<0.000000e+00> : vector<17xf32>
    %86 = vector.multi_reduction <add>, %85, %cst_23 [1] : vector<17x17xf32> to vector<17xf32>
    %87 = vector.shape_cast %86 : vector<17xf32> to vector<17x1xf32>
    %88 = tpu.reciprocal %87 {approx = true} : vector<17x1xf32> -> vector<17x1xf32>
    %89 = vector.broadcast %88 : vector<17x1xf32> to vector<17x17xf32>
    %90 = arith.mulf %85, %89 : vector<17x17xf32>
    %91 = arith.truncf %90 : vector<17x17xf32> to vector<17x17xbf16>
    %cst_24 = arith.constant dense<0.000000e+00> : vector<17x8xf32>
    %92 = tpu.matmul %91, %77, %cst_24 {dimension_numbers = #tpu.dot_dimension_numbers<[1], [0], [0], [1], [0, 0, 1, 1], [], []>} : vector<17x17xbf16>, vector<17x8xbf16>, vector<17x8xf32> -> vector<17x8xf32>
    %93 = tpu.concatenate %29, %50, %71, %92 in 1 : vector<17x8xf32>, vector<17x8xf32>, vector<17x8xf32>, vector<17x8xf32> -> vector<17x32xf32>
    %94 = arith.truncf %93 : vector<17x32xf32> to vector<17x32xbf16>
    %c0_25 = arith.constant 0 : index
    %c0_26 = arith.constant 0 : index
    %95 = vector.load %arg5[%c0_25, %c0_26] : memref<32x32xbf16, #tpu.memory_space<vmem>>, vector<32x32xbf16>
    %cst_27 = arith.constant dense<0.000000e+00> : vector<17x32xf32>
    %96 = tpu.matmul %94, %95, %cst_27 {dimension_numbers = #tpu.dot_dimension_numbers<[1], [0], [0], [1], [0, 0, 1, 1], [], []>} : vector<17x32xbf16>, vector<32x32xbf16>, vector<17x32xf32> -> vector<17x32xf32>
    %c0_28 = arith.constant 0 : index
    %c0_29 = arith.constant 0 : index
    %97 = vector.load %arg6[%c0_28, %c0_29] : memref<1x32xf32, #tpu.memory_space<vmem>>, vector<1x32xf32>
    %98 = vector.broadcast %97 : vector<1x32xf32> to vector<17x32xf32>
    %99 = arith.addf %96, %98 : vector<17x32xf32>
    %100 = arith.extf %1 : vector<17x32xbf16> to vector<17x32xf32>
    %101 = arith.addf %99, %100 : vector<17x32xf32>
    %cst_30 = arith.constant dense<0.000000e+00> : vector<17xf32>
    %102 = vector.multi_reduction <add>, %101, %cst_30 [1] : vector<17x32xf32> to vector<17xf32>
    %103 = vector.shape_cast %102 : vector<17xf32> to vector<17x1xf32>
    %cst_31 = arith.constant 3.200000e+01 : f32
    %104 = vector.broadcast %cst_31 : f32 to vector<17x1xf32>
    %105 = arith.divf %103, %104 : vector<17x1xf32>
    %106 = vector.broadcast %105 : vector<17x1xf32> to vector<17x32xf32>
    %107 = arith.subf %101, %106 : vector<17x32xf32>
    %108 = arith.mulf %107, %107 : vector<17x32xf32>
    %cst_32 = arith.constant dense<0.000000e+00> : vector<17xf32>
    %109 = vector.multi_reduction <add>, %108, %cst_32 [1] : vector<17x32xf32> to vector<17xf32>
    %110 = vector.shape_cast %109 : vector<17xf32> to vector<17x1xf32>
    %cst_33 = arith.constant 3.200000e+01 : f32
    %111 = vector.broadcast %cst_33 : f32 to vector<17x1xf32>
    %112 = arith.divf %110, %111 : vector<17x1xf32>
    %113 = vector.broadcast %105 : vector<17x1xf32> to vector<17x32xf32>
    %114 = arith.subf %101, %113 : vector<17x32xf32>
    %cst_34 = arith.constant 9.99999974E-6 : f32
    %115 = vector.broadcast %cst_34 : f32 to vector<17x1xf32>
    %116 = arith.addf %112, %115 : vector<17x1xf32>
    %117 = math.rsqrt %116 : vector<17x1xf32>
    %118 = vector.broadcast %117 : vector<17x1xf32> to vector<17x32xf32>
    %119 = arith.mulf %114, %118 : vector<17x32xf32>
    %c0_35 = arith.constant 0 : index
    %c0_36 = arith.constant 0 : index
    %120 = vector.load %arg7[%c0_35, %c0_36] : memref<1x32xf32, #tpu.memory_space<vmem>>, vector<1x32xf32>
    %121 = vector.broadcast %120 : vector<1x32xf32> to vector<17x32xf32>
    %122 = arith.mulf %119, %121 : vector<17x32xf32>
    %c0_37 = arith.constant 0 : index
    %c0_38 = arith.constant 0 : index
    %123 = vector.load %arg8[%c0_37, %c0_38] : memref<1x32xf32, #tpu.memory_space<vmem>>, vector<1x32xf32>
    %124 = vector.broadcast %123 : vector<1x32xf32> to vector<17x32xf32>
    %125 = arith.addf %122, %124 : vector<17x32xf32>
    %126 = arith.truncf %125 : vector<17x32xf32> to vector<17x32xbf16>
    %c0_39 = arith.constant 0 : index
    %c0_40 = arith.constant 0 : index
    %127 = vector.load %arg9[%c0_39, %c0_40] : memref<32x128xbf16, #tpu.memory_space<vmem>>, vector<32x128xbf16>
    %cst_41 = arith.constant dense<0.000000e+00> : vector<17x128xf32>
    %128 = tpu.matmul %126, %127, %cst_41 {dimension_numbers = #tpu.dot_dimension_numbers<[1], [0], [0], [1], [0, 0, 1, 1], [], []>} : vector<17x32xbf16>, vector<32x128xbf16>, vector<17x128xf32> -> vector<17x128xf32>
    %c0_42 = arith.constant 0 : index
    %c0_43 = arith.constant 0 : index
    %129 = vector.load %arg10[%c0_42, %c0_43] : memref<1x128xf32, #tpu.memory_space<vmem>>, vector<1x128xf32>
    %130 = vector.broadcast %129 : vector<1x128xf32> to vector<17x128xf32>
    %131 = arith.addf %128, %130 : vector<17x128xf32>
    %cst_44 = arith.constant 0.000000e+00 : f32
    %132 = vector.broadcast %cst_44 : f32 to vector<17x128xf32>
    %133 = arith.maximumf %131, %132 : vector<17x128xf32>
    %134 = arith.truncf %133 : vector<17x128xf32> to vector<17x128xbf16>
    %c0_45 = arith.constant 0 : index
    %c0_46 = arith.constant 0 : index
    %135 = vector.load %arg11[%c0_45, %c0_46] : memref<128x32xbf16, #tpu.memory_space<vmem>>, vector<128x32xbf16>
    %cst_47 = arith.constant dense<0.000000e+00> : vector<17x32xf32>
    %136 = tpu.matmul %134, %135, %cst_47 {dimension_numbers = #tpu.dot_dimension_numbers<[1], [0], [0], [1], [0, 0, 1, 1], [], []>} : vector<17x128xbf16>, vector<128x32xbf16>, vector<17x32xf32> -> vector<17x32xf32>
    %c0_48 = arith.constant 0 : index
    %c0_49 = arith.constant 0 : index
    %137 = vector.load %arg12[%c0_48, %c0_49] : memref<1x32xf32, #tpu.memory_space<vmem>>, vector<1x32xf32>
    %138 = vector.broadcast %137 : vector<1x32xf32> to vector<17x32xf32>
    %139 = arith.addf %136, %138 : vector<17x32xf32>
    %140 = arith.addf %139, %125 : vector<17x32xf32>
    %cst_50 = arith.constant dense<0.000000e+00> : vector<17xf32>
    %141 = vector.multi_reduction <add>, %140, %cst_50 [1] : vector<17x32xf32> to vector<17xf32>
    %142 = vector.shape_cast %141 : vector<17xf32> to vector<17x1xf32>
    %cst_51 = arith.constant 3.200000e+01 : f32
    %143 = vector.broadcast %cst_51 : f32 to vector<17x1xf32>
    %144 = arith.divf %142, %143 : vector<17x1xf32>
    %145 = vector.broadcast %144 : vector<17x1xf32> to vector<17x32xf32>
    %146 = arith.subf %140, %145 : vector<17x32xf32>
    %147 = arith.mulf %146, %146 : vector<17x32xf32>
    %cst_52 = arith.constant dense<0.000000e+00> : vector<17xf32>
    %148 = vector.multi_reduction <add>, %147, %cst_52 [1] : vector<17x32xf32> to vector<17xf32>
    %149 = vector.shape_cast %148 : vector<17xf32> to vector<17x1xf32>
    %cst_53 = arith.constant 3.200000e+01 : f32
    %150 = vector.broadcast %cst_53 : f32 to vector<17x1xf32>
    %151 = arith.divf %149, %150 : vector<17x1xf32>
    %152 = vector.broadcast %144 : vector<17x1xf32> to vector<17x32xf32>
    %153 = arith.subf %140, %152 : vector<17x32xf32>
    %cst_54 = arith.constant 9.99999974E-6 : f32
    %154 = vector.broadcast %cst_54 : f32 to vector<17x1xf32>
    %155 = arith.addf %151, %154 : vector<17x1xf32>
    %156 = math.rsqrt %155 : vector<17x1xf32>
    %157 = vector.broadcast %156 : vector<17x1xf32> to vector<17x32xf32>
    %158 = arith.mulf %153, %157 : vector<17x32xf32>
    %c0_55 = arith.constant 0 : index
    %c0_56 = arith.constant 0 : index
    %159 = vector.load %arg13[%c0_55, %c0_56] : memref<1x32xf32, #tpu.memory_space<vmem>>, vector<1x32xf32>
    %160 = vector.broadcast %159 : vector<1x32xf32> to vector<17x32xf32>
    %161 = arith.mulf %158, %160 : vector<17x32xf32>
    %c0_57 = arith.constant 0 : index
    %c0_58 = arith.constant 0 : index
    %162 = vector.load %arg14[%c0_57, %c0_58] : memref<1x32xf32, #tpu.memory_space<vmem>>, vector<1x32xf32>
    %163 = vector.broadcast %162 : vector<1x32xf32> to vector<17x32xf32>
    %164 = arith.addf %161, %163 : vector<17x32xf32>
    %165 = arith.truncf %164 : vector<17x32xf32> to vector<17x32xbf16>
    %c0_59 = arith.constant 0 : index
    %c0_60 = arith.constant 0 : index
    %c0_61 = arith.constant 0 : index
    %166 = vector.load %arg15[%c0_59, %c0_60, %c0_61] : memref<1x17x32xbf16, #tpu.memory_space<vmem>>, vector<1x17x32xbf16>
    %167 = vector.shape_cast %166 : vector<1x17x32xbf16> to vector<17x32xbf16>
    %168 = vector.shape_cast %165 : vector<17x32xbf16> to vector<1x17x32xbf16>
    tpu.vector_store %arg15[%c0_59, %c0_60, %c0_61], %168 {strides = array<i32>} : memref<1x17x32xbf16, #tpu.memory_space<vmem>>, vector<1x17x32xbf16>,
    return
  }
  func.func @transform_0(%arg0: i32) -> (i32, i32, i32) {
    %c0_i32 = arith.constant 0 : i32
    %c0_i32_0 = arith.constant 0 : i32
    %c0_i32_1 = arith.constant 0 : i32
    return %arg0, %c0_i32, %c0_i32_0 : i32, i32, i32
  }
  func.func @transform_1(%arg0: i32) -> (i32, i32, i32) {
    %c0_i32 = arith.constant 0 : i32
    %c0_i32_0 = arith.constant 0 : i32
    %c0_i32_1 = arith.constant 0 : i32
    return %arg0, %c0_i32, %c0_i32_0 : i32, i32, i32
  }
  func.func @transform_2(%arg0: i32) -> (i32, i32) {
    %c0_i32 = arith.constant 0 : i32
    %c0_i32_0 = arith.constant 0 : i32
    %c0_i32_1 = arith.constant 0 : i32
    return %c0_i32, %c0_i32_0 : i32, i32
  }
  func.func @transform_3(%arg0: i32) -> (i32, i32) {
    %c0_i32 = arith.constant 0 : i32
    %c0_i32_0 = arith.constant 0 : i32
    %c0_i32_1 = arith.constant 0 : i32
    return %c0_i32, %c0_i32_0 : i32, i32
  }
  func.func @transform_4(%arg0: i32) -> (i32, i32) {
    %c0_i32 = arith.constant 0 : i32
    %c0_i32_0 = arith.constant 0 : i32
    %c0_i32_1 = arith.constant 0 : i32
    return %c0_i32, %c0_i32_0 : i32, i32
  }
  func.func @transform_5(%arg0: i32) -> (i32, i32) {
    %c0_i32 = arith.constant 0 : i32
    %c0_i32_0 = arith.constant 0 : i32
    %c0_i32_1 = arith.constant 0 : i32
    return %c0_i32, %c0_i32_0 : i32, i32
  }
  func.func @transform_6(%arg0: i32) -> (i32, i32) {
    %c0_i32 = arith.constant 0 : i32
    %c0_i32_0 = arith.constant 0 : i32
    %c0_i32_1 = arith.constant 0 : i32
    return %c0_i32, %c0_i32_0 : i32, i32
  }
  func.func @transform_7(%arg0: i32) -> (i32, i32) {
    %c0_i32 = arith.constant 0 : i32
    %c0_i32_0 = arith.constant 0 : i32
    %c0_i32_1 = arith.constant 0 : i32
    return %c0_i32, %c0_i32_0 : i32, i32
  }
  func.func @transform_8(%arg0: i32) -> (i32, i32) {
    %c0_i32 = arith.constant 0 : i32
    %c0_i32_0 = arith.constant 0 : i32
    %c0_i32_1 = arith.constant 0 : i32
    return %c0_i32, %c0_i32_0 : i32, i32
  }
  func.func @transform_9(%arg0: i32) -> (i32, i32) {
    %c0_i32 = arith.constant 0 : i32
    %c0_i32_0 = arith.constant 0 : i32
    %c0_i32_1 = arith.constant 0 : i32
    return %c0_i32, %c0_i32_0 : i32, i32
  }
  func.func @transform_10(%arg0: i32) -> (i32, i32) {
    %c0_i32 = arith.constant 0 : i32
    %c0_i32_0 = arith.constant 0 : i32
    %c0_i32_1 = arith.constant 0 : i32
    return %c0_i32, %c0_i32_0 : i32, i32
  }
  func.func @transform_11(%arg0: i32) -> (i32, i32) {
    %c0_i32 = arith.constant 0 : i32
    %c0_i32_0 = arith.constant 0 : i32
    %c0_i32_1 = arith.constant 0 : i32
    return %c0_i32, %c0_i32_0 : i32, i32
  }
  func.func @transform_12(%arg0: i32) -> (i32, i32) {
    %c0_i32 = arith.constant 0 : i32
    %c0_i32_0 = arith.constant 0 : i32
    %c0_i32_1 = arith.constant 0 : i32
    return %c0_i32, %c0_i32_0 : i32, i32
  }
  func.func @transform_13(%arg0: i32) -> (i32, i32) {
    %c0_i32 = arith.constant 0 : i32
    %c0_i32_0 = arith.constant 0 : i32
    %c0_i32_1 = arith.constant 0 : i32
    return %c0_i32, %c0_i32_0 : i32, i32
  }
  func.func @transform_14(%arg0: i32) -> (i32, i32, i32) {
    %c0_i32 = arith.constant 0 : i32
    %c0_i32_0 = arith.constant 0 : i32
    %c0_i32_1 = arith.constant 0 : i32
    return %arg0, %c0_i32, %c0_i32_0 : i32, i32, i32
  }
}

module attributes {stable_mosaic.version = 11 : i64} {
  func.func @_ie2_kernel(%arg0: memref<2x2xf32, #tpu.memory_space<vmem>>, %arg1: memref<2x32xf32, #tpu.memory_space<vmem>>, %arg2: memref<1x32xf32, #tpu.memory_space<vmem>>, %arg3: memref<1x32xf32, #tpu.memory_space<vmem>>, %arg4: memref<1x32xf32, #tpu.memory_space<vmem>>, %arg5: memref<2x32xbf16, #tpu.memory_space<vmem>>) attributes {dimension_semantics = [], scalar_prefetch = 0 : i64, scratch_operands = 0 : i64, tpu.core_type = #tpu.core_type<tc>} {
    %c0 = arith.constant 0 : index
    %c0_0 = arith.constant 0 : index
    %0 = vector.load %arg0[%c0, %c0_0] : memref<2x2xf32, #tpu.memory_space<vmem>>, vector<2x2xf32>
    %1 = vector.extract_strided_slice %0 {offsets = [0, 0], sizes = [2, 1], strides = [1, 1]} : vector<2x2xf32> to vector<2x1xf32>
    %c0_1 = arith.constant 0 : index
    %c0_2 = arith.constant 0 : index
    %2 = vector.load %arg1[%c0_1, %c0_2] : memref<2x32xf32, #tpu.memory_space<vmem>>, vector<1x32xf32>
    %3 = vector.broadcast %1 : vector<2x1xf32> to vector<2x32xf32>
    %4 = vector.broadcast %2 : vector<1x32xf32> to vector<2x32xf32>
    %5 = arith.mulf %3, %4 : vector<2x32xf32>
    %6 = vector.extract_strided_slice %0 {offsets = [0, 1], sizes = [2, 1], strides = [1, 1]} : vector<2x2xf32> to vector<2x1xf32>
    %c1 = arith.constant 1 : index
    %c0_3 = arith.constant 0 : index
    %7 = vector.load %arg1[%c1, %c0_3] : memref<2x32xf32, #tpu.memory_space<vmem>>, vector<1x32xf32>
    %8 = vector.broadcast %6 : vector<2x1xf32> to vector<2x32xf32>
    %9 = vector.broadcast %7 : vector<1x32xf32> to vector<2x32xf32>
    %10 = arith.mulf %8, %9 : vector<2x32xf32>
    %11 = arith.addf %5, %10 : vector<2x32xf32>
    %c0_4 = arith.constant 0 : index
    %c0_5 = arith.constant 0 : index
    %12 = vector.load %arg2[%c0_4, %c0_5] : memref<1x32xf32, #tpu.memory_space<vmem>>, vector<1x32xf32>
    %13 = vector.broadcast %12 : vector<1x32xf32> to vector<2x32xf32>
    %14 = arith.addf %11, %13 : vector<2x32xf32>
    %cst = arith.constant dense<0.000000e+00> : vector<2xf32>
    %15 = vector.multi_reduction <add>, %14, %cst [1] : vector<2x32xf32> to vector<2xf32>
    %16 = vector.shape_cast %15 : vector<2xf32> to vector<2x1xf32>
    %cst_6 = arith.constant 3.200000e+01 : f32
    %17 = vector.broadcast %cst_6 : f32 to vector<2x1xf32>
    %18 = arith.divf %16, %17 : vector<2x1xf32>
    %19 = vector.broadcast %18 : vector<2x1xf32> to vector<2x32xf32>
    %20 = arith.subf %14, %19 : vector<2x32xf32>
    %21 = arith.mulf %20, %20 : vector<2x32xf32>
    %cst_7 = arith.constant dense<0.000000e+00> : vector<2xf32>
    %22 = vector.multi_reduction <add>, %21, %cst_7 [1] : vector<2x32xf32> to vector<2xf32>
    %23 = vector.shape_cast %22 : vector<2xf32> to vector<2x1xf32>
    %cst_8 = arith.constant 3.200000e+01 : f32
    %24 = vector.broadcast %cst_8 : f32 to vector<2x1xf32>
    %25 = arith.divf %23, %24 : vector<2x1xf32>
    %26 = vector.broadcast %18 : vector<2x1xf32> to vector<2x32xf32>
    %27 = arith.subf %14, %26 : vector<2x32xf32>
    %cst_9 = arith.constant 9.99999974E-6 : f32
    %28 = vector.broadcast %cst_9 : f32 to vector<2x1xf32>
    %29 = arith.addf %25, %28 : vector<2x1xf32>
    %30 = math.rsqrt %29 : vector<2x1xf32>
    %31 = vector.broadcast %30 : vector<2x1xf32> to vector<2x32xf32>
    %32 = arith.mulf %27, %31 : vector<2x32xf32>
    %c0_10 = arith.constant 0 : index
    %c0_11 = arith.constant 0 : index
    %33 = vector.load %arg3[%c0_10, %c0_11] : memref<1x32xf32, #tpu.memory_space<vmem>>, vector<1x32xf32>
    %34 = vector.broadcast %33 : vector<1x32xf32> to vector<2x32xf32>
    %35 = arith.mulf %32, %34 : vector<2x32xf32>
    %c0_12 = arith.constant 0 : index
    %c0_13 = arith.constant 0 : index
    %36 = vector.load %arg4[%c0_12, %c0_13] : memref<1x32xf32, #tpu.memory_space<vmem>>, vector<1x32xf32>
    %37 = vector.broadcast %36 : vector<1x32xf32> to vector<2x32xf32>
    %38 = arith.addf %35, %37 : vector<2x32xf32>
    %cst_14 = arith.constant 0.000000e+00 : f32
    %39 = vector.broadcast %cst_14 : f32 to vector<2x32xf32>
    %40 = arith.maximumf %38, %39 : vector<2x32xf32>
    %41 = arith.truncf %40 : vector<2x32xf32> to vector<2x32xbf16>
    %c0_15 = arith.constant 0 : index
    %c0_16 = arith.constant 0 : index
    %42 = vector.load %arg5[%c0_15, %c0_16] : memref<2x32xbf16, #tpu.memory_space<vmem>>, vector<2x32xbf16>
    tpu.vector_store %arg5[%c0_15, %c0_16], %41 {strides = array<i32>} : memref<2x32xbf16, #tpu.memory_space<vmem>>, vector<2x32xbf16>,
    return
  }
}

module attributes {stable_mosaic.version = 11 : i64} {
  func.func @_head_kernel(%arg0: memref<2x32xbf16, #tpu.memory_space<vmem>>, %arg1: memref<2x32xbf16, #tpu.memory_space<vmem>>, %arg2: memref<1x32xf32, #tpu.memory_space<vmem>>, %arg3: memref<1x32xf32, #tpu.memory_space<vmem>>, %arg4: memref<32x32xbf16, #tpu.memory_space<vmem>>, %arg5: memref<32x32xbf16, #tpu.memory_space<vmem>>, %arg6: memref<1x32xf32, #tpu.memory_space<vmem>>, %arg7: memref<1x32xf32, #tpu.memory_space<vmem>>, %arg8: memref<1x32xf32, #tpu.memory_space<vmem>>, %arg9: memref<1x32xf32, #tpu.memory_space<vmem>>, %arg10: memref<1x32xf32, #tpu.memory_space<vmem>>, %arg11: memref<32x2xbf16, #tpu.memory_space<vmem>>, %arg12: memref<1x2xf32, #tpu.memory_space<vmem>>, %arg13: memref<2x2xf32, #tpu.memory_space<vmem>>) attributes {dimension_semantics = [], scalar_prefetch = 0 : i64, scratch_operands = 0 : i64, tpu.core_type = #tpu.core_type<tc>} {
    %c0 = arith.constant 0 : index
    %c0_0 = arith.constant 0 : index
    %0 = vector.load %arg0[%c0, %c0_0] : memref<2x32xbf16, #tpu.memory_space<vmem>>, vector<2x32xbf16>
    %1 = arith.extf %0 : vector<2x32xbf16> to vector<2x32xf32>
    %cst = arith.constant dense<0.000000e+00> : vector<2xf32>
    %2 = vector.multi_reduction <add>, %1, %cst [1] : vector<2x32xf32> to vector<2xf32>
    %3 = vector.shape_cast %2 : vector<2xf32> to vector<2x1xf32>
    %cst_1 = arith.constant 3.200000e+01 : f32
    %4 = vector.broadcast %cst_1 : f32 to vector<2x1xf32>
    %5 = arith.divf %3, %4 : vector<2x1xf32>
    %6 = vector.broadcast %5 : vector<2x1xf32> to vector<2x32xf32>
    %7 = arith.subf %1, %6 : vector<2x32xf32>
    %8 = arith.mulf %7, %7 : vector<2x32xf32>
    %cst_2 = arith.constant dense<0.000000e+00> : vector<2xf32>
    %9 = vector.multi_reduction <add>, %8, %cst_2 [1] : vector<2x32xf32> to vector<2xf32>
    %10 = vector.shape_cast %9 : vector<2xf32> to vector<2x1xf32>
    %cst_3 = arith.constant 3.200000e+01 : f32
    %11 = vector.broadcast %cst_3 : f32 to vector<2x1xf32>
    %12 = arith.divf %10, %11 : vector<2x1xf32>
    %13 = vector.broadcast %5 : vector<2x1xf32> to vector<2x32xf32>
    %14 = arith.subf %1, %13 : vector<2x32xf32>
    %cst_4 = arith.constant 9.99999974E-6 : f32
    %15 = vector.broadcast %cst_4 : f32 to vector<2x1xf32>
    %16 = arith.addf %12, %15 : vector<2x1xf32>
    %17 = math.rsqrt %16 : vector<2x1xf32>
    %18 = vector.broadcast %17 : vector<2x1xf32> to vector<2x32xf32>
    %19 = arith.mulf %14, %18 : vector<2x32xf32>
    %c0_5 = arith.constant 0 : index
    %c0_6 = arith.constant 0 : index
    %20 = vector.load %arg2[%c0_5, %c0_6] : memref<1x32xf32, #tpu.memory_space<vmem>>, vector<1x32xf32>
    %21 = vector.broadcast %20 : vector<1x32xf32> to vector<2x32xf32>
    %22 = arith.mulf %19, %21 : vector<2x32xf32>
    %c0_7 = arith.constant 0 : index
    %c0_8 = arith.constant 0 : index
    %23 = vector.load %arg3[%c0_7, %c0_8] : memref<1x32xf32, #tpu.memory_space<vmem>>, vector<1x32xf32>
    %24 = vector.broadcast %23 : vector<1x32xf32> to vector<2x32xf32>
    %25 = arith.addf %22, %24 : vector<2x32xf32>
    %26 = arith.truncf %25 : vector<2x32xf32> to vector<2x32xbf16>
    %c0_9 = arith.constant 0 : index
    %c0_10 = arith.constant 0 : index
    %27 = vector.load %arg4[%c0_9, %c0_10] : memref<32x32xbf16, #tpu.memory_space<vmem>>, vector<32x32xbf16>
    %cst_11 = arith.constant dense<0.000000e+00> : vector<2x32xf32>
    %28 = tpu.matmul %26, %27, %cst_11 {dimension_numbers = #tpu.dot_dimension_numbers<[1], [0], [0], [1], [0, 0, 1, 1], [], []>} : vector<2x32xbf16>, vector<32x32xbf16>, vector<2x32xf32> -> vector<2x32xf32>
    %c0_12 = arith.constant 0 : index
    %c0_13 = arith.constant 0 : index
    %29 = vector.load %arg1[%c0_12, %c0_13] : memref<2x32xbf16, #tpu.memory_space<vmem>>, vector<2x32xbf16>
    %c0_14 = arith.constant 0 : index
    %c0_15 = arith.constant 0 : index
    %30 = vector.load %arg5[%c0_14, %c0_15] : memref<32x32xbf16, #tpu.memory_space<vmem>>, vector<32x32xbf16>
    %cst_16 = arith.constant dense<0.000000e+00> : vector<2x32xf32>
    %31 = tpu.matmul %29, %30, %cst_16 {dimension_numbers = #tpu.dot_dimension_numbers<[1], [0], [0], [1], [0, 0, 1, 1], [], []>} : vector<2x32xbf16>, vector<32x32xbf16>, vector<2x32xf32> -> vector<2x32xf32>
    %32 = arith.addf %28, %31 : vector<2x32xf32>
    %c0_17 = arith.constant 0 : index
    %c0_18 = arith.constant 0 : index
    %33 = vector.load %arg6[%c0_17, %c0_18] : memref<1x32xf32, #tpu.memory_space<vmem>>, vector<1x32xf32>
    %34 = vector.broadcast %33 : vector<1x32xf32> to vector<2x32xf32>
    %35 = arith.addf %32, %34 : vector<2x32xf32>
    %c0_19 = arith.constant 0 : index
    %c0_20 = arith.constant 0 : index
    %36 = vector.load %arg9[%c0_19, %c0_20] : memref<1x32xf32, #tpu.memory_space<vmem>>, vector<1x32xf32>
    %37 = vector.broadcast %36 : vector<1x32xf32> to vector<2x32xf32>
    %38 = arith.subf %35, %37 : vector<2x32xf32>
    %c0_21 = arith.constant 0 : index
    %c0_22 = arith.constant 0 : index
    %39 = vector.load %arg10[%c0_21, %c0_22] : memref<1x32xf32, #tpu.memory_space<vmem>>, vector<1x32xf32>
    %cst_23 = arith.constant 9.99999974E-6 : f32
    %40 = vector.broadcast %cst_23 : f32 to vector<1x32xf32>
    %41 = arith.addf %39, %40 : vector<1x32xf32>
    %42 = math.rsqrt %41 : vector<1x32xf32>
    %43 = vector.broadcast %42 : vector<1x32xf32> to vector<2x32xf32>
    %44 = arith.mulf %38, %43 : vector<2x32xf32>
    %c0_24 = arith.constant 0 : index
    %c0_25 = arith.constant 0 : index
    %45 = vector.load %arg7[%c0_24, %c0_25] : memref<1x32xf32, #tpu.memory_space<vmem>>, vector<1x32xf32>
    %46 = vector.broadcast %45 : vector<1x32xf32> to vector<2x32xf32>
    %47 = arith.mulf %44, %46 : vector<2x32xf32>
    %c0_26 = arith.constant 0 : index
    %c0_27 = arith.constant 0 : index
    %48 = vector.load %arg8[%c0_26, %c0_27] : memref<1x32xf32, #tpu.memory_space<vmem>>, vector<1x32xf32>
    %49 = vector.broadcast %48 : vector<1x32xf32> to vector<2x32xf32>
    %50 = arith.addf %47, %49 : vector<2x32xf32>
    %cst_28 = arith.constant 0.000000e+00 : f32
    %51 = vector.broadcast %cst_28 : f32 to vector<2x32xf32>
    %52 = arith.maximumf %50, %51 : vector<2x32xf32>
    %53 = arith.truncf %52 : vector<2x32xf32> to vector<2x32xbf16>
    %c0_29 = arith.constant 0 : index
    %c0_30 = arith.constant 0 : index
    %54 = vector.load %arg11[%c0_29, %c0_30] : memref<32x2xbf16, #tpu.memory_space<vmem>>, vector<32x2xbf16>
    %cst_31 = arith.constant dense<0.000000e+00> : vector<2x2xf32>
    %55 = tpu.matmul %53, %54, %cst_31 {dimension_numbers = #tpu.dot_dimension_numbers<[1], [0], [0], [1], [0, 0, 1, 1], [], []>} : vector<2x32xbf16>, vector<32x2xbf16>, vector<2x2xf32> -> vector<2x2xf32>
    %c0_32 = arith.constant 0 : index
    %c0_33 = arith.constant 0 : index
    %56 = vector.load %arg12[%c0_32, %c0_33] : memref<1x2xf32, #tpu.memory_space<vmem>>, vector<1x2xf32>
    %57 = vector.broadcast %56 : vector<1x2xf32> to vector<2x2xf32>
    %58 = arith.addf %55, %57 : vector<2x2xf32>
    %c0_34 = arith.constant 0 : index
    %c0_35 = arith.constant 0 : index
    %59 = vector.load %arg13[%c0_34, %c0_35] : memref<2x2xf32, #tpu.memory_space<vmem>>, vector<2x2xf32>
    tpu.vector_store %arg13[%c0_34, %c0_35], %58 {strides = array<i32>} : memref<2x2xf32, #tpu.memory_space<vmem>>, vector<2x2xf32>,
    return
  }
}

</mosaic_0001>

<llo_original>
// kernel: tri_mt_v1_forward.16
$region0: #{tri_mt_v1_forward.16}
  #allocation0 [shape = 'u32[]', space=smem, size = 0x4, offset = 0x4, fixed_abs, tag = 'smem constant byte address 0x4 - core index']
  #allocation1 [shape = 'u32[144,128]{1,0:T(1,128)}', space=vmem, size = 0x12000, scoped, tag = 'internal scratch']
  %s0 = inlined_call_operand.vmem [shape: f32[2,1], index: 0, kind: input, shape index: {}]
  %s1 = inlined_call_operand.vmem [shape: f32[1,32], index: 1, kind: input, shape index: {}]
  %s2 = inlined_call_operand.vmem [shape: f32[1,32], index: 2, kind: input, shape index: {}]
  %s3 = inlined_call_operand.vmem [shape: f32[1,32], index: 3, kind: input, shape index: {}]
  %s4 = inlined_call_operand.vmem [shape: f32[1,32], index: 4, kind: input, shape index: {}]
  %s5 = inlined_call_operand.vmem [shape: bf16[2,32], index: 5, kind: output, shape index: {}]
  %s6 = sld [smem:[#allocation0]]
  $region30: #{tri_mt_v1_forward.16} parent=0
    _
  %s8 = ssub.s32 1, %s6
  %s9 = scalar_select 0, %s8, %s6
  // Predicated region
  $region2: #{tri_mt_v1_forward.16} parent=0 // pred_check
    _
  $region3: #{tri_mt_v1_forward.16} parent=0 // pred_check_branch
    %11 = sbr.rel (0) target = $region5
  $region4: #{tri_mt_v1_forward.16} parent=0 // pred_region
    _
  $region5: #{tri_mt_v1_forward.16} parent=0 // pred_fallthru
    _
  // Predicated region
  $region6: #{tri_mt_v1_forward.16} parent=0 // pred_check
    _
  $region7: #{tri_mt_v1_forward.16} parent=0 // pred_check_branch
    %13 = sbr.rel (0) target = $region9
  $region8: #{tri_mt_v1_forward.16} parent=0 // pred_region
    _
  $region9: #{tri_mt_v1_forward.16} parent=0 // pred_fallthru
    _
  // Predicated region
  $region10: #{tri_mt_v1_forward.16} parent=0 // pred_check
    _
  $region11: #{tri_mt_v1_forward.16} parent=0 // pred_check_branch
    %15 = sbr.rel (0) target = $region13
  $region12: #{tri_mt_v1_forward.16} parent=0 // pred_region
    _
  $region13: #{tri_mt_v1_forward.16} parent=0 // pred_fallthru
    _
  // Predicated region
  $region14: #{tri_mt_v1_forward.16} parent=0 // pred_check
    _
  $region15: #{tri_mt_v1_forward.16} parent=0 // pred_check_branch
    %17 = sbr.rel (0) target = $region17
  $region16: #{tri_mt_v1_forward.16} parent=0 // pred_region
    _
  $region17: #{tri_mt_v1_forward.16} parent=0 // pred_fallthru
    _
  // Predicated region
  $region18: #{tri_mt_v1_forward.16} parent=0 // pred_check
    _
  $region19: #{tri_mt_v1_forward.16} parent=0 // pred_check_branch
    %19 = sbr.rel (0) target = $region21
  $region20: #{tri_mt_v1_forward.16} parent=0 // pred_region
    _
  $region21: #{tri_mt_v1_forward.16} parent=0 // pred_fallthru
    _
  %v20 = vld [vmem:[%s0] sm:$0x3]
  %v21 = vld [vmem:[%s1] sm:$0x1]
  %23 = vset.pattern.permute.xlu0 0
  %24 = vperm.xlu0 %23, %v20
  %v25 = vpop.permute.xlu0 %24
  %v28 = vlaneseq
  %v29 = vshrl.u32 %v28, 7
  %v30 = vsub.s32 0, %v29
  %v31 = vrot.slane %v21, %v30
  %v33 = vmul.f32 %v25, %v31
  %v34 = vld [vmem:[%s2] sm:$0x1]
  %v36 = vlaneseq
  %v37 = vshrl.u32 %v36, 7
  %v38 = vsub.s32 0, %v37
  %v39 = vrot.slane %v34, %v38
  %v41 = vadd.f32 %v33, %v39
  %vm42 = vcmask 254976
  %v43 = vsel %vm42, %v41, 0.0
  %44 = vadd.xlane.f32.xlu0 %v43
  %v45 = vpop.xlane.xlu0 %44
  %v46 = vrcp.pop 32.0
  %v47 = vmul.f32 %v45, %v46
  %v48 = vsub.f32 %v41, %v47
  %v49 = vmul.f32 %v48, %v48
  %v50 = vsel %vm42, %v49, 0.0
  %51 = vadd.xlane.f32.xlu0 %v50
  %v52 = vpop.xlane.xlu0 %51
  %v53 = vmul.f32 %v52, %v46
  %v54 = vadd.f32 %v53, 1e-05
  %v55 = vrsqrt.pop %v54
  %v56 = vmul.f32 %v48, %v55
  %v57 = vld [vmem:[%s3] sm:$0x1]
  %v59 = vlaneseq
  %v60 = vshrl.u32 %v59, 7
  %v61 = vsub.s32 0, %v60
  %v62 = vrot.slane %v57, %v61
  %v64 = vmul.f32 %v56, %v62
  %v65 = vld [vmem:[%s4] sm:$0x1]
  %v67 = vlaneseq
  %v68 = vshrl.u32 %v67, 7
  %v69 = vsub.s32 0, %v68
  %v70 = vrot.slane %v65, %v69
  %v72 = vadd.f32 %v64, %v70
  %v73 = vmax.f32 %v72, 0.0
  %v74 = vpack.c.bf16 %v73, %v73
  %vm75 = vcmask 253952
  %76 = vst.msk [vmem:[%s5] sm:$0x1] %vm75, %v74
  // Predicated region
  $region22: #{tri_mt_v1_forward.16} parent=0 // pred_check
    _
  $region23: #{tri_mt_v1_forward.16} parent=0 // pred_check_branch
    %78 = sbr.rel (0) target = $region25
  $region24: #{tri_mt_v1_forward.16} parent=0 // pred_region
    _
  $region25: #{tri_mt_v1_forward.16} parent=0 // pred_fallthru
    _
  // Predicated region
  $region26: #{tri_mt_v1_forward.16} parent=0 // pred_check
    _
  $region27: #{tri_mt_v1_forward.16} parent=0 // pred_check_branch
    %80 = sbr.rel (0) target = $region29
  $region28: #{tri_mt_v1_forward.16} parent=0 // pred_region
    _
  $region29: #{tri_mt_v1_forward.16} parent=0 // pred_fallthru
    _

// kernel: squeeze.0
$region0: #{squeeze.0}
  %s0 = inlined_call_operand.vmem [shape: f32[2,8,1], index: 0, kind: input, shape index: {}]
  %s1 = inlined_call_operand.vmem [shape: f32[16,1], index: 1, kind: output, shape index: {}]
  $region1: #{squeeze.0} parent=0
    #allocation0 [shape = 'u8[4096]{0}', space=vmem, size = 0x1000, scoped, tag = 'scoped mem for input reshape']
    %s3 = sshllo.u32 0, 2
    %v4 = vld [vmem:[%s0] sm:%s3]
    %5 = vst [vmem:[#allocation0] sm:%s3] %v4
    %v6 = vld [vmem:[#allocation0] sm:$0x3]
    %vm7 = vcmask 7168
    %8 = vst.msk [vmem:[%s1] ss:$8 sm:$0x3] %vm7, %v6
    %v9 = vld [vmem:[#allocation0] sm:$0x3]
    %10 = vrot.lane.b32.xlu0 %v9, 127
    %v11 = vpop.permute.xlu0 %10
    %vm12 = vcmask 7168
    %s13 = scalar_lea.vmem %s1, 1
    %14 = vst.msk [vmem:[%s13] ss:$8 sm:$0x3] %vm12, %v11
    %v15 = vld [vmem:[#allocation0] sm:$0x3]
    %16 = vrot.lane.b32.xlu0 %v15, 126
    %v17 = vpop.permute.xlu0 %16
    %vm18 = vcmask 7168
    %s19 = scalar_lea.vmem %s1, 2
    %20 = vst.msk [vmem:[%s19] ss:$8 sm:$0x3] %vm18, %v17
    %v21 = vld [vmem:[#allocation0] sm:$0x3]
    %22 = vrot.lane.b32.xlu0 %v21, 125
    %v23 = vpop.permute.xlu0 %22
    %vm24 = vcmask 7168
    %s25 = scalar_lea.vmem %s1, 3
    %26 = vst.msk [vmem:[%s25] ss:$8 sm:$0x3] %vm24, %v23
    %v27 = vld [vmem:[#allocation0] sm:$0x3]
    %28 = vrot.lane.b32.xlu0 %v27, 124
    %v29 = vpop.permute.xlu0 %28
    %vm30 = vcmask 7168
    %s31 = scalar_lea.vmem %s1, 4
    %32 = vst.msk [vmem:[%s31] ss:$8 sm:$0x3] %vm30, %v29
    %v33 = vld [vmem:[#allocation0] sm:$0x3]
    %34 = vrot.lane.b32.xlu0 %v33, 123
    %v35 = vpop.permute.xlu0 %34
    %vm36 = vcmask 7168
    %s37 = scalar_lea.vmem %s1, 5
    %38 = vst.msk [vmem:[%s37] ss:$8 sm:$0x3] %vm36, %v35
    %v39 = vld [vmem:[#allocation0] sm:$0x3]
    %40 = vrot.lane.b32.xlu0 %v39, 122
    %v41 = vpop.permute.xlu0 %40
    %vm42 = vcmask 7168
    %s43 = scalar_lea.vmem %s1, 6
    %44 = vst.msk [vmem:[%s43] ss:$8 sm:$0x3] %vm42, %v41
    %v45 = vld [vmem:[#allocation0] sm:$0x3]
    %46 = vrot.lane.b32.xlu0 %v45, 121
    %v47 = vpop.permute.xlu0 %46
    %vm48 = vcmask 7168
    %s49 = scalar_lea.vmem %s1, 7
    %50 = vst.msk [vmem:[%s49] ss:$8 sm:$0x3] %vm48, %v47

// kernel: tri_mt_v1_forward.13
$region0: #{tri_mt_v1_forward.13}
  #allocation0 [shape = 'u32[]', space=smem, size = 0x4, offset = 0x4, fixed_abs, tag = 'smem constant byte address 0x4 - core index']
  #allocation1 [shape = 'u32[144,128]{1,0:T(1,128)}', space=vmem, size = 0x12000, scoped, tag = 'internal scratch']
  %s0 = inlined_call_operand.vmem [shape: bf16[8,768], index: 0, kind: input, shape index: {}]
  %s1 = inlined_call_operand.vmem [shape: bf16[768,32], index: 1, kind: input, shape index: {}]
  %s2 = inlined_call_operand.vmem [shape: f32[1,32], index: 2, kind: input, shape index: {}]
  %s3 = inlined_call_operand.vmem [shape: bf16[8,32], index: 3, kind: output, shape index: {}]
  %s4 = sld [smem:[#allocation0]]
  $region22: #{tri_mt_v1_forward.13} parent=0
    _
  %s6 = ssub.s32 1, %s4
  %s7 = scalar_select 0, %s6, %s4
  // Predicated region
  $region2: #{tri_mt_v1_forward.13} parent=0 // pred_check
    _
  $region3: #{tri_mt_v1_forward.13} parent=0 // pred_check_branch
    %9 = sbr.rel (0) target = $region5
  $region4: #{tri_mt_v1_forward.13} parent=0 // pred_region
    _
  $region5: #{tri_mt_v1_forward.13} parent=0 // pred_fallthru
    _
  // Predicated region
  $region6: #{tri_mt_v1_forward.13} parent=0 // pred_check
    _
  $region7: #{tri_mt_v1_forward.13} parent=0 // pred_check_branch
    %11 = sbr.rel (0) target = $region9
  $region8: #{tri_mt_v1_forward.13} parent=0 // pred_region
    _
  $region9: #{tri_mt_v1_forward.13} parent=0 // pred_fallthru
    _
  // Predicated region
  $region10: #{tri_mt_v1_forward.13} parent=0 // pred_check
    _
  $region11: #{tri_mt_v1_forward.13} parent=0 // pred_check_branch
    %13 = sbr.rel (0) target = $region13
  $region12: #{tri_mt_v1_forward.13} parent=0 // pred_region
    _
  $region13: #{tri_mt_v1_forward.13} parent=0 // pred_fallthru
    _
  %v15 = vld [vmem:[%s0] sm:$0xff]
  %v16 = vld [vmem:[%s0 + $0x8] sm:$0xff]
  %v17 = vld [vmem:[%s0 + $0x10] sm:$0xff]
  %v18 = vld [vmem:[%s1] sm:$0xf]
  %v19 = vld [vmem:[%s1 + $0x4] sm:$0xf]
  %v20 = vld [vmem:[%s1 + $0x8] sm:$0xf]
  %v21 = vld [vmem:[%s1 + $0xc] sm:$0xf]
  %v22 = vld [vmem:[%s1 + $0x10] sm:$0xf]
  %v23 = vld [vmem:[%s1 + $0x14] sm:$0xf]
  %v24 = vld [vmem:[%s1 + $0x18] sm:$0xf]
  %v25 = vld [vmem:[%s1 + $0x1c] sm:$0xf]
  %v26 = vld [vmem:[%s1 + $0x20] sm:$0xf]
  %v27 = vld [vmem:[%s1 + $0x24] sm:$0xf]
  %v28 = vld [vmem:[%s1 + $0x28] sm:$0xf]
  %v29 = vld [vmem:[%s1 + $0x2c] sm:$0xf]
  %v30 = vld [vmem:[%s1 + $0x30] sm:$0xf]
  %v31 = vld [vmem:[%s1 + $0x34] sm:$0xf]
  %v32 = vld [vmem:[%s1 + $0x38] sm:$0xf]
  %v33 = vld [vmem:[%s1 + $0x3c] sm:$0xf]
  %v34 = vld [vmem:[%s1 + $0x40] sm:$0xf]
  %v35 = vld [vmem:[%s1 + $0x44] sm:$0xf]
  %v36 = vld [vmem:[%s1 + $0x48] sm:$0xf]
  %v37 = vld [vmem:[%s1 + $0x4c] sm:$0xf]
  %v38 = vld [vmem:[%s1 + $0x50] sm:$0xf]
  %v39 = vld [vmem:[%s1 + $0x54] sm:$0xf]
  %v40 = vld [vmem:[%s1 + $0x58] sm:$0xf]
  %v41 = vld [vmem:[%s1 + $0x5c] sm:$0xf]
  %v42 = vld [vmem:[%s1 + $0x60] sm:$0xf]
  %v43 = vld [vmem:[%s1 + $0x64] sm:$0xf]
  %v44 = vld [vmem:[%s1 + $0x68] sm:$0xf]
  %v45 = vld [vmem:[%s1 + $0x6c] sm:$0xf]
  %v46 = vld [vmem:[%s1 + $0x70] sm:$0xf]
  %v47 = vld [vmem:[%s1 + $0x74] sm:$0xf]
  %v48 = vld [vmem:[%s1 + $0x78] sm:$0xf]
  %v49 = vld [vmem:[%s1 + $0x7c] sm:$0xf]
  %v50 = vld [vmem:[%s1 + $0x80] sm:$0xf]
  %v51 = vld [vmem:[%s1 + $0x84] sm:$0xf]
  %v52 = vld [vmem:[%s1 + $0x88] sm:$0xf]
  %v53 = vld [vmem:[%s1 + $0x8c] sm:$0xf]
  %v54 = vld [vmem:[%s1 + $0x90] sm:$0xf]
  %v55 = vld [vmem:[%s1 + $0x94] sm:$0xf]
  %v56 = vld [vmem:[%s1 + $0x98] sm:$0xf]
  %v57 = vld [vmem:[%s1 + $0x9c] sm:$0xf]
  %v58 = vld [vmem:[%s1 + $0xa0] sm:$0xf]
  %v59 = vld [vmem:[%s1 + $0xa4] sm:$0xf]
  %v60 = vld [vmem:[%s1 + $0xa8] sm:$0xf]
  %v61 = vld [vmem:[%s1 + $0xac] sm:$0xf]
  %v62 = vld [vmem:[%s1 + $0xb0] sm:$0xf]
  %v63 = vld [vmem:[%s1 + $0xb4] sm:$0xf]
  %v64 = vld [vmem:[%s1 + $0xb8] sm:$0xf]
  %v65 = vld [vmem:[%s1 + $0xbc] sm:$0xf]
  %v66 = vld [vmem:[%s1 + $0xc0] sm:$0xf]
  %v67 = vld [vmem:[%s1 + $0xc4] sm:$0xf]
  %v68 = vld [vmem:[%s1 + $0xc8] sm:$0xf]
  %v69 = vld [vmem:[%s1 + $0xcc] sm:$0xf]
  %v70 = vld [vmem:[%s1 + $0xd0] sm:$0xf]
  %v71 = vld [vmem:[%s1 + $0xd4] sm:$0xf]
  %v72 = vld [vmem:[%s1 + $0xd8] sm:$0xf]
  %v73 = vld [vmem:[%s1 + $0xdc] sm:$0xf]
  %v74 = vld [vmem:[%s1 + $0xe0] sm:$0xf]
  %v75 = vld [vmem:[%s1 + $0xe4] sm:$0xf]
  %v76 = vld [vmem:[%s1 + $0xe8] sm:$0xf]
  %v77 = vld [vmem:[%s1 + $0xec] sm:$0xf]
  %v78 = vld [vmem:[%s1 + $0xf0] sm:$0xf]
  %v79 = vld [vmem:[%s1 + $0xf4] sm:$0xf]
  %v80 = vld [vmem:[%s1 + $0xf8] sm:$0xf]
  %v81 = vld [vmem:[%s1 + $0xfc] sm:$0xf]
  %v82 = vld [vmem:[%s1 + $0x100] sm:$0xf]
  %v83 = vld [vmem:[%s1 + $0x104] sm:$0xf]
  %v84 = vld [vmem:[%s1 + $0x108] sm:$0xf]
  %v85 = vld [vmem:[%s1 + $0x10c] sm:$0xf]
  %v86 = vld [vmem:[%s1 + $0x110] sm:$0xf]
  %v87 = vld [vmem:[%s1 + $0x114] sm:$0xf]
  %v88 = vld [vmem:[%s1 + $0x118] sm:$0xf]
  %v89 = vld [vmem:[%s1 + $0x11c] sm:$0xf]
  %v90 = vld [vmem:[%s1 + $0x120] sm:$0xf]
  %v91 = vld [vmem:[%s1 + $0x124] sm:$0xf]
  %v92 = vld [vmem:[%s1 + $0x128] sm:$0xf]
  %v93 = vld [vmem:[%s1 + $0x12c] sm:$0xf]
  %v94 = vld [vmem:[%s1 + $0x130] sm:$0xf]
  %v95 = vld [vmem:[%s1 + $0x134] sm:$0xf]
  %v96 = vld [vmem:[%s1 + $0x138] sm:$0xf]
  %v97 = vld [vmem:[%s1 + $0x13c] sm:$0xf]
  %v98 = vld [vmem:[%s1 + $0x140] sm:$0xf]
  %v99 = vld [vmem:[%s1 + $0x144] sm:$0xf]
  %v100 = vld [vmem:[%s1 + $0x148] sm:$0xf]
  %v101 = vld [vmem:[%s1 + $0x14c] sm:$0xf]
  %v102 = vld [vmem:[%s1 + $0x150] sm:$0xf]
  %v103 = vld [vmem:[%s1 + $0x154] sm:$0xf]
  %v104 = vld [vmem:[%s1 + $0x158] sm:$0xf]
  %v105 = vld [vmem:[%s1 + $0x15c] sm:$0xf]
  %v106 = vld [vmem:[%s1 + $0x160] sm:$0xf]
  %v107 = vld [vmem:[%s1 + $0x164] sm:$0xf]
  %v108 = vld [vmem:[%s1 + $0x168] sm:$0xf]
  %v109 = vld [vmem:[%s1 + $0x16c] sm:$0xf]
  %v110 = vld [vmem:[%s1 + $0x170] sm:$0xf]
  %v111 = vld [vmem:[%s1 + $0x174] sm:$0xf]
  %v112 = vld [vmem:[%s1 + $0x178] sm:$0xf]
  %v113 = vld [vmem:[%s1 + $0x17c] sm:$0xf]
  %v114 = vld [vmem:[%s2] sm:$0x1]
  %v116 = vlaneseq
  %v117 = vshrl.u32 %v116, 7
  %v118 = vsub.s32 0, %v117
  %v119 = vrot.slane %v114, %v118
  %v124 = vunpack.c.l.b16 %v15
  %v125 = vunpack.c.h.b16 %v15
  %v126 = vunpack.c.l.b16 %v16
  %v127 = vunpack.c.h.b16 %v16
  %v128 = vunpack.c.l.b16 %v17
  %v129 = vunpack.c.h.b16 %v17
  %v130 = vpack.c.b16 %v124, %v124
  %v131 = vpack.c.b16 %v125, %v125
  %v132 = vpack.c.b16 %v126, %v126
  %v133 = vpack.c.b16 %v127, %v127
  %v134 = vpack.c.b16 %v128, %v128
  %v135 = vpack.c.b16 %v129, %v129
  %v238 = vunpack.c.l.b16 %v18
  %v239 = vunpack.c.l.b16 %v19
  %v240 = vunpack.c.l.b16 %v20
  %v241 = vunpack.c.l.b16 %v21
  %v242 = vunpack.c.l.b16 %v22
  %v243 = vunpack.c.l.b16 %v23
  %v244 = vunpack.c.l.b16 %v24
  %v245 = vunpack.c.l.b16 %v25
  %v246 = vunpack.c.l.b16 %v26
  %v247 = vunpack.c.l.b16 %v27
  %v248 = vunpack.c.l.b16 %v28
  %v249 = vunpack.c.l.b16 %v29
  %v250 = vunpack.c.l.b16 %v30
  %v251 = vunpack.c.l.b16 %v31
  %v252 = vunpack.c.l.b16 %v32
  %v253 = vunpack.c.l.b16 %v33
  %v254 = vunpack.c.l.b16 %v34
  %v255 = vunpack.c.l.b16 %v35
  %v256 = vunpack.c.l.b16 %v36
  %v257 = vunpack.c.l.b16 %v37
  %v258 = vunpack.c.l.b16 %v38
  %v259 = vunpack.c.l.b16 %v39
  %v260 = vunpack.c.l.b16 %v40
  %v261 = vunpack.c.l.b16 %v41
  %v262 = vunpack.c.l.b16 %v42
  %v263 = vunpack.c.l.b16 %v43
  %v264 = vunpack.c.l.b16 %v44
  %v265 = vunpack.c.l.b16 %v45
  %v266 = vunpack.c.l.b16 %v46
  %v267 = vunpack.c.l.b16 %v47
  %v268 = vunpack.c.l.b16 %v48
  %v269 = vunpack.c.l.b16 %v49
  %v270 = vunpack.c.l.b16 %v50
  %v271 = vunpack.c.l.b16 %v51
  %v272 = vunpack.c.l.b16 %v52
  %v273 = vunpack.c.l.b16 %v53
  %v274 = vunpack.c.l.b16 %v54
  %v275 = vunpack.c.l.b16 %v55
  %v276 = vunpack.c.l.b16 %v56
  %v277 = vunpack.c.l.b16 %v57
  %v278 = vunpack.c.l.b16 %v58
  %v279 = vunpack.c.l.b16 %v59
  %v280 = vunpack.c.l.b16 %v60
  %v281 = vunpack.c.l.b16 %v61
  %v282 = vunpack.c.l.b16 %v62
  %v283 = vunpack.c.l.b16 %v63
  %v284 = vunpack.c.l.b16 %v64
  %v285 = vunpack.c.l.b16 %v65
  %v286 = vunpack.c.l.b16 %v66
  %v287 = vunpack.c.l.b16 %v67
  %v288 = vunpack.c.l.b16 %v68
  %v289 = vunpack.c.l.b16 %v69
  %v290 = vunpack.c.l.b16 %v70
  %v291 = vunpack.c.l.b16 %v71
  %v292 = vunpack.c.l.b16 %v72
  %v293 = vunpack.c.l.b16 %v73
  %v294 = vunpack.c.l.b16 %v74
  %v295 = vunpack.c.l.b16 %v75
  %v296 = vunpack.c.l.b16 %v76
  %v297 = vunpack.c.l.b16 %v77
  %v298 = vunpack.c.l.b16 %v78
  %v299 = vunpack.c.l.b16 %v79
  %v300 = vunpack.c.l.b16 %v80
  %v301 = vunpack.c.l.b16 %v81
  %v302 = vunpack.c.l.b16 %v82
  %v303 = vunpack.c.l.b16 %v83
  %v304 = vunpack.c.l.b16 %v84
  %v305 = vunpack.c.l.b16 %v85
  %v306 = vunpack.c.l.b16 %v86
  %v307 = vunpack.c.l.b16 %v87
  %v308 = vunpack.c.l.b16 %v88
  %v309 = vunpack.c.l.b16 %v89
  %v310 = vunpack.c.l.b16 %v90
  %v311 = vunpack.c.l.b16 %v91
  %v312 = vunpack.c.l.b16 %v92
  %v313 = vunpack.c.l.b16 %v93
  %v314 = vunpack.c.l.b16 %v94
  %v315 = vunpack.c.l.b16 %v95
  %v316 = vunpack.c.l.b16 %v96
  %v317 = vunpack.c.l.b16 %v97
  %v318 = vunpack.c.l.b16 %v98
  %v319 = vunpack.c.l.b16 %v99
  %v320 = vunpack.c.l.b16 %v100
  %v321 = vunpack.c.l.b16 %v101
  %v322 = vunpack.c.l.b16 %v102
  %v323 = vunpack.c.l.b16 %v103
  %v324 = vunpack.c.l.b16 %v104
  %v325 = vunpack.c.l.b16 %v105
  %v326 = vunpack.c.l.b16 %v106
  %v327 = vunpack.c.l.b16 %v107
  %v328 = vunpack.c.l.b16 %v108
  %v329 = vunpack.c.l.b16 %v109
  %v330 = vunpack.c.l.b16 %v110
  %v331 = vunpack.c.l.b16 %v111
  %v332 = vunpack.c.l.b16 %v112
  %v333 = vunpack.c.l.b16 %v113
  %v334 = vpack.c.b16 %v239, %v238
  %v335 = vpack.c.b16 %v241, %v240
  %v336 = vpack.c.b16 %v243, %v242
  %v337 = vpack.c.b16 %v245, %v244
  %v338 = vpack.c.b16 %v247, %v246
  %v339 = vpack.c.b16 %v249, %v248
  %v340 = vpack.c.b16 %v251, %v250
  %v341 = vpack.c.b16 %v253, %v252
  %v342 = vpack.c.b16 %v255, %v254
  %v343 = vpack.c.b16 %v257, %v256
  %v344 = vpack.c.b16 %v259, %v258
  %v345 = vpack.c.b16 %v261, %v260
  %v346 = vpack.c.b16 %v263, %v262
  %v347 = vpack.c.b16 %v265, %v264
  %v348 = vpack.c.b16 %v267, %v266
  %v349 = vpack.c.b16 %v269, %v268
  %v350 = vpack.c.b16 %v271, %v270
  %v351 = vpack.c.b16 %v273, %v272
  %v352 = vpack.c.b16 %v275, %v274
  %v353 = vpack.c.b16 %v277, %v276
  %v354 = vpack.c.b16 %v279, %v278
  %v355 = vpack.c.b16 %v281, %v280
  %v356 = vpack.c.b16 %v283, %v282
  %v357 = vpack.c.b16 %v285, %v284
  %v358 = vpack.c.b16 %v287, %v286
  %v359 = vpack.c.b16 %v289, %v288
  %v360 = vpack.c.b16 %v291, %v290
  %v361 = vpack.c.b16 %v293, %v292
  %v362 = vpack.c.b16 %v295, %v294
  %v363 = vpack.c.b16 %v297, %v296
  %v364 = vpack.c.b16 %v299, %v298
  %v365 = vpack.c.b16 %v301, %v300
  %v366 = vpack.c.b16 %v303, %v302
  %v367 = vpack.c.b16 %v305, %v304
  %v368 = vpack.c.b16 %v307, %v306
  %v369 = vpack.c.b16 %v309, %v308
  %v370 = vpack.c.b16 %v311, %v310
  %v371 = vpack.c.b16 %v313, %v312
  %v372 = vpack.c.b16 %v315, %v314
  %v373 = vpack.c.b16 %v317, %v316
  %v374 = vpack.c.b16 %v319, %v318
  %v375 = vpack.c.b16 %v321, %v320
  %v376 = vpack.c.b16 %v323, %v322
  %v377 = vpack.c.b16 %v325, %v324
  %v378 = vpack.c.b16 %v327, %v326
  %v379 = vpack.c.b16 %v329, %v328
  %v380 = vpack.c.b16 %v331, %v330
  %v381 = vpack.c.b16 %v333, %v332
  %430 = vmatprep.subr.bf16.mxu0 0
  %431 = vmatpush1.bf16.msra.mxu0 %v334
  %432 = vmatprep.subr.bf16.mxu0 0
  %433 = vmatpush1.bf16.msra.mxu0 %v335
  %434 = vmatprep.subr.bf16.mxu0 0
  %435 = vmatpush1.bf16.msra.mxu0 %v336
  %436 = vmatprep.subr.bf16.mxu0 0
  %437 = vmatpush1.bf16.msra.mxu0 %v337
  %438 = vmatprep.subr.bf16.mxu0 0
  %439 = vmatpush1.bf16.msra.mxu0 %v338
  %440 = vmatprep.subr.bf16.mxu0 0
  %441 = vmatpush1.bf16.msra.mxu0 %v339
  %442 = vmatprep.subr.bf16.mxu0 0
  %443 = vmatpush1.bf16.msra.mxu0 %v340
  %444 = vmatprep.subr.bf16.mxu0 0
  %445 = vmatpush1.bf16.msra.mxu0 %v341
  %446 = vmatprep.subr.bf16.mxu0 0
  %447 = vmatpush1.bf16.msra.mxu0 %v342
  %448 = vmatprep.subr.bf16.mxu0 0
  %449 = vmatpush1.bf16.msra.mxu0 %v343
  %450 = vmatprep.subr.bf16.mxu0 0
  %451 = vmatpush1.bf16.msra.mxu0 %v344
  %452 = vmatprep.subr.bf16.mxu0 0
  %453 = vmatpush1.bf16.msra.mxu0 %v345
  %454 = vmatprep.subr.bf16.mxu0 0
  %455 = vmatpush1.bf16.msra.mxu0 %v346
  %456 = vmatprep.subr.bf16.mxu0 0
  %457 = vmatpush1.bf16.msra.mxu0 %v347
  %458 = vmatprep.subr.bf16.mxu0 0
  %459 = vmatpush1.bf16.msra.mxu0 %v348
  %460 = vmatprep.subr.bf16.mxu0 0
  %461 = vmatpush1.bf16.msra.mxu0 %v349
  %462 = vmatprep.mubr.bf16.mxu0 %v131
  %463 = vmatmul.mubr.bf16.gmra.mrb[0].mxu0 %v130
  %v464 = vpop.f32.mrb[0].mxu0
  %v465 = vadd.f32 %v119, %v464
  %v466 = vpop.f32.mrb[0].mxu0
  %v467 = vpop.f32.mrb[0].mxu0
  %v468 = vpop.f32.mrb[0].mxu0
  %469 = vdwg.mxu0
  %470 = vmatprep.subr.bf16.mxu0 0
  %471 = vmatpush1.bf16.msra.mxu0 %v350
  %472 = vmatprep.subr.bf16.mxu0 0
  %473 = vmatpush1.bf16.msra.mxu0 %v351
  %474 = vmatprep.subr.bf16.mxu0 0
  %475 = vmatpush1.bf16.msra.mxu0 %v352
  %476 = vmatprep.subr.bf16.mxu0 0
  %477 = vmatpush1.bf16.msra.mxu0 %v353
  %478 = vmatprep.subr.bf16.mxu0 0
  %479 = vmatpush1.bf16.msra.mxu0 %v354
  %480 = vmatprep.subr.bf16.mxu0 0
  %481 = vmatpush1.bf16.msra.mxu0 %v355
  %482 = vmatprep.subr.bf16.mxu0 0
  %483 = vmatpush1.bf16.msra.mxu0 %v356
  %484 = vmatprep.subr.bf16.mxu0 0
  %485 = vmatpush1.bf16.msra.mxu0 %v357
  %486 = vmatprep.subr.bf16.mxu0 0
  %487 = vmatpush1.bf16.msra.mxu0 %v358
  %488 = vmatprep.subr.bf16.mxu0 0
  %489 = vmatpush1.bf16.msra.mxu0 %v359
  %490 = vmatprep.subr.bf16.mxu0 0
  %491 = vmatpush1.bf16.msra.mxu0 %v360
  %492 = vmatprep.subr.bf16.mxu0 0
  %493 = vmatpush1.bf16.msra.mxu0 %v361
  %494 = vmatprep.subr.bf16.mxu0 0
  %495 = vmatpush1.bf16.msra.mxu0 %v362
  %496 = vmatprep.subr.bf16.mxu0 0
  %497 = vmatpush1.bf16.msra.mxu0 %v363
  %498 = vmatprep.subr.bf16.mxu0 0
  %499 = vmatpush1.bf16.msra.mxu0 %v364
  %500 = vmatprep.subr.bf16.mxu0 0
  %501 = vmatpush1.bf16.msra.mxu0 %v365
  %502 = vmatprep.mubr.bf16.mxu0 %v133
  %503 = vmatmul.mubr.bf16.gmra.mrb[0].mxu0 %v132
  %v504 = vpop.f32.mrb[0].mxu0
  %v505 = vadd.f32 %v465, %v504
  %v506 = vpop.f32.mrb[0].mxu0
  %v507 = vpop.f32.mrb[0].mxu0
  %v508 = vpop.f32.mrb[0].mxu0
  %509 = vdwg.mxu0
  %510 = vmatprep.subr.bf16.mxu0 0
  %511 = vmatpush1.bf16.msra.mxu0 %v366
  %512 = vmatprep.subr.bf16.mxu0 0
  %513 = vmatpush1.bf16.msra.mxu0 %v367
  %514 = vmatprep.subr.bf16.mxu0 0
  %515 = vmatpush1.bf16.msra.mxu0 %v368
  %516 = vmatprep.subr.bf16.mxu0 0
  %517 = vmatpush1.bf16.msra.mxu0 %v369
  %518 = vmatprep.subr.bf16.mxu0 0
  %519 = vmatpush1.bf16.msra.mxu0 %v370
  %520 = vmatprep.subr.bf16.mxu0 0
  %521 = vmatpush1.bf16.msra.mxu0 %v371
  %522 = vmatprep.subr.bf16.mxu0 0
  %523 = vmatpush1.bf16.msra.mxu0 %v372
  %524 = vmatprep.subr.bf16.mxu0 0
  %525 = vmatpush1.bf16.msra.mxu0 %v373
  %526 = vmatprep.subr.bf16.mxu0 0
  %527 = vmatpush1.bf16.msra.mxu0 %v374
  %528 = vmatprep.subr.bf16.mxu0 0
  %529 = vmatpush1.bf16.msra.mxu0 %v375
  %530 = vmatprep.subr.bf16.mxu0 0
  %531 = vmatpush1.bf16.msra.mxu0 %v376
  %532 = vmatprep.subr.bf16.mxu0 0
  %533 = vmatpush1.bf16.msra.mxu0 %v377
  %534 = vmatprep.subr.bf16.mxu0 0
  %535 = vmatpush1.bf16.msra.mxu0 %v378
  %536 = vmatprep.subr.bf16.mxu0 0
  %537 = vmatpush1.bf16.msra.mxu0 %v379
  %538 = vmatprep.subr.bf16.mxu0 0
  %539 = vmatpush1.bf16.msra.mxu0 %v380
  %540 = vmatprep.subr.bf16.mxu0 0
  %541 = vmatpush1.bf16.msra.mxu0 %v381
  %542 = vmatprep.mubr.bf16.mxu0 %v135
  %543 = vmatmul.mubr.bf16.gmra.mrb[0].mxu0 %v134
  %v544 = vpop.f32.mrb[0].mxu0
  %v545 = vadd.f32 %v505, %v544
  %v546 = vpop.f32.mrb[0].mxu0
  %v547 = vpop.f32.mrb[0].mxu0
  %v548 = vpop.f32.mrb[0].mxu0
  %549 = vdwg.mxu0
  %v550 = vpack.c.bf16 %v545, %v545
  %vm551 = vcmask 257024
  %552 = vst.msk [vmem:[%s3] sm:$0xf] %vm551, %v550
  // Predicated region
  $region14: #{tri_mt_v1_forward.13} parent=0 // pred_check
    _
  $region15: #{tri_mt_v1_forward.13} parent=0 // pred_check_branch
    %554 = sbr.rel (0) target = $region17
  $region16: #{tri_mt_v1_forward.13} parent=0 // pred_region
    _
  $region17: #{tri_mt_v1_forward.13} parent=0 // pred_fallthru
    _
  // Predicated region
  $region18: #{tri_mt_v1_forward.13} parent=0 // pred_check
    _
  $region19: #{tri_mt_v1_forward.13} parent=0 // pred_check_branch
    %556 = sbr.rel (0) target = $region21
  $region20: #{tri_mt_v1_forward.13} parent=0 // pred_region
    _
  $region21: #{tri_mt_v1_forward.13} parent=0 // pred_fallthru
    _

// kernel: tri_mt_v1_forward.14
$region0: #{tri_mt_v1_forward.14}
  #allocation0 [shape = 'u32[]', space=smem, size = 0x4, offset = 0x4, fixed_abs, tag = 'smem constant byte address 0x4 - core index']
  #allocation1 [shape = 'u32[144,128]{1,0:T(1,128)}', space=vmem, size = 0x12000, scoped, tag = 'internal scratch']
  %s0 = inlined_call_operand.vmem [shape: bf16[8,64], index: 0, kind: input, shape index: {}]
  %s1 = inlined_call_operand.vmem [shape: bf16[64,32], index: 1, kind: input, shape index: {}]
  %s2 = inlined_call_operand.vmem [shape: f32[1,32], index: 2, kind: input, shape index: {}]
  %s3 = inlined_call_operand.vmem [shape: bf16[8,32], index: 3, kind: output, shape index: {}]
  %s4 = sld [smem:[#allocation0]]
  $region22: #{tri_mt_v1_forward.14} parent=0
    _
  %s6 = ssub.s32 1, %s4
  %s7 = scalar_select 0, %s6, %s4
  // Predicated region
  $region2: #{tri_mt_v1_forward.14} parent=0 // pred_check
    _
  $region3: #{tri_mt_v1_forward.14} parent=0 // pred_check_branch
    %9 = sbr.rel (0) target = $region5
  $region4: #{tri_mt_v1_forward.14} parent=0 // pred_region
    _
  $region5: #{tri_mt_v1_forward.14} parent=0 // pred_fallthru
    _
  // Predicated region
  $region6: #{tri_mt_v1_forward.14} parent=0 // pred_check
    _
  $region7: #{tri_mt_v1_forward.14} parent=0 // pred_check_branch
    %11 = sbr.rel (0) target = $region9
  $region8: #{tri_mt_v1_forward.14} parent=0 // pred_region
    _
  $region9: #{tri_mt_v1_forward.14} parent=0 // pred_fallthru
    _
  // Predicated region
  $region10: #{tri_mt_v1_forward.14} parent=0 // pred_check
    _
  $region11: #{tri_mt_v1_forward.14} parent=0 // pred_check_branch
    %13 = sbr.rel (0) target = $region13
  $region12: #{tri_mt_v1_forward.14} parent=0 // pred_region
    _
  $region13: #{tri_mt_v1_forward.14} parent=0 // pred_fallthru
    _
  %v15 = vld [vmem:[%s0] sm:$0xf]
  %v16 = vld [vmem:[%s1] sm:$0xf]
  %v17 = vld [vmem:[%s1 + $0x4] sm:$0xf]
  %v18 = vld [vmem:[%s1 + $0x8] sm:$0xf]
  %v19 = vld [vmem:[%s1 + $0xc] sm:$0xf]
  %v20 = vld [vmem:[%s1 + $0x10] sm:$0xf]
  %v21 = vld [vmem:[%s1 + $0x14] sm:$0xf]
  %v22 = vld [vmem:[%s1 + $0x18] sm:$0xf]
  %v23 = vld [vmem:[%s1 + $0x1c] sm:$0xf]
  %v24 = vld [vmem:[%s2] sm:$0x1]
  %v26 = vlaneseq
  %v27 = vshrl.u32 %v26, 7
  %v28 = vsub.s32 0, %v27
  %v29 = vrot.slane %v24, %v28
  %v39 = vunpack.c.l.b16 %v16
  %v40 = vunpack.c.l.b16 %v17
  %v41 = vunpack.c.l.b16 %v18
  %v42 = vunpack.c.l.b16 %v19
  %v43 = vunpack.c.l.b16 %v20
  %v44 = vunpack.c.l.b16 %v21
  %v45 = vunpack.c.l.b16 %v22
  %v46 = vunpack.c.l.b16 %v23
  %v47 = vpack.c.b16 %v40, %v39
  %v48 = vpack.c.b16 %v42, %v41
  %v49 = vpack.c.b16 %v44, %v43
  %v50 = vpack.c.b16 %v46, %v45
  %vm55 = vcmask 523264
  %v57 = vsel %vm55, %v15, 0
  %59 = vmatprep.subr.bf16.mxu0 0
  %60 = vmatpush1.bf16.msra.mxu0 %v47
  %61 = vmatprep.subr.bf16.mxu0 0
  %62 = vmatpush1.bf16.msra.mxu0 %v48
  %63 = vmatprep.subr.bf16.mxu0 0
  %64 = vmatpush1.bf16.msra.mxu0 %v49
  %65 = vmatprep.subr.bf16.mxu0 0
  %66 = vmatpush1.bf16.msra.mxu0 %v50
  %67 = vmatprep.subr.bf16.mxu0 0
  %68 = vmatpush1.bf16.msra.mxu0 0
  %69 = vmatprep.subr.bf16.mxu0 0
  %70 = vmatpush1.bf16.msra.mxu0 0
  %71 = vmatprep.subr.bf16.mxu0 0
  %72 = vmatpush1.bf16.msra.mxu0 0
  %73 = vmatprep.subr.bf16.mxu0 0
  %74 = vmatpush1.bf16.msra.mxu0 0
  %75 = vmatprep.subr.bf16.mxu0 0
  %76 = vmatpush1.bf16.msra.mxu0 0
  %77 = vmatprep.subr.bf16.mxu0 0
  %78 = vmatpush1.bf16.msra.mxu0 0
  %79 = vmatprep.subr.bf16.mxu0 0
  %80 = vmatpush1.bf16.msra.mxu0 0
  %81 = vmatprep.subr.bf16.mxu0 0
  %82 = vmatpush1.bf16.msra.mxu0 0
  %83 = vmatprep.subr.bf16.mxu0 0
  %84 = vmatpush1.bf16.msra.mxu0 0
  %85 = vmatprep.subr.bf16.mxu0 0
  %86 = vmatpush1.bf16.msra.mxu0 0
  %87 = vmatprep.subr.bf16.mxu0 0
  %88 = vmatpush1.bf16.msra.mxu0 0
  %89 = vmatprep.subr.bf16.mxu0 0
  %90 = vmatpush1.bf16.msra.mxu0 0
  %91 = vmatprep.mubr.bf16.mxu0 0
  %92 = vmatmul.mubr.bf16.gmra.mrb[0].mxu0 %v57
  %v93 = vpop.f32.mrb[0].mxu0
  %v94 = vadd.f32 %v29, %v93
  %v95 = vpop.f32.mrb[0].mxu0
  %v96 = vpop.f32.mrb[0].mxu0
  %v97 = vpop.f32.mrb[0].mxu0
  %98 = vdwg.mxu0
  %v99 = vpack.c.bf16 %v94, %v94
  %vm100 = vcmask 257024
  %101 = vst.msk [vmem:[%s3] sm:$0xf] %vm100, %v99
  // Predicated region
  $region14: #{tri_mt_v1_forward.14} parent=0 // pred_check
    _
  $region15: #{tri_mt_v1_forward.14} parent=0 // pred_check_branch
    %103 = sbr.rel (0) target = $region17
  $region16: #{tri_mt_v1_forward.14} parent=0 // pred_region
    _
  $region17: #{tri_mt_v1_forward.14} parent=0 // pred_fallthru
    _
  // Predicated region
  $region18: #{tri_mt_v1_forward.14} parent=0 // pred_check
    _
  $region19: #{tri_mt_v1_forward.14} parent=0 // pred_check_branch
    %105 = sbr.rel (0) target = $region21
  $region20: #{tri_mt_v1_forward.14} parent=0 // pred_region
    _
  $region21: #{tri_mt_v1_forward.14} parent=0 // pred_fallthru
    _

// kernel: tri_mt_v1_forward.10
$region0: #{tri_mt_v1_forward.10}
  #allocation0 [shape = 'u32[]', space=smem, size = 0x4, offset = 0x4, fixed_abs, tag = 'smem constant byte address 0x4 - core index']
  #allocation1 [shape = 'u32[144,128]{1,0:T(1,128)}', space=vmem, size = 0x12000, scoped, tag = 'internal scratch']
  %s0 = inlined_call_operand.vmem [shape: f32[16,1], index: 0, kind: input, shape index: {}]
  %s1 = inlined_call_operand.vmem [shape: f32[1,32], index: 1, kind: input, shape index: {}]
  %s2 = inlined_call_operand.vmem [shape: f32[1,32], index: 2, kind: input, shape index: {}]
  %s3 = inlined_call_operand.vmem [shape: f32[1,32], index: 3, kind: input, shape index: {}]
  %s4 = inlined_call_operand.vmem [shape: f32[1,32], index: 4, kind: input, shape index: {}]
  %s5 = inlined_call_operand.vmem [shape: bf16[16,32], index: 5, kind: output, shape index: {}]
  %s6 = sld [smem:[#allocation0]]
  $region30: #{tri_mt_v1_forward.10} parent=0
    _
  %s8 = ssub.s32 1, %s6
  %s9 = scalar_select 0, %s8, %s6
  // Predicated region
  $region2: #{tri_mt_v1_forward.10} parent=0 // pred_check
    _
  $region3: #{tri_mt_v1_forward.10} parent=0 // pred_check_branch
    %11 = sbr.rel (0) target = $region5
  $region4: #{tri_mt_v1_forward.10} parent=0 // pred_region
    _
  $region5: #{tri_mt_v1_forward.10} parent=0 // pred_fallthru
    _
  // Predicated region
  $region6: #{tri_mt_v1_forward.10} parent=0 // pred_check
    _
  $region7: #{tri_mt_v1_forward.10} parent=0 // pred_check_branch
    %13 = sbr.rel (0) target = $region9
  $region8: #{tri_mt_v1_forward.10} parent=0 // pred_region
    _
  $region9: #{tri_mt_v1_forward.10} parent=0 // pred_fallthru
    _
  // Predicated region
  $region10: #{tri_mt_v1_forward.10} parent=0 // pred_check
    _
  $region11: #{tri_mt_v1_forward.10} parent=0 // pred_check_branch
    %15 = sbr.rel (0) target = $region13
  $region12: #{tri_mt_v1_forward.10} parent=0 // pred_region
    _
  $region13: #{tri_mt_v1_forward.10} parent=0 // pred_fallthru
    _
  // Predicated region
  $region14: #{tri_mt_v1_forward.10} parent=0 // pred_check
    _
  $region15: #{tri_mt_v1_forward.10} parent=0 // pred_check_branch
    %17 = sbr.rel (0) target = $region17
  $region16: #{tri_mt_v1_forward.10} parent=0 // pred_region
    _
  $region17: #{tri_mt_v1_forward.10} parent=0 // pred_fallthru
    _
  // Predicated region
  $region18: #{tri_mt_v1_forward.10} parent=0 // pred_check
    _
  $region19: #{tri_mt_v1_forward.10} parent=0 // pred_check_branch
    %19 = sbr.rel (0) target = $region21
  $region20: #{tri_mt_v1_forward.10} parent=0 // pred_region
    _
  $region21: #{tri_mt_v1_forward.10} parent=0 // pred_fallthru
    _
  %v20 = vld [vmem:[%s0] sm:$0xff]
  %v21 = vld [vmem:[%s0 + $0x8] sm:$0xff]
  %v22 = vld [vmem:[%s1] sm:$0x1]
  %24 = vset.pattern.permute.xlu0 0
  %25 = vperm.xlu0 %24, %v20
  %v26 = vpop.permute.xlu0 %25
  %29 = vset.pattern.permute.xlu0 0
  %30 = vperm.xlu0 %29, %v21
  %v31 = vpop.permute.xlu0 %30
  %v34 = vlaneseq
  %v35 = vshrl.u32 %v34, 7
  %v36 = vsub.s32 0, %v35
  %v37 = vrot.slane %v22, %v36
  %v39 = vmul.f32 %v26, %v37
  %v40 = vmul.f32 %v31, %v37
  %v41 = vld [vmem:[%s2] sm:$0x1]
  %v43 = vlaneseq
  %v44 = vshrl.u32 %v43, 7
  %v45 = vsub.s32 0, %v44
  %v46 = vrot.slane %v41, %v45
  %v48 = vadd.f32 %v39, %v46
  %v49 = vadd.f32 %v40, %v46
  %vm50 = vcmask 261120
  %v51 = vsel %vm50, %v48, 0.0
  %52 = vadd.xlane.f32.xlu0 %v51
  %v53 = vpop.xlane.xlu0 %52
  %v54 = vsel %vm50, %v49, 0.0
  %55 = vadd.xlane.f32.xlu0 %v54
  %v56 = vpop.xlane.xlu0 %55
  %v57 = vrcp.pop 32.0
  %v58 = vmul.f32 %v53, %v57
  %v59 = vmul.f32 %v56, %v57
  %v60 = vsub.f32 %v48, %v58
  %v61 = vsub.f32 %v49, %v59
  %v62 = vmul.f32 %v60, %v60
  %v63 = vmul.f32 %v61, %v61
  %v64 = vsel %vm50, %v62, 0.0
  %65 = vadd.xlane.f32.xlu0 %v64
  %v66 = vpop.xlane.xlu0 %65
  %v67 = vsel %vm50, %v63, 0.0
  %68 = vadd.xlane.f32.xlu0 %v67
  %v69 = vpop.xlane.xlu0 %68
  %v70 = vmul.f32 %v66, %v57
  %v71 = vmul.f32 %v69, %v57
  %v72 = vadd.f32 %v70, 1e-05
  %v73 = vadd.f32 %v71, 1e-05
  %v74 = vrsqrt.pop %v72
  %v75 = vrsqrt.pop %v73
  %v76 = vmul.f32 %v60, %v74
  %v77 = vmul.f32 %v61, %v75
  %v78 = vld [vmem:[%s3] sm:$0x1]
  %v80 = vlaneseq
  %v81 = vshrl.u32 %v80, 7
  %v82 = vsub.s32 0, %v81
  %v83 = vrot.slane %v78, %v82
  %v85 = vmul.f32 %v76, %v83
  %v86 = vmul.f32 %v77, %v83
  %v87 = vld [vmem:[%s4] sm:$0x1]
  %v89 = vlaneseq
  %v90 = vshrl.u32 %v89, 7
  %v91 = vsub.s32 0, %v90
  %v92 = vrot.slane %v87, %v91
  %v94 = vadd.f32 %v85, %v92
  %v95 = vadd.f32 %v86, %v92
  %v96 = vmax.f32 %v94, 0.0
  %v97 = vmax.f32 %v95, 0.0
  %v98 = vpack.c.bf16 %v97, %v96
  %v100 = vunpack.c.l.b16 %v98
  %v101 = vunpack.c.h.b16 %v98
  %v102 = vpack.c.b16 %v100, %v100
  %v103 = vpack.c.b16 %v101, %v101
  %vm106 = vcmask 257024
  %107 = vst.msk [vmem:[%s5] sm:$0xf] %vm106, %v102
  %108 = vst.msk [vmem:[%s5 + $0x4] sm:$0xf] %vm106, %v103
  // Predicated region
  $region22: #{tri_mt_v1_forward.10} parent=0 // pred_check
    _
  $region23: #{tri_mt_v1_forward.10} parent=0 // pred_check_branch
    %110 = sbr.rel (0) target = $region25
  $region24: #{tri_mt_v1_forward.10} parent=0 // pred_region
    _
  $region25: #{tri_mt_v1_forward.10} parent=0 // pred_fallthru
    _
  // Predicated region
  $region26: #{tri_mt_v1_forward.10} parent=0 // pred_check
    _
  $region27: #{tri_mt_v1_forward.10} parent=0 // pred_check_branch
    %112 = sbr.rel (0) target = $region29
  $region28: #{tri_mt_v1_forward.10} parent=0 // pred_region
    _
  $region29: #{tri_mt_v1_forward.10} parent=0 // pred_fallthru
    _

// kernel: tri_mt_v1_forward.12
$region0: #{tri_mt_v1_forward.12}
  #allocation0 [shape = 'u32[]', space=smem, size = 0x4, offset = 0x4, fixed_abs, tag = 'smem constant byte address 0x4 - core index']
  #allocation1 [shape = 'u32[144,128]{1,0:T(1,128)}', space=vmem, size = 0x12000, scoped, tag = 'internal scratch']
  %s0 = inlined_call_operand.vmem [shape: f32[2,2], index: 0, kind: input, shape index: {}]
  %s1 = inlined_call_operand.vmem [shape: f32[2,32], index: 1, kind: input, shape index: {}]
  %s2 = inlined_call_operand.vmem [shape: f32[1,32], index: 2, kind: input, shape index: {}]
  %s3 = inlined_call_operand.vmem [shape: f32[1,32], index: 3, kind: input, shape index: {}]
  %s4 = inlined_call_operand.vmem [shape: f32[1,32], index: 4, kind: input, shape index: {}]
  %s5 = inlined_call_operand.vmem [shape: bf16[2,32], index: 5, kind: output, shape index: {}]
  %s6 = sld [smem:[#allocation0]]
  $region30: #{tri_mt_v1_forward.12} parent=0
    _
  %s8 = ssub.s32 1, %s6
  %s9 = scalar_select 0, %s8, %s6
  // Predicated region
  $region2: #{tri_mt_v1_forward.12} parent=0 // pred_check
    _
  $region3: #{tri_mt_v1_forward.12} parent=0 // pred_check_branch
    %11 = sbr.rel (0) target = $region5
  $region4: #{tri_mt_v1_forward.12} parent=0 // pred_region
    _
  $region5: #{tri_mt_v1_forward.12} parent=0 // pred_fallthru
    _
  // Predicated region
  $region6: #{tri_mt_v1_forward.12} parent=0 // pred_check
    _
  $region7: #{tri_mt_v1_forward.12} parent=0 // pred_check_branch
    %13 = sbr.rel (0) target = $region9
  $region8: #{tri_mt_v1_forward.12} parent=0 // pred_region
    _
  $region9: #{tri_mt_v1_forward.12} parent=0 // pred_fallthru
    _
  // Predicated region
  $region10: #{tri_mt_v1_forward.12} parent=0 // pred_check
    _
  $region11: #{tri_mt_v1_forward.12} parent=0 // pred_check_branch
    %15 = sbr.rel (0) target = $region13
  $region12: #{tri_mt_v1_forward.12} parent=0 // pred_region
    _
  $region13: #{tri_mt_v1_forward.12} parent=0 // pred_fallthru
    _
  // Predicated region
  $region14: #{tri_mt_v1_forward.12} parent=0 // pred_check
    _
  $region15: #{tri_mt_v1_forward.12} parent=0 // pred_check_branch
    %17 = sbr.rel (0) target = $region17
  $region16: #{tri_mt_v1_forward.12} parent=0 // pred_region
    _
  $region17: #{tri_mt_v1_forward.12} parent=0 // pred_fallthru
    _
  // Predicated region
  $region18: #{tri_mt_v1_forward.12} parent=0 // pred_check
    _
  $region19: #{tri_mt_v1_forward.12} parent=0 // pred_check_branch
    %19 = sbr.rel (0) target = $region21
  $region20: #{tri_mt_v1_forward.12} parent=0 // pred_region
    _
  $region21: #{tri_mt_v1_forward.12} parent=0 // pred_fallthru
    _
  %v20 = vld [vmem:[%s0] sm:$0x3]
  %v21 = vld [vmem:[%s1] sm:$0x1]
  %23 = vset.pattern.permute.xlu0 0
  %24 = vperm.xlu0 %23, %v20
  %v25 = vpop.permute.xlu0 %24
  %v27 = vlaneseq
  %v28 = vshrl.u32 %v27, 7
  %v29 = vsub.s32 0, %v28
  %v30 = vrot.slane %v21, %v29
  %v31 = vmul.f32 %v25, %v30
  %v32 = vld [vmem:[%s1 + $0x1] sm:$0x1]
  %33 = vset.pattern.permute.xlu0 1
  %34 = vperm.xlu0 %33, %v20
  %v35 = vpop.permute.xlu0 %34
  %v37 = vlaneseq
  %v38 = vshrl.u32 %v37, 7
  %v39 = vsub.s32 0, %v38
  %v40 = vrot.slane %v32, %v39
  %v41 = vmul.f32 %v35, %v40
  %v42 = vadd.f32 %v31, %v41
  %v43 = vld [vmem:[%s2] sm:$0x1]
  %v45 = vlaneseq
  %v46 = vshrl.u32 %v45, 7
  %v47 = vsub.s32 0, %v46
  %v48 = vrot.slane %v43, %v47
  %v50 = vadd.f32 %v42, %v48
  %vm51 = vcmask 254976
  %v52 = vsel %vm51, %v50, 0.0
  %53 = vadd.xlane.f32.xlu0 %v52
  %v54 = vpop.xlane.xlu0 %53
  %v55 = vrcp.pop 32.0
  %v56 = vmul.f32 %v54, %v55
  %v57 = vsub.f32 %v50, %v56
  %v58 = vmul.f32 %v57, %v57
  %v59 = vsel %vm51, %v58, 0.0
  %60 = vadd.xlane.f32.xlu0 %v59
  %v61 = vpop.xlane.xlu0 %60
  %v62 = vmul.f32 %v61, %v55
  %v63 = vadd.f32 %v62, 1e-05
  %v64 = vrsqrt.pop %v63
  %v65 = vmul.f32 %v57, %v64
  %v66 = vld [vmem:[%s3] sm:$0x1]
  %v68 = vlaneseq
  %v69 = vshrl.u32 %v68, 7
  %v70 = vsub.s32 0, %v69
  %v71 = vrot.slane %v66, %v70
  %v73 = vmul.f32 %v65, %v71
  %v74 = vld [vmem:[%s4] sm:$0x1]
  %v76 = vlaneseq
  %v77 = vshrl.u32 %v76, 7
  %v78 = vsub.s32 0, %v77
  %v79 = vrot.slane %v74, %v78
  %v81 = vadd.f32 %v73, %v79
  %v82 = vmax.f32 %v81, 0.0
  %v83 = vpack.c.bf16 %v82, %v82
  %vm84 = vcmask 253952
  %85 = vst.msk [vmem:[%s5] sm:$0x1] %vm84, %v83
  // Predicated region
  $region22: #{tri_mt_v1_forward.12} parent=0 // pred_check
    _
  $region23: #{tri_mt_v1_forward.12} parent=0 // pred_check_branch
    %87 = sbr.rel (0) target = $region25
  $region24: #{tri_mt_v1_forward.12} parent=0 // pred_region
    _
  $region25: #{tri_mt_v1_forward.12} parent=0 // pred_fallthru
    _
  // Predicated region
  $region26: #{tri_mt_v1_forward.12} parent=0 // pred_check
    _
  $region27: #{tri_mt_v1_forward.12} parent=0 // pred_check_branch
    %89 = sbr.rel (0) target = $region29
  $region28: #{tri_mt_v1_forward.12} parent=0 // pred_region
    _
  $region29: #{tri_mt_v1_forward.12} parent=0 // pred_fallthru
    _

// kernel: tri_mt_v1_forward.19
$region0: #{tri_mt_v1_forward.19}
  #allocation0 [shape = 'u32[]', space=smem, size = 0x4, offset = 0x4, fixed_abs, tag = 'smem constant byte address 0x4 - core index']
  #allocation1 [shape = 'u32[144,128]{1,0:T(1,128)}', space=vmem, size = 0x12000, scoped, tag = 'internal scratch']
  %s0 = inlined_call_operand.vmem [shape: bf16[2,32], index: 0, kind: input, shape index: {}]
  %s1 = inlined_call_operand.vmem [shape: bf16[2,32], index: 1, kind: input, shape index: {}]
  %s2 = inlined_call_operand.vmem [shape: f32[1,32], index: 2, kind: input, shape index: {}]
  %s3 = inlined_call_operand.vmem [shape: f32[1,32], index: 3, kind: input, shape index: {}]
  %s4 = inlined_call_operand.vmem [shape: bf16[32,32], index: 4, kind: input, shape index: {}]
  %s5 = inlined_call_operand.vmem [shape: bf16[32,32], index: 5, kind: input, shape index: {}]
  %s6 = inlined_call_operand.vmem [shape: f32[1,32], index: 6, kind: input, shape index: {}]
  %s7 = inlined_call_operand.vmem [shape: f32[1,32], index: 7, kind: input, shape index: {}]
  %s8 = inlined_call_operand.vmem [shape: f32[1,32], index: 8, kind: input, shape index: {}]
  %s9 = inlined_call_operand.vmem [shape: f32[1,32], index: 9, kind: input, shape index: {}]
  %s10 = inlined_call_operand.vmem [shape: f32[1,32], index: 10, kind: input, shape index: {}]
  %s11 = inlined_call_operand.vmem [shape: bf16[32,2], index: 11, kind: input, shape index: {}]
  %s12 = inlined_call_operand.vmem [shape: f32[1,2], index: 12, kind: input, shape index: {}]
  %s13 = inlined_call_operand.vmem [shape: f32[2,2], index: 13, kind: output, shape index: {}]
  %s14 = sld [smem:[#allocation0]]
  $region62: #{tri_mt_v1_forward.19} parent=0
    _
  %s16 = ssub.s32 1, %s14
  %s17 = scalar_select 0, %s16, %s14
  // Predicated region
  $region2: #{tri_mt_v1_forward.19} parent=0 // pred_check
    _
  $region3: #{tri_mt_v1_forward.19} parent=0 // pred_check_branch
    %19 = sbr.rel (0) target = $region5
  $region4: #{tri_mt_v1_forward.19} parent=0 // pred_region
    _
  $region5: #{tri_mt_v1_forward.19} parent=0 // pred_fallthru
    _
  // Predicated region
  $region6: #{tri_mt_v1_forward.19} parent=0 // pred_check
    _
  $region7: #{tri_mt_v1_forward.19} parent=0 // pred_check_branch
    %21 = sbr.rel (0) target = $region9
  $region8: #{tri_mt_v1_forward.19} parent=0 // pred_region
    _
  $region9: #{tri_mt_v1_forward.19} parent=0 // pred_fallthru
    _
  // Predicated region
  $region10: #{tri_mt_v1_forward.19} parent=0 // pred_check
    _
  $region11: #{tri_mt_v1_forward.19} parent=0 // pred_check_branch
    %23 = sbr.rel (0) target = $region13
  $region12: #{tri_mt_v1_forward.19} parent=0 // pred_region
    _
  $region13: #{tri_mt_v1_forward.19} parent=0 // pred_fallthru
    _
  // Predicated region
  $region14: #{tri_mt_v1_forward.19} parent=0 // pred_check
    _
  $region15: #{tri_mt_v1_forward.19} parent=0 // pred_check_branch
    %25 = sbr.rel (0) target = $region17
  $region16: #{tri_mt_v1_forward.19} parent=0 // pred_region
    _
  $region17: #{tri_mt_v1_forward.19} parent=0 // pred_fallthru
    _
  // Predicated region
  $region18: #{tri_mt_v1_forward.19} parent=0 // pred_check
    _
  $region19: #{tri_mt_v1_forward.19} parent=0 // pred_check_branch
    %27 = sbr.rel (0) target = $region21
  $region20: #{tri_mt_v1_forward.19} parent=0 // pred_region
    _
  $region21: #{tri_mt_v1_forward.19} parent=0 // pred_fallthru
    _
  // Predicated region
  $region22: #{tri_mt_v1_forward.19} parent=0 // pred_check
    _
  $region23: #{tri_mt_v1_forward.19} parent=0 // pred_check_branch
    %29 = sbr.rel (0) target = $region25
  $region24: #{tri_mt_v1_forward.19} parent=0 // pred_region
    _
  $region25: #{tri_mt_v1_forward.19} parent=0 // pred_fallthru
    _
  // Predicated region
  $region26: #{tri_mt_v1_forward.19} parent=0 // pred_check
    _
  $region27: #{tri_mt_v1_forward.19} parent=0 // pred_check_branch
    %31 = sbr.rel (0) target = $region29
  $region28: #{tri_mt_v1_forward.19} parent=0 // pred_region
    _
  $region29: #{tri_mt_v1_forward.19} parent=0 // pred_fallthru
    _
  // Predicated region
  $region30: #{tri_mt_v1_forward.19} parent=0 // pred_check
    _
  $region31: #{tri_mt_v1_forward.19} parent=0 // pred_check_branch
    %33 = sbr.rel (0) target = $region33
  $region32: #{tri_mt_v1_forward.19} parent=0 // pred_region
    _
  $region33: #{tri_mt_v1_forward.19} parent=0 // pred_fallthru
    _
  // Predicated region
  $region34: #{tri_mt_v1_forward.19} parent=0 // pred_check
    _
  $region35: #{tri_mt_v1_forward.19} parent=0 // pred_check_branch
    %35 = sbr.rel (0) target = $region37
  $region36: #{tri_mt_v1_forward.19} parent=0 // pred_region
    _
  $region37: #{tri_mt_v1_forward.19} parent=0 // pred_fallthru
    _
  // Predicated region
  $region38: #{tri_mt_v1_forward.19} parent=0 // pred_check
    _
  $region39: #{tri_mt_v1_forward.19} parent=0 // pred_check_branch
    %37 = sbr.rel (0) target = $region41
  $region40: #{tri_mt_v1_forward.19} parent=0 // pred_region
    _
  $region41: #{tri_mt_v1_forward.19} parent=0 // pred_fallthru
    _
  // Predicated region
  $region42: #{tri_mt_v1_forward.19} parent=0 // pred_check
    _
  $region43: #{tri_mt_v1_forward.19} parent=0 // pred_check_branch
    %39 = sbr.rel (0) target = $region45
  $region44: #{tri_mt_v1_forward.19} parent=0 // pred_region
    _
  $region45: #{tri_mt_v1_forward.19} parent=0 // pred_fallthru
    _
  // Predicated region
  $region46: #{tri_mt_v1_forward.19} parent=0 // pred_check
    _
  $region47: #{tri_mt_v1_forward.19} parent=0 // pred_check_branch
    %41 = sbr.rel (0) target = $region49
  $region48: #{tri_mt_v1_forward.19} parent=0 // pred_region
    _
  $region49: #{tri_mt_v1_forward.19} parent=0 // pred_fallthru
    _
  // Predicated region
  $region50: #{tri_mt_v1_forward.19} parent=0 // pred_check
    _
  $region51: #{tri_mt_v1_forward.19} parent=0 // pred_check_branch
    %43 = sbr.rel (0) target = $region53
  $region52: #{tri_mt_v1_forward.19} parent=0 // pred_region
    _
  $region53: #{tri_mt_v1_forward.19} parent=0 // pred_fallthru
    _
  %v45 = vld [vmem:[%s0] sm:$0x1]
  %v46 = vunpack.c.l.bf16 %v45
  %vm47 = vcmask 254976
  %v48 = vsel %vm47, %v46, 0.0
  %49 = vadd.xlane.f32.xlu0 %v48
  %v50 = vpop.xlane.xlu0 %49
  %v51 = vrcp.pop 32.0
  %v52 = vmul.f32 %v50, %v51
  %v53 = vsub.f32 %v46, %v52
  %v54 = vmul.f32 %v53, %v53
  %v55 = vsel %vm47, %v54, 0.0
  %56 = vadd.xlane.f32.xlu0 %v55
  %v57 = vpop.xlane.xlu0 %56
  %v58 = vmul.f32 %v57, %v51
  %v59 = vadd.f32 %v58, 1e-05
  %v60 = vrsqrt.pop %v59
  %v61 = vmul.f32 %v53, %v60
  %v62 = vld [vmem:[%s2] sm:$0x1]
  %v64 = vlaneseq
  %v65 = vshrl.u32 %v64, 7
  %v66 = vsub.s32 0, %v65
  %v67 = vrot.slane %v62, %v66
  %v69 = vmul.f32 %v61, %v67
  %v70 = vld [vmem:[%s3] sm:$0x1]
  %v72 = vlaneseq
  %v73 = vshrl.u32 %v72, 7
  %v74 = vsub.s32 0, %v73
  %v75 = vrot.slane %v70, %v74
  %v77 = vadd.f32 %v69, %v75
  %v78 = vpack.c.bf16 %v77, %v77
  %v79 = vld [vmem:[%s4] sm:$0xf]
  %v80 = vld [vmem:[%s4 + $0x4] sm:$0xf]
  %v81 = vld [vmem:[%s4 + $0x8] sm:$0xf]
  %v82 = vld [vmem:[%s4 + $0xc] sm:$0xf]
  %v83 = vld [vmem:[%s1] sm:$0x1]
  %v84 = vld [vmem:[%s5] sm:$0xf]
  %v85 = vld [vmem:[%s5 + $0x4] sm:$0xf]
  %v86 = vld [vmem:[%s5 + $0x8] sm:$0xf]
  %v87 = vld [vmem:[%s5 + $0xc] sm:$0xf]
  %v92 = vunpack.c.l.b16 %v84
  %v93 = vunpack.c.l.b16 %v85
  %v94 = vunpack.c.l.b16 %v86
  %v95 = vunpack.c.l.b16 %v87
  %v96 = vpack.c.b16 %v93, %v92
  %v97 = vpack.c.b16 %v95, %v94
  %vm100 = vcmask 261120
  %v102 = vsel %vm100, %v83, 0
  %104 = vmatprep.subr.bf16.mxu0 0
  %105 = vmatpush1.bf16.msra.mxu0 %v96
  %106 = vmatprep.subr.bf16.mxu0 0
  %107 = vmatpush1.bf16.msra.mxu0 %v97
  %108 = vmatprep.subr.bf16.mxu0 0
  %109 = vmatpush1.bf16.msra.mxu0 0
  %110 = vmatprep.subr.bf16.mxu0 0
  %111 = vmatpush1.bf16.msra.mxu0 0
  %112 = vmatprep.subr.bf16.mxu0 0
  %113 = vmatpush1.bf16.msra.mxu0 0
  %114 = vmatprep.subr.bf16.mxu0 0
  %115 = vmatpush1.bf16.msra.mxu0 0
  %116 = vmatprep.subr.bf16.mxu0 0
  %117 = vmatpush1.bf16.msra.mxu0 0
  %118 = vmatprep.subr.bf16.mxu0 0
  %119 = vmatpush1.bf16.msra.mxu0 0
  %120 = vmatprep.subr.bf16.mxu0 0
  %121 = vmatpush1.bf16.msra.mxu0 0
  %122 = vmatprep.subr.bf16.mxu0 0
  %123 = vmatpush1.bf16.msra.mxu0 0
  %124 = vmatprep.subr.bf16.mxu0 0
  %125 = vmatpush1.bf16.msra.mxu0 0
  %126 = vmatprep.subr.bf16.mxu0 0
  %127 = vmatpush1.bf16.msra.mxu0 0
  %128 = vmatprep.subr.bf16.mxu0 0
  %129 = vmatpush1.bf16.msra.mxu0 0
  %130 = vmatprep.subr.bf16.mxu0 0
  %131 = vmatpush1.bf16.msra.mxu0 0
  %132 = vmatprep.subr.bf16.mxu0 0
  %133 = vmatpush1.bf16.msra.mxu0 0
  %134 = vmatprep.subr.bf16.mxu0 0
  %135 = vmatpush1.bf16.msra.mxu0 0
  %136 = vmatprep.mubr.bf16.mxu0 0
  %137 = vmatmul.mubr.bf16.gmra.mrb[0].mxu0 %v102
  %v138 = vpop.f32.mrb[0].mxu0
  %v139 = vadd.f32 0.0, %v138
  %v140 = vpop.f32.mrb[0].mxu0
  %v141 = vpop.f32.mrb[0].mxu0
  %v142 = vpop.f32.mrb[0].mxu0
  %143 = vdwg.mxu0
  %v148 = vunpack.c.l.b16 %v79
  %v149 = vunpack.c.l.b16 %v80
  %v150 = vunpack.c.l.b16 %v81
  %v151 = vunpack.c.l.b16 %v82
  %v152 = vpack.c.b16 %v149, %v148
  %v153 = vpack.c.b16 %v151, %v150
  %v157 = vsel %vm100, %v78, 0
  %159 = vmatprep.subr.bf16.mxu0 0
  %160 = vmatpush1.bf16.msra.mxu0 %v152
  %161 = vmatprep.subr.bf16.mxu0 0
  %162 = vmatpush1.bf16.msra.mxu0 %v153
  %163 = vmatprep.subr.bf16.mxu0 0
  %164 = vmatpush1.bf16.msra.mxu0 0
  %165 = vmatprep.subr.bf16.mxu0 0
  %166 = vmatpush1.bf16.msra.mxu0 0
  %167 = vmatprep.subr.bf16.mxu0 0
  %168 = vmatpush1.bf16.msra.mxu0 0
  %169 = vmatprep.subr.bf16.mxu0 0
  %170 = vmatpush1.bf16.msra.mxu0 0
  %171 = vmatprep.subr.bf16.mxu0 0
  %172 = vmatpush1.bf16.msra.mxu0 0
  %173 = vmatprep.subr.bf16.mxu0 0
  %174 = vmatpush1.bf16.msra.mxu0 0
  %175 = vmatprep.subr.bf16.mxu0 0
  %176 = vmatpush1.bf16.msra.mxu0 0
  %177 = vmatprep.subr.bf16.mxu0 0
  %178 = vmatpush1.bf16.msra.mxu0 0
  %179 = vmatprep.subr.bf16.mxu0 0
  %180 = vmatpush1.bf16.msra.mxu0 0
  %181 = vmatprep.subr.bf16.mxu0 0
  %182 = vmatpush1.bf16.msra.mxu0 0
  %183 = vmatprep.subr.bf16.mxu0 0
  %184 = vmatpush1.bf16.msra.mxu0 0
  %185 = vmatprep.subr.bf16.mxu0 0
  %186 = vmatpush1.bf16.msra.mxu0 0
  %187 = vmatprep.subr.bf16.mxu0 0
  %188 = vmatpush1.bf16.msra.mxu0 0
  %189 = vmatprep.subr.bf16.mxu0 0
  %190 = vmatpush1.bf16.msra.mxu0 0
  %191 = vmatprep.mubr.bf16.mxu0 0
  %192 = vmatmul.mubr.bf16.gmra.mrb[0].mxu0 %v157
  %v193 = vpop.f32.mrb[0].mxu0
  %v194 = vadd.f32 %v139, %v193
  %v195 = vpop.f32.mrb[0].mxu0
  %v196 = vpop.f32.mrb[0].mxu0
  %v197 = vpop.f32.mrb[0].mxu0
  %198 = vdwg.mxu0
  %v199 = vld [vmem:[%s6] sm:$0x1]
  %v201 = vlaneseq
  %v202 = vshrl.u32 %v201, 7
  %v203 = vsub.s32 0, %v202
  %v204 = vrot.slane %v199, %v203
  %v206 = vadd.f32 %v194, %v204
  %v207 = vld [vmem:[%s9] sm:$0x1]
  %v209 = vlaneseq
  %v210 = vshrl.u32 %v209, 7
  %v211 = vsub.s32 0, %v210
  %v212 = vrot.slane %v207, %v211
  %v214 = vsub.f32 %v206, %v212
  %v215 = vld [vmem:[%s10] sm:$0x1]
  %v216 = vadd.f32 %v215, 1e-05
  %v217 = vrsqrt.pop %v216
  %v219 = vlaneseq
  %v220 = vshrl.u32 %v219, 7
  %v221 = vsub.s32 0, %v220
  %v222 = vrot.slane %v217, %v221
  %v224 = vmul.f32 %v214, %v222
  %v225 = vld [vmem:[%s7] sm:$0x1]
  %v227 = vlaneseq
  %v228 = vshrl.u32 %v227, 7
  %v229 = vsub.s32 0, %v228
  %v230 = vrot.slane %v225, %v229
  %v232 = vmul.f32 %v224, %v230
  %v233 = vld [vmem:[%s8] sm:$0x1]
  %v235 = vlaneseq
  %v236 = vshrl.u32 %v235, 7
  %v237 = vsub.s32 0, %v236
  %v238 = vrot.slane %v233, %v237
  %v240 = vadd.f32 %v232, %v238
  %v241 = vmax.f32 %v240, 0.0
  %v242 = vpack.c.bf16 %v241, %v241
  %v243 = vld [vmem:[%s11] sm:$0xf]
  %v244 = vld [vmem:[%s11 + $0x4] sm:$0xf]
  %v245 = vld [vmem:[%s11 + $0x8] sm:$0xf]
  %v246 = vld [vmem:[%s11 + $0xc] sm:$0xf]
  %v247 = vld [vmem:[%s12] sm:$0x1]
  %v249 = vlaneseq
  %v250 = vshrl.u32 %v249, 7
  %v251 = vsub.s32 0, %v250
  %v252 = vrot.slane %v247, %v251
  %v258 = vunpack.c.l.b16 %v243
  %v259 = vunpack.c.l.b16 %v244
  %v260 = vunpack.c.l.b16 %v245
  %v261 = vunpack.c.l.b16 %v246
  %v262 = vpack.c.b16 %v259, %v258
  %v263 = vpack.c.b16 %v261, %v260
  %v267 = vsel %vm100, %v242, 0
  %269 = vmatprep.subr.bf16.mxu0 0
  %270 = vmatpush1.bf16.msra.mxu0 %v262
  %271 = vmatprep.subr.bf16.mxu0 0
  %272 = vmatpush1.bf16.msra.mxu0 %v263
  %273 = vmatprep.subr.bf16.mxu0 0
  %274 = vmatpush1.bf16.msra.mxu0 0
  %275 = vmatprep.subr.bf16.mxu0 0
  %276 = vmatpush1.bf16.msra.mxu0 0
  %277 = vmatprep.subr.bf16.mxu0 0
  %278 = vmatpush1.bf16.msra.mxu0 0
  %279 = vmatprep.subr.bf16.mxu0 0
  %280 = vmatpush1.bf16.msra.mxu0 0
  %281 = vmatprep.subr.bf16.mxu0 0
  %282 = vmatpush1.bf16.msra.mxu0 0
  %283 = vmatprep.subr.bf16.mxu0 0
  %284 = vmatpush1.bf16.msra.mxu0 0
  %285 = vmatprep.subr.bf16.mxu0 0
  %286 = vmatpush1.bf16.msra.mxu0 0
  %287 = vmatprep.subr.bf16.mxu0 0
  %288 = vmatpush1.bf16.msra.mxu0 0
  %289 = vmatprep.subr.bf16.mxu0 0
  %290 = vmatpush1.bf16.msra.mxu0 0
  %291 = vmatprep.subr.bf16.mxu0 0
  %292 = vmatpush1.bf16.msra.mxu0 0
  %293 = vmatprep.subr.bf16.mxu0 0
  %294 = vmatpush1.bf16.msra.mxu0 0
  %295 = vmatprep.subr.bf16.mxu0 0
  %296 = vmatpush1.bf16.msra.mxu0 0
  %297 = vmatprep.subr.bf16.mxu0 0
  %298 = vmatpush1.bf16.msra.mxu0 0
  %299 = vmatprep.subr.bf16.mxu0 0
  %300 = vmatpush1.bf16.msra.mxu0 0
  %301 = vmatprep.mubr.bf16.mxu0 0
  %302 = vmatmul.mubr.bf16.gmra.mrb[0].mxu0 %v267
  %v303 = vpop.f32.mrb[0].mxu0
  %v304 = vadd.f32 %v252, %v303
  %v305 = vpop.f32.mrb[0].mxu0
  %v306 = vpop.f32.mrb[0].mxu0
  %v307 = vpop.f32.mrb[0].mxu0
  %308 = vdwg.mxu0
  %vm309 = vcmask 9216
  %310 = vst.msk [vmem:[%s13] sm:$0x3] %vm309, %v304
  // Predicated region
  $region54: #{tri_mt_v1_forward.19} parent=0 // pred_check
    _
  $region55: #{tri_mt_v1_forward.19} parent=0 // pred_check_branch
    %312 = sbr.rel (0) target = $region57
  $region56: #{tri_mt_v1_forward.19} parent=0 // pred_region
    _
  $region57: #{tri_mt_v1_forward.19} parent=0 // pred_fallthru
    _
  // Predicated region
  $region58: #{tri_mt_v1_forward.19} parent=0 // pred_check
    _
  $region59: #{tri_mt_v1_forward.19} parent=0 // pred_check_branch
    %314 = sbr.rel (0) target = $region61
  $region60: #{tri_mt_v1_forward.19} parent=0 // pred_region
    _
  $region61: #{tri_mt_v1_forward.19} parent=0 // pred_fallthru
    _

// kernel: tri_mt_v1_forward.17
$region0: #{tri_mt_v1_forward.17}
  #allocation0 [shape = 'u32[]', space=smem, size = 0x4, offset = 0x4, fixed_abs, tag = 'smem constant byte address 0x4 - core index']
  #allocation1 [shape = 'u32[144,128]{1,0:T(1,128)}', space=vmem, size = 0x12000, scoped, tag = 'internal scratch']
  %s0 = inlined_call_operand.vmem [shape: bf16[2,17,32], index: 0, kind: input, shape index: {}]
  %s1 = inlined_call_operand.vmem [shape: f32[2,1,17], index: 1, kind: input, shape index: {}]
  %s2 = inlined_call_operand.vmem [shape: bf16[32,96], index: 2, kind: input, shape index: {}]
  %s3 = inlined_call_operand.vmem [shape: f32[1,96], index: 3, kind: input, shape index: {}]
  %s4 = inlined_call_operand.vmem [shape: bf16[32,32], index: 4, kind: input, shape index: {}]
  %s5 = inlined_call_operand.vmem [shape: f32[1,32], index: 5, kind: input, shape index: {}]
  %s6 = inlined_call_operand.vmem [shape: f32[1,32], index: 6, kind: input, shape index: {}]
  %s7 = inlined_call_operand.vmem [shape: f32[1,32], index: 7, kind: input, shape index: {}]
  %s8 = inlined_call_operand.vmem [shape: bf16[32,128], index: 8, kind: input, shape index: {}]
  %s9 = inlined_call_operand.vmem [shape: f32[1,128], index: 9, kind: input, shape index: {}]
  %s10 = inlined_call_operand.vmem [shape: bf16[128,32], index: 10, kind: input, shape index: {}]
  %s11 = inlined_call_operand.vmem [shape: f32[1,32], index: 11, kind: input, shape index: {}]
  %s12 = inlined_call_operand.vmem [shape: f32[1,32], index: 12, kind: input, shape index: {}]
  %s13 = inlined_call_operand.vmem [shape: f32[1,32], index: 13, kind: input, shape index: {}]
  %s14 = inlined_call_operand.vmem [shape: bf16[2,17,32], index: 14, kind: output, shape index: {}]
  %s15 = sld [smem:[#allocation0]]
  $region89: #{tri_mt_v1_forward.17} parent=0
    _
  %s17 = ssub.s32 1, %s15
  %s18 = scalar_select 0, %s17, %s15
  loop: start=0, step=1, limit=4
  $region2: #{tri_mt_v1_forward.17} parent=0 // loop_pre_header
    _
  $region3: #{tri_mt_v1_forward.17} parent=0 // loop_header
    %s20 = sphi 0, %s24
    %p21 = scmp.ge.s32.totalorder %s20, 4
    %s30 = sphi 0, %s32
    %s33 = sphi 0, %s30
    %s34 = sphi 0, %s33
    %s50 = sphi 0, %s34
    %s56 = sphi 0, %s58
    %s59 = sphi 0, %s56
    %s60 = sphi 0, %s59
    %s76 = sphi 0, %s60
    %s80 = sphi 0, %s80
    %s82 = sphi 0, %s80
    %s83 = sphi 0, %s82
    %s97 = sphi 0, %s83
    %s101 = sphi 0, %s101
    %s103 = sphi 0, %s101
    %s104 = sphi 0, %s103
    %s118 = sphi 0, %s104
    %s122 = sphi 0, %s122
    %s124 = sphi 0, %s122
    %s125 = sphi 0, %s124
    %s139 = sphi 0, %s125
    %s143 = sphi 0, %s143
    %s145 = sphi 0, %s143
    %s146 = sphi 0, %s145
    %s160 = sphi 0, %s146
    %s164 = sphi 0, %s164
    %s166 = sphi 0, %s164
    %s167 = sphi 0, %s166
    %s181 = sphi 0, %s167
    %s185 = sphi 0, %s185
    %s187 = sphi 0, %s185
    %s188 = sphi 0, %s187
    %s202 = sphi 0, %s188
    %s206 = sphi 0, %s206
    %s208 = sphi 0, %s206
    %s209 = sphi 0, %s208
    %s223 = sphi 0, %s209
    %s227 = sphi 0, %s227
    %s229 = sphi 0, %s227
    %s230 = sphi 0, %s229
    %s244 = sphi 0, %s230
    %s248 = sphi 0, %s248
    %s250 = sphi 0, %s248
    %s251 = sphi 0, %s250
    %s265 = sphi 0, %s251
    %s269 = sphi 0, %s269
    %s271 = sphi 0, %s269
    %s272 = sphi 0, %s271
    %s286 = sphi 0, %s272
    %s290 = sphi 0, %s290
    %s292 = sphi 0, %s290
    %s293 = sphi 0, %s292
    %s307 = sphi 0, %s293
    %s311 = sphi 0, %s311
    %s313 = sphi 0, %s311
    %s314 = sphi 0, %s313
    %s328 = sphi 0, %s314
    %s334 = sphi 0, %s336
    %s337 = sphi 0, %s334
    %s338 = sphi 0, %s337
    %s354 = sphi 0, %s338
  $region4: #{tri_mt_v1_forward.17} parent=0 // loop_header_branch
    %23 = sbr.rel (%p21) target = $region8
  $region5: #{tri_mt_v1_forward.17} parent=0 // loop_body
    %s25 = ssub.s32 %s20, 1
    %s26 = ssub.s32 %s20, 2
    %s27 = sadd.s32 %s20, 1
    %s28 = ssub.s32 %s20, %s27
    %p29 = scmp.eq.s32.totalorder %s28, 0
    %s31 = sadd.s32 %s30, 1
    %s32 = scalar_select %p29, %s30, %s31
    %p35 = pneg %p29
    %p36 = scmp.eq.s32.totalorder %s20, 1
    %p37 = por %p35, %p36
    %p38 = scmp.ne.s32.totalorder %s30, %s33
    %p39 = scmp.eq.s32.totalorder %s20, 0
    %p40 = por %p38, %p39
    %p41 = scmp.ne.s32.totalorder %s30, %s33
    %p42 = scmp.eq.s32.totalorder %s25, 1
    %p43 = por %p41, %p42
    %p44 = scmp.ne.s32.totalorder %s33, %s34
    %p45 = scmp.eq.s32.totalorder %s25, 0
    %p46 = por %p44, %p45
    %p47 = scmp.ne.s32.totalorder %s33, %s34
    %p48 = scmp.eq.s32.totalorder %s26, 1
    %p49 = por %p47, %p48
    %p51 = scmp.ne.s32.totalorder %s34, %s50
    %p52 = scmp.eq.s32.totalorder %s26, 0
    %p53 = por %p51, %p52
    %s54 = ssub.s32 %s20, %s27
    %p55 = scmp.eq.s32.totalorder %s54, 0
    %s57 = sadd.s32 %s56, 1
    %s58 = scalar_select %p55, %s56, %s57
    %p61 = pneg %p55
    %p62 = scmp.eq.s32.totalorder %s20, 1
    %p63 = por %p61, %p62
    %p64 = scmp.ne.s32.totalorder %s56, %s59
    %p65 = scmp.eq.s32.totalorder %s20, 0
    %p66 = por %p64, %p65
    %p67 = scmp.ne.s32.totalorder %s56, %s59
    %p68 = scmp.eq.s32.totalorder %s25, 1
    %p69 = por %p67, %p68
    %p70 = scmp.ne.s32.totalorder %s59, %s60
    %p71 = scmp.eq.s32.totalorder %s25, 0
    %p72 = por %p70, %p71
    %p73 = scmp.ne.s32.totalorder %s59, %s60
    %p74 = scmp.eq.s32.totalorder %s26, 1
    %p75 = por %p73, %p74
    %p77 = scmp.ne.s32.totalorder %s60, %s76
    %p78 = scmp.eq.s32.totalorder %s26, 0
    %p79 = por %p77, %p78
    %s81 = sadd.s32 %s80, 1
    %p84 = scmp.eq.s32.totalorder %s20, 1
    %p85 = scmp.ne.s32.totalorder %s80, %s82
    %p86 = scmp.eq.s32.totalorder %s20, 0
    %p87 = por %p85, %p86
    %p88 = scmp.ne.s32.totalorder %s80, %s82
    %p89 = scmp.eq.s32.totalorder %s25, 1
    %p90 = por %p88, %p89
    %p91 = scmp.ne.s32.totalorder %s82, %s83
    %p92 = scmp.eq.s32.totalorder %s25, 0
    %p93 = por %p91, %p92
    %p94 = scmp.ne.s32.totalorder %s82, %s83
    %p95 = scmp.eq.s32.totalorder %s26, 1
    %p96 = por %p94, %p95
    %p98 = scmp.ne.s32.totalorder %s83, %s97
    %p99 = scmp.eq.s32.totalorder %s26, 0
    %p100 = por %p98, %p99
    %s102 = sadd.s32 %s101, 1
    %p105 = scmp.eq.s32.totalorder %s20, 1
    %p106 = scmp.ne.s32.totalorder %s101, %s103
    %p107 = scmp.eq.s32.totalorder %s20, 0
    %p108 = por %p106, %p107
    %p109 = scmp.ne.s32.totalorder %s101, %s103
    %p110 = scmp.eq.s32.totalorder %s25, 1
    %p111 = por %p109, %p110
    %p112 = scmp.ne.s32.totalorder %s103, %s104
    %p113 = scmp.eq.s32.totalorder %s25, 0
    %p114 = por %p112, %p113
    %p115 = scmp.ne.s32.totalorder %s103, %s104
    %p116 = scmp.eq.s32.totalorder %s26, 1
    %p117 = por %p115, %p116
    %p119 = scmp.ne.s32.totalorder %s104, %s118
    %p120 = scmp.eq.s32.totalorder %s26, 0
    %p121 = por %p119, %p120
    %s123 = sadd.s32 %s122, 1
    %p126 = scmp.eq.s32.totalorder %s20, 1
    %p127 = scmp.ne.s32.totalorder %s122, %s124
    %p128 = scmp.eq.s32.totalorder %s20, 0
    %p129 = por %p127, %p128
    %p130 = scmp.ne.s32.totalorder %s122, %s124
    %p131 = scmp.eq.s32.totalorder %s25, 1
    %p132 = por %p130, %p131
    %p133 = scmp.ne.s32.totalorder %s124, %s125
    %p134 = scmp.eq.s32.totalorder %s25, 0
    %p135 = por %p133, %p134
    %p136 = scmp.ne.s32.totalorder %s124, %s125
    %p137 = scmp.eq.s32.totalorder %s26, 1
    %p138 = por %p136, %p137
    %p140 = scmp.ne.s32.totalorder %s125, %s139
    %p141 = scmp.eq.s32.totalorder %s26, 0
    %p142 = por %p140, %p141
    %s144 = sadd.s32 %s143, 1
    %p147 = scmp.eq.s32.totalorder %s20, 1
    %p148 = scmp.ne.s32.totalorder %s143, %s145
    %p149 = scmp.eq.s32.totalorder %s20, 0
    %p150 = por %p148, %p149
    %p151 = scmp.ne.s32.totalorder %s143, %s145
    %p152 = scmp.eq.s32.totalorder %s25, 1
    %p153 = por %p151, %p152
    %p154 = scmp.ne.s32.totalorder %s145, %s146
    %p155 = scmp.eq.s32.totalorder %s25, 0
    %p156 = por %p154, %p155
    %p157 = scmp.ne.s32.totalorder %s145, %s146
    %p158 = scmp.eq.s32.totalorder %s26, 1
    %p159 = por %p157, %p158
    %p161 = scmp.ne.s32.totalorder %s146, %s160
    %p162 = scmp.eq.s32.totalorder %s26, 0
    %p163 = por %p161, %p162
    %s165 = sadd.s32 %s164, 1
    %p168 = scmp.eq.s32.totalorder %s20, 1
    %p169 = scmp.ne.s32.totalorder %s164, %s166
    %p170 = scmp.eq.s32.totalorder %s20, 0
    %p171 = por %p169, %p170
    %p172 = scmp.ne.s32.totalorder %s164, %s166
    %p173 = scmp.eq.s32.totalorder %s25, 1
    %p174 = por %p172, %p173
    %p175 = scmp.ne.s32.totalorder %s166, %s167
    %p176 = scmp.eq.s32.totalorder %s25, 0
    %p177 = por %p175, %p176
    %p178 = scmp.ne.s32.totalorder %s166, %s167
    %p179 = scmp.eq.s32.totalorder %s26, 1
    %p180 = por %p178, %p179
    %p182 = scmp.ne.s32.totalorder %s167, %s181
    %p183 = scmp.eq.s32.totalorder %s26, 0
    %p184 = por %p182, %p183
    %s186 = sadd.s32 %s185, 1
    %p189 = scmp.eq.s32.totalorder %s20, 1
    %p190 = scmp.ne.s32.totalorder %s185, %s187
    %p191 = scmp.eq.s32.totalorder %s20, 0
    %p192 = por %p190, %p191
    %p193 = scmp.ne.s32.totalorder %s185, %s187
    %p194 = scmp.eq.s32.totalorder %s25, 1
    %p195 = por %p193, %p194
    %p196 = scmp.ne.s32.totalorder %s187, %s188
    %p197 = scmp.eq.s32.totalorder %s25, 0
    %p198 = por %p196, %p197
    %p199 = scmp.ne.s32.totalorder %s187, %s188
    %p200 = scmp.eq.s32.totalorder %s26, 1
    %p201 = por %p199, %p200
    %p203 = scmp.ne.s32.totalorder %s188, %s202
    %p204 = scmp.eq.s32.totalorder %s26, 0
    %p205 = por %p203, %p204
    %s207 = sadd.s32 %s206, 1
    %p210 = scmp.eq.s32.totalorder %s20, 1
    %p211 = scmp.ne.s32.totalorder %s206, %s208
    %p212 = scmp.eq.s32.totalorder %s20, 0
    %p213 = por %p211, %p212
    %p214 = scmp.ne.s32.totalorder %s206, %s208
    %p215 = scmp.eq.s32.totalorder %s25, 1
    %p216 = por %p214, %p215
    %p217 = scmp.ne.s32.totalorder %s208, %s209
    %p218 = scmp.eq.s32.totalorder %s25, 0
    %p219 = por %p217, %p218
    %p220 = scmp.ne.s32.totalorder %s208, %s209
    %p221 = scmp.eq.s32.totalorder %s26, 1
    %p222 = por %p220, %p221
    %p224 = scmp.ne.s32.totalorder %s209, %s223
    %p225 = scmp.eq.s32.totalorder %s26, 0
    %p226 = por %p224, %p225
    %s228 = sadd.s32 %s227, 1
    %p231 = scmp.eq.s32.totalorder %s20, 1
    %p232 = scmp.ne.s32.totalorder %s227, %s229
    %p233 = scmp.eq.s32.totalorder %s20, 0
    %p234 = por %p232, %p233
    %p235 = scmp.ne.s32.totalorder %s227, %s229
    %p236 = scmp.eq.s32.totalorder %s25, 1
    %p237 = por %p235, %p236
    %p238 = scmp.ne.s32.totalorder %s229, %s230
    %p239 = scmp.eq.s32.totalorder %s25, 0
    %p240 = por %p238, %p239
    %p241 = scmp.ne.s32.totalorder %s229, %s230
    %p242 = scmp.eq.s32.totalorder %s26, 1
    %p243 = por %p241, %p242
    %p245 = scmp.ne.s32.totalorder %s230, %s244
    %p246 = scmp.eq.s32.totalorder %s26, 0
    %p247 = por %p245, %p246
    %s249 = sadd.s32 %s248, 1
    %p252 = scmp.eq.s32.totalorder %s20, 1
    %p253 = scmp.ne.s32.totalorder %s248, %s250
    %p254 = scmp.eq.s32.totalorder %s20, 0
    %p255 = por %p253, %p254
    %p256 = scmp.ne.s32.totalorder %s248, %s250
    %p257 = scmp.eq.s32.totalorder %s25, 1
    %p258 = por %p256, %p257
    %p259 = scmp.ne.s32.totalorder %s250, %s251
    %p260 = scmp.eq.s32.totalorder %s25, 0
    %p261 = por %p259, %p260
    %p262 = scmp.ne.s32.totalorder %s250, %s251
    %p263 = scmp.eq.s32.totalorder %s26, 1
    %p264 = por %p262, %p263
    %p266 = scmp.ne.s32.totalorder %s251, %s265
    %p267 = scmp.eq.s32.totalorder %s26, 0
    %p268 = por %p266, %p267
    %s270 = sadd.s32 %s269, 1
    %p273 = scmp.eq.s32.totalorder %s20, 1
    %p274 = scmp.ne.s32.totalorder %s269, %s271
    %p275 = scmp.eq.s32.totalorder %s20, 0
    %p276 = por %p274, %p275
    %p277 = scmp.ne.s32.totalorder %s269, %s271
    %p278 = scmp.eq.s32.totalorder %s25, 1
    %p279 = por %p277, %p278
    %p280 = scmp.ne.s32.totalorder %s271, %s272
    %p281 = scmp.eq.s32.totalorder %s25, 0
    %p282 = por %p280, %p281
    %p283 = scmp.ne.s32.totalorder %s271, %s272
    %p284 = scmp.eq.s32.totalorder %s26, 1
    %p285 = por %p283, %p284
    %p287 = scmp.ne.s32.totalorder %s272, %s286
    %p288 = scmp.eq.s32.totalorder %s26, 0
    %p289 = por %p287, %p288
    %s291 = sadd.s32 %s290, 1
    %p294 = scmp.eq.s32.totalorder %s20, 1
    %p295 = scmp.ne.s32.totalorder %s290, %s292
    %p296 = scmp.eq.s32.totalorder %s20, 0
    %p297 = por %p295, %p296
    %p298 = scmp.ne.s32.totalorder %s290, %s292
    %p299 = scmp.eq.s32.totalorder %s25, 1
    %p300 = por %p298, %p299
    %p301 = scmp.ne.s32.totalorder %s292, %s293
    %p302 = scmp.eq.s32.totalorder %s25, 0
    %p303 = por %p301, %p302
    %p304 = scmp.ne.s32.totalorder %s292, %s293
    %p305 = scmp.eq.s32.totalorder %s26, 1
    %p306 = por %p304, %p305
    %p308 = scmp.ne.s32.totalorder %s293, %s307
    %p309 = scmp.eq.s32.totalorder %s26, 0
    %p310 = por %p308, %p309
    %s312 = sadd.s32 %s311, 1
    %p315 = scmp.eq.s32.totalorder %s20, 1
    %p316 = scmp.ne.s32.totalorder %s311, %s313
    %p317 = scmp.eq.s32.totalorder %s20, 0
    %p318 = por %p316, %p317
    %p319 = scmp.ne.s32.totalorder %s311, %s313
    %p320 = scmp.eq.s32.totalorder %s25, 1
    %p321 = por %p319, %p320
    %p322 = scmp.ne.s32.totalorder %s313, %s314
    %p323 = scmp.eq.s32.totalorder %s25, 0
    %p324 = por %p322, %p323
    %p325 = scmp.ne.s32.totalorder %s313, %s314
    %p326 = scmp.eq.s32.totalorder %s26, 1
    %p327 = por %p325, %p326
    %p329 = scmp.ne.s32.totalorder %s314, %s328
    %p330 = scmp.eq.s32.totalorder %s26, 0
    %p331 = por %p329, %p330
    %s332 = ssub.s32 %s20, %s27
    %p333 = scmp.eq.s32.totalorder %s332, 0
    %s335 = sadd.s32 %s334, 1
    %s336 = scalar_select %p333, %s334, %s335
    %p339 = pneg %p333
    %p340 = scmp.eq.s32.totalorder %s20, 1
    %p341 = por %p339, %p340
    %p342 = scmp.ne.s32.totalorder %s334, %s337
    %p343 = scmp.eq.s32.totalorder %s20, 0
    %p344 = por %p342, %p343
    %p345 = scmp.ne.s32.totalorder %s334, %s337
    %p346 = scmp.eq.s32.totalorder %s25, 1
    %p347 = por %p345, %p346
    %p348 = scmp.ne.s32.totalorder %s337, %s338
    %p349 = scmp.eq.s32.totalorder %s25, 0
    %p350 = por %p348, %p349
    %p351 = scmp.ne.s32.totalorder %s337, %s338
    %p352 = scmp.eq.s32.totalorder %s26, 1
    %p353 = por %p351, %p352
    %p355 = scmp.ne.s32.totalorder %s338, %s354
    %p356 = scmp.eq.s32.totalorder %s26, 0
    %p357 = por %p355, %p356
    %p358 = scmp.le.s32.totalorder 1, %s20
    %p359 = scmp.lt.s32.totalorder %s20, 3
    %p360 = pnand %p358, %p359
    %p361 = pneg %p360
    // Predicated region
    $region9: #{tri_mt_v1_forward.17} parent=5 // pred_check
      _
    $region10: #{tri_mt_v1_forward.17} parent=5 // pred_check_branch
      %363 = sbr.rel (%p360) target = $region12
    $region11: #{tri_mt_v1_forward.17} parent=5 // pred_region
      %s364 = ssub.s32 %s20, 1
      // Predicated region
      $region13: #{tri_mt_v1_forward.17} parent=11 // pred_check
        %p365 = pneg %p93
      $region14: #{tri_mt_v1_forward.17} parent=11 // pred_check_branch
        %367 = sbr.rel (%p365) target = $region16
      $region15: #{tri_mt_v1_forward.17} parent=11 // pred_region
        _
      $region16: #{tri_mt_v1_forward.17} parent=11 // pred_fallthru
        _
      // Predicated region
      $region17: #{tri_mt_v1_forward.17} parent=11 // pred_check
        %p368 = pneg %p114
      $region18: #{tri_mt_v1_forward.17} parent=11 // pred_check_branch
        %370 = sbr.rel (%p368) target = $region20
      $region19: #{tri_mt_v1_forward.17} parent=11 // pred_region
        _
      $region20: #{tri_mt_v1_forward.17} parent=11 // pred_fallthru
        _
      // Predicated region
      $region21: #{tri_mt_v1_forward.17} parent=11 // pred_check
        %p371 = pneg %p135
      $region22: #{tri_mt_v1_forward.17} parent=11 // pred_check_branch
        %373 = sbr.rel (%p371) target = $region24
      $region23: #{tri_mt_v1_forward.17} parent=11 // pred_region
        _
      $region24: #{tri_mt_v1_forward.17} parent=11 // pred_fallthru
        _
      // Predicated region
      $region25: #{tri_mt_v1_forward.17} parent=11 // pred_check
        %p374 = pneg %p156
      $region26: #{tri_mt_v1_forward.17} parent=11 // pred_check_branch
        %376 = sbr.rel (%p374) target = $region28
      $region27: #{tri_mt_v1_forward.17} parent=11 // pred_region
        _
      $region28: #{tri_mt_v1_forward.17} parent=11 // pred_fallthru
        _
      // Predicated region
      $region29: #{tri_mt_v1_forward.17} parent=11 // pred_check
        %p377 = pneg %p177
      $region30: #{tri_mt_v1_forward.17} parent=11 // pred_check_branch
        %379 = sbr.rel (%p377) target = $region32
      $region31: #{tri_mt_v1_forward.17} parent=11 // pred_region
        _
      $region32: #{tri_mt_v1_forward.17} parent=11 // pred_fallthru
        _
      // Predicated region
      $region33: #{tri_mt_v1_forward.17} parent=11 // pred_check
        %p380 = pneg %p198
      $region34: #{tri_mt_v1_forward.17} parent=11 // pred_check_branch
        %382 = sbr.rel (%p380) target = $region36
      $region35: #{tri_mt_v1_forward.17} parent=11 // pred_region
        _
      $region36: #{tri_mt_v1_forward.17} parent=11 // pred_fallthru
        _
      // Predicated region
      $region37: #{tri_mt_v1_forward.17} parent=11 // pred_check
        %p383 = pneg %p219
      $region38: #{tri_mt_v1_forward.17} parent=11 // pred_check_branch
        %385 = sbr.rel (%p383) target = $region40
      $region39: #{tri_mt_v1_forward.17} parent=11 // pred_region
        _
      $region40: #{tri_mt_v1_forward.17} parent=11 // pred_fallthru
        _
      // Predicated region
      $region41: #{tri_mt_v1_forward.17} parent=11 // pred_check
        %p386 = pneg %p240
      $region42: #{tri_mt_v1_forward.17} parent=11 // pred_check_branch
        %388 = sbr.rel (%p386) target = $region44
      $region43: #{tri_mt_v1_forward.17} parent=11 // pred_region
        _
      $region44: #{tri_mt_v1_forward.17} parent=11 // pred_fallthru
        _
      // Predicated region
      $region45: #{tri_mt_v1_forward.17} parent=11 // pred_check
        %p389 = pneg %p261
      $region46: #{tri_mt_v1_forward.17} parent=11 // pred_check_branch
        %391 = sbr.rel (%p389) target = $region48
      $region47: #{tri_mt_v1_forward.17} parent=11 // pred_region
        _
      $region48: #{tri_mt_v1_forward.17} parent=11 // pred_fallthru
        _
      // Predicated region
      $region49: #{tri_mt_v1_forward.17} parent=11 // pred_check
        %p392 = pneg %p282
      $region50: #{tri_mt_v1_forward.17} parent=11 // pred_check_branch
        %394 = sbr.rel (%p392) target = $region52
      $region51: #{tri_mt_v1_forward.17} parent=11 // pred_region
        _
      $region52: #{tri_mt_v1_forward.17} parent=11 // pred_fallthru
        _
      // Predicated region
      $region53: #{tri_mt_v1_forward.17} parent=11 // pred_check
        %p395 = pneg %p303
      $region54: #{tri_mt_v1_forward.17} parent=11 // pred_check_branch
        %397 = sbr.rel (%p395) target = $region56
      $region55: #{tri_mt_v1_forward.17} parent=11 // pred_region
        _
      $region56: #{tri_mt_v1_forward.17} parent=11 // pred_fallthru
        _
      // Predicated region
      $region57: #{tri_mt_v1_forward.17} parent=11 // pred_check
        %p398 = pneg %p324
      $region58: #{tri_mt_v1_forward.17} parent=11 // pred_check_branch
        %400 = sbr.rel (%p398) target = $region60
      $region59: #{tri_mt_v1_forward.17} parent=11 // pred_region
        _
      $region60: #{tri_mt_v1_forward.17} parent=11 // pred_fallthru
        _
    $region12: #{tri_mt_v1_forward.17} parent=5 // pred_fallthru
      _
    %p401 = scmp.lt.s32.totalorder %s20, 2
    // Predicated region
    $region61: #{tri_mt_v1_forward.17} parent=5 // pred_check
      %p402 = pneg %p401
    $region62: #{tri_mt_v1_forward.17} parent=5 // pred_check_branch
      %404 = sbr.rel (%p402) target = $region64
    $region63: #{tri_mt_v1_forward.17} parent=5 // pred_region
      // Predicated region
      $region65: #{tri_mt_v1_forward.17} parent=63 // pred_check
        %p405 = pneg %p40
      $region66: #{tri_mt_v1_forward.17} parent=63 // pred_check_branch
        %407 = sbr.rel (%p405) target = $region68
      $region67: #{tri_mt_v1_forward.17} parent=63 // pred_region
        %p408 = scmp.lt.s32.totalorder %s20, 1
        %s409 = scalar_select %p408, %s20, 1
        %s410 = smul.addr %s409, 3
        %s411 = smul.addr %s410, 4
        %s412 = scalar_lea.vmem %s0, %s411
      $region68: #{tri_mt_v1_forward.17} parent=63 // pred_fallthru
        _
      // Predicated region
      $region69: #{tri_mt_v1_forward.17} parent=63 // pred_check
        %p413 = pneg %p66
      $region70: #{tri_mt_v1_forward.17} parent=63 // pred_check_branch
        %415 = sbr.rel (%p413) target = $region72
      $region71: #{tri_mt_v1_forward.17} parent=63 // pred_region
        %p416 = scmp.lt.s32.totalorder %s20, 1
        %s417 = scalar_select %p416, %s20, 1
        %s418 = scalar_lea.vmem %s1, %s417
      $region72: #{tri_mt_v1_forward.17} parent=63 // pred_fallthru
        _
    $region64: #{tri_mt_v1_forward.17} parent=5 // pred_fallthru
      _
    %p419 = scmp.le.s32.totalorder 1, %s20
    %p420 = scmp.lt.s32.totalorder %s20, 3
    %p421 = pnand %p419, %p420
    %p422 = pneg %p421
    // Predicated region
    $region73: #{tri_mt_v1_forward.17} parent=5 // pred_check
      _
    $region74: #{tri_mt_v1_forward.17} parent=5 // pred_check_branch
      %424 = sbr.rel (%p421) target = $region76
    $region75: #{tri_mt_v1_forward.17} parent=5 // pred_region
      %s425 = ssub.s32 %s20, 1
      %p426 = scmp.lt.s32.totalorder %s25, 1
      %s427 = scalar_select %p426, %s25, 1
      %s428 = smul.addr %s427, 3
      %s429 = smul.addr %s428, 4
      %s430 = scalar_lea.vmem %s0, %s429
      %p431 = pneg %p46
      %p432 = pneg %p43
      %p433 = scmp.lt.s32.totalorder %s25, 1
      %s434 = scalar_select %p433, %s25, 1
      %s435 = scalar_lea.vmem %s1, %s434
      %p436 = pneg %p72
      %p437 = pneg %p69
      %p438 = pneg %p93
      %p439 = pneg %p90
      %p440 = pneg %p114
      %p441 = pneg %p111
      %p442 = pneg %p135
      %p443 = pneg %p132
      %p444 = pneg %p156
      %p445 = pneg %p153
      %p446 = pneg %p177
      %p447 = pneg %p174
      %p448 = pneg %p198
      %p449 = pneg %p195
      %p450 = pneg %p219
      %p451 = pneg %p216
      %p452 = pneg %p240
      %p453 = pneg %p237
      %p454 = pneg %p261
      %p455 = pneg %p258
      %p456 = pneg %p282
      %p457 = pneg %p279
      %p458 = pneg %p303
      %p459 = pneg %p300
      %p460 = pneg %p324
      %p461 = pneg %p321
      %p462 = pneg %p350
      %p463 = pneg %p347
      %p464 = scmp.lt.s32.totalorder %s25, 1
      %s465 = scalar_select %p464, %s25, 1
      %s466 = smul.addr %s465, 3
      %s467 = smul.addr %s466, 4
      %s468 = scalar_lea.vmem %s14, %s467
      %p469 = scmp.lt.s32.totalorder %s25, 1
      %s470 = scalar_select %p469, %s25, 1
      %s471 = smul.addr %s470, 3
      %s472 = smul.addr %s471, 4
      %s473 = scalar_lea.vmem %s0, %s472
      %p474 = scmp.lt.s32.totalorder %s25, 1
      %s475 = scalar_select %p474, %s25, 1
      %s476 = scalar_lea.vmem %s1, %s475
      %p477 = scmp.lt.s32.totalorder %s25, 1
      %s478 = scalar_select %p477, %s25, 1
      %s479 = smul.addr %s478, 3
      %s480 = smul.addr %s479, 4
      %s481 = scalar_lea.vmem %s14, %s480
      %v483 = vld [vmem:[%s473] sm:$0xf]
      %v484 = vld [vmem:[%s473 + $0x4] sm:$0xf]
      %v485 = vld [vmem:[%s473 + $0x8] sm:$0x1]
      %v486 = vld [vmem:[%s476] sm:$0x1]
      %v487 = vld [vmem:[%s2] sm:$0xf]
      %v488 = vld [vmem:[%s2 + $0x4] sm:$0xf]
      %v489 = vld [vmem:[%s2 + $0x8] sm:$0xf]
      %v490 = vld [vmem:[%s2 + $0xc] sm:$0xf]
      %v491 = vld [vmem:[%s3] sm:$0x1]
      %v493 = vlaneseq
      %v494 = vshrl.u32 %v493, 7
      %v495 = vsub.s32 0, %v494
      %v496 = vrot.slane %v491, %v495
      %v501 = vunpack.c.l.b16 %v483
      %v502 = vunpack.c.l.b16 %v484
      %v503 = vunpack.c.l.b16 %v485
      %v504 = vpack.c.b16 %v502, %v501
      %v505 = vpack.c.b16 %v503, %v503
      %v510 = vunpack.c.l.b16 %v487
      %v511 = vunpack.c.l.b16 %v488
      %v512 = vunpack.c.l.b16 %v489
      %v513 = vunpack.c.l.b16 %v490
      %v514 = vpack.c.b16 %v511, %v510
      %v515 = vpack.c.b16 %v513, %v512
      %vm518 = vcmask 261120
      %v520 = vsel %vm518, %v504, 0
      %v523 = vsel %vm518, %v505, 0
      %525 = vmatprep.subr.bf16.mxu0 0
      %526 = vmatpush1.bf16.msra.mxu0 %v514
      %527 = vmatprep.subr.bf16.mxu0 0
      %528 = vmatpush1.bf16.msra.mxu0 %v515
      %529 = vmatprep.subr.bf16.mxu0 0
      %530 = vmatpush1.bf16.msra.mxu0 0
      %531 = vmatprep.subr.bf16.mxu0 0
      %532 = vmatpush1.bf16.msra.mxu0 0
      %533 = vmatprep.subr.bf16.mxu0 0
      %534 = vmatpush1.bf16.msra.mxu0 0
      %535 = vmatprep.subr.bf16.mxu0 0
      %536 = vmatpush1.bf16.msra.mxu0 0
      %537 = vmatprep.subr.bf16.mxu0 0
      %538 = vmatpush1.bf16.msra.mxu0 0
      %539 = vmatprep.subr.bf16.mxu0 0
      %540 = vmatpush1.bf16.msra.mxu0 0
      %541 = vmatprep.subr.bf16.mxu0 0
      %542 = vmatpush1.bf16.msra.mxu0 0
      %543 = vmatprep.subr.bf16.mxu0 0
      %544 = vmatpush1.bf16.msra.mxu0 0
      %545 = vmatprep.subr.bf16.mxu0 0
      %546 = vmatpush1.bf16.msra.mxu0 0
      %547 = vmatprep.subr.bf16.mxu0 0
      %548 = vmatpush1.bf16.msra.mxu0 0
      %549 = vmatprep.subr.bf16.mxu0 0
      %550 = vmatpush1.bf16.msra.mxu0 0
      %551 = vmatprep.subr.bf16.mxu0 0
      %552 = vmatpush1.bf16.msra.mxu0 0
      %553 = vmatprep.subr.bf16.mxu0 0
      %554 = vmatpush1.bf16.msra.mxu0 0
      %555 = vmatprep.subr.bf16.mxu0 0
      %556 = vmatpush1.bf16.msra.mxu0 0
      %557 = vmatprep.mubr.bf16.mxu0 0
      %558 = vmatmul.mubr.bf16.gmra.mrb[0].mxu0 %v520
      %v559 = vpop.f32.mrb[0].mxu0
      %v560 = vadd.f32 %v496, %v559
      %v561 = vpop.f32.mrb[0].mxu0
      %v562 = vpop.f32.mrb[0].mxu0
      %v563 = vadd.f32 %v496, %v562
      %v564 = vpop.f32.mrb[0].mxu0
      %565 = vmatprep.mubr.bf16.mxu0 0
      %566 = vmatmul.mubr.bf16.gmra.mrb[0].mxu0 %v523
      %v567 = vpop.f32.mrb[0].mxu0
      %v568 = vadd.f32 %v496, %v567
      %v569 = vpop.f32.mrb[0].mxu0
      %v570 = vpop.f32.mrb[0].mxu0
      %v571 = vpop.f32.mrb[0].mxu0
      %572 = vdwg.mxu0
      %v573 = vpack.c.bf16 %v563, %v560
      %v574 = vpack.c.bf16 %v568, %v568
      %v576 = vlaneseq
      %v577 = vshrl.u32 %v576, 7
      %v578 = vsub.s32 0, %v577
      %v579 = vrot.slane %v486, %v578
      %583 = vrot.lane.b32.xlu0 %v573, 96
      %v584 = vpop.permute.xlu0 %583
      %585 = vrot.lane.b32.xlu0 %v574, 96
      %v586 = vpop.permute.xlu0 %585
      %vm587 = vcmask 64512
      %v589 = vsel %vm587, %v573, 0
      %v592 = vsel %vm587, %v574, 0
      %v595 = vsel %vm587, %v584, 0
      %v598 = vsel %vm587, %v586, 0
      %600 = vmatprep.subr.bf16.mxu0 0
      %601 = vmatpush1.bf16.xpose.msra.mxu0 %v595
      %602 = vmatprep.subr.bf16.mxu0 0
      %603 = vmatpush1.bf16.xpose.msra.mxu0 %v598
      %604 = vmatprep.subr.bf16.mxu0 0
      %605 = vmatpush1.bf16.xpose.msra.mxu0 0
      %606 = vmatprep.subr.bf16.mxu0 0
      %607 = vmatpush1.bf16.xpose.msra.mxu0 0
      %608 = vmatprep.subr.bf16.mxu0 0
      %609 = vmatpush1.bf16.xpose.msra.mxu0 0
      %610 = vmatprep.subr.bf16.mxu0 0
      %611 = vmatpush1.bf16.xpose.msra.mxu0 0
      %612 = vmatprep.subr.bf16.mxu0 0
      %613 = vmatpush1.bf16.xpose.msra.mxu0 0
      %614 = vmatprep.subr.bf16.mxu0 0
      %615 = vmatpush1.bf16.xpose.msra.mxu0 0
      %616 = vmatprep.subr.bf16.mxu0 0
      %617 = vmatpush1.bf16.xpose.msra.mxu0 0
      %618 = vmatprep.subr.bf16.mxu0 0
      %619 = vmatpush1.bf16.xpose.msra.mxu0 0
      %620 = vmatprep.subr.bf16.mxu0 0
      %621 = vmatpush1.bf16.xpose.msra.mxu0 0
      %622 = vmatprep.subr.bf16.mxu0 0
      %623 = vmatpush1.bf16.xpose.msra.mxu0 0
      %624 = vmatprep.subr.bf16.mxu0 0
      %625 = vmatpush1.bf16.xpose.msra.mxu0 0
      %626 = vmatprep.subr.bf16.mxu0 0
      %627 = vmatpush1.bf16.xpose.msra.mxu0 0
      %628 = vmatprep.subr.bf16.mxu0 0
      %629 = vmatpush1.bf16.xpose.msra.mxu0 0
      %630 = vmatprep.subr.bf16.mxu0 0
      %631 = vmatpush1.bf16.xpose.msra.mxu0 0
      %632 = vmatprep.mubr.bf16.mxu0 0
      %633 = vmatmul.mubr.bf16.gmra.mrb[0].mxu0 %v589
      %v634 = vpop.f32.mrb[0].mxu0
      %v635 = vadd.f32 %v579, %v634
      %v636 = vpop.f32.mrb[0].mxu0
      %v637 = vpop.f32.mrb[0].mxu0
      %v638 = vadd.f32 %v579, %v637
      %v639 = vpop.f32.mrb[0].mxu0
      %640 = vmatprep.mubr.bf16.mxu0 0
      %641 = vmatmul.mubr.bf16.gmra.mrb[0].mxu0 %v592
      %v642 = vpop.f32.mrb[0].mxu0
      %v643 = vadd.f32 %v579, %v642
      %v644 = vpop.f32.mrb[0].mxu0
      %v645 = vpop.f32.mrb[0].mxu0
      %v646 = vpop.f32.mrb[0].mxu0
      %647 = vdwg.mxu0
      %vm648 = vcmask 138240
      %v649 = vsel %vm648, %v635, -inf
      %650 = vmax.xlane.f32.xlu0 %v649
      %v651 = vpop.xlane.xlu0 %650
      %v652 = vsel %vm648, %v638, -inf
      %653 = vmax.xlane.f32.xlu0 %v652
      %v654 = vpop.xlane.xlu0 %653
      %vm655 = vcmask 131072
      %v656 = vsel %vm655, %v643, -inf
      %657 = vmax.xlane.f32.xlu0 %v656
      %v658 = vpop.xlane.xlu0 %657
      %v659 = vsub.f32 %v635, %v651
      %v660 = vsub.f32 %v638, %v654
      %v661 = vsub.f32 %v643, %v658
      %v662 = vmul.f32 %v659, 1.442695
      %v663 = vpow.pop %v662
      %v664 = vmul.f32 %v660, 1.442695
      %v665 = vpow.pop %v664
      %v666 = vmul.f32 %v661, 1.442695
      %v667 = vpow.pop %v666
      %v668 = vsel %vm648, %v663, 0.0
      %669 = vadd.xlane.f32.xlu0 %v668
      %v670 = vpop.xlane.xlu0 %669
      %v671 = vsel %vm648, %v665, 0.0
      %672 = vadd.xlane.f32.xlu0 %v671
      %v673 = vpop.xlane.xlu0 %672
      %v674 = vsel %vm655, %v667, 0.0
      %675 = vadd.xlane.f32.xlu0 %v674
      %v676 = vpop.xlane.xlu0 %675
      %v677 = vrcp.pop %v670
      %v678 = vrcp.pop %v673
      %v679 = vrcp.pop %v676
      %v680 = vmul.f32 %v663, %v677
      %v681 = vmul.f32 %v665, %v678
      %v682 = vmul.f32 %v667, %v679
      %v683 = vpack.c.bf16 %v681, %v680
      %v684 = vpack.c.bf16 %v682, %v682
      %685 = vrot.lane.b32.xlu0 %v573, 64
      %v686 = vpop.permute.xlu0 %685
      %687 = vrot.lane.b32.xlu0 %v574, 64
      %v688 = vpop.permute.xlu0 %687
      %v691 = vsel %vm648, %v683, 0
      %v694 = vsel %vm648, %v684, 0
      %vm696 = vcmask 1040384
      %v697 = vsel 0, 4294967295, 65535
      %v698 = vsel %vm696, %v697, 0
      %v700 = vand.u32 %v688, %v698
      %702 = vmatprep.subr.bf16.mxu0 0
      %703 = vmatpush1.bf16.msra.mxu0 %v686
      %704 = vmatprep.subr.bf16.mxu0 0
      %705 = vmatpush1.bf16.msra.mxu0 %v700
      %706 = vmatprep.subr.bf16.mxu0 0
      %707 = vmatpush1.bf16.msra.mxu0 0
      %708 = vmatprep.subr.bf16.mxu0 0
      %709 = vmatpush1.bf16.msra.mxu0 0
      %710 = vmatprep.subr.bf16.mxu0 0
      %711 = vmatpush1.bf16.msra.mxu0 0
      %712 = vmatprep.subr.bf16.mxu0 0
      %713 = vmatpush1.bf16.msra.mxu0 0
      %714 = vmatprep.subr.bf16.mxu0 0
      %715 = vmatpush1.bf16.msra.mxu0 0
      %716 = vmatprep.subr.bf16.mxu0 0
      %717 = vmatpush1.bf16.msra.mxu0 0
      %718 = vmatprep.subr.bf16.mxu0 0
      %719 = vmatpush1.bf16.msra.mxu0 0
      %720 = vmatprep.subr.bf16.mxu0 0
      %721 = vmatpush1.bf16.msra.mxu0 0
      %722 = vmatprep.subr.bf16.mxu0 0
      %723 = vmatpush1.bf16.msra.mxu0 0
      %724 = vmatprep.subr.bf16.mxu0 0
      %725 = vmatpush1.bf16.msra.mxu0 0
      %726 = vmatprep.subr.bf16.mxu0 0
      %727 = vmatpush1.bf16.msra.mxu0 0
      %728 = vmatprep.subr.bf16.mxu0 0
      %729 = vmatpush1.bf16.msra.mxu0 0
      %730 = vmatprep.subr.bf16.mxu0 0
      %731 = vmatpush1.bf16.msra.mxu0 0
      %732 = vmatprep.subr.bf16.mxu0 0
      %733 = vmatpush1.bf16.msra.mxu0 0
      %734 = vmatprep.mubr.bf16.mxu0 0
      %735 = vmatmul.mubr.bf16.gmra.mrb[0].mxu0 %v691
      %v736 = vpop.f32.mrb[0].mxu0
      %v737 = vadd.f32 0.0, %v736
      %v738 = vpop.f32.mrb[0].mxu0
      %v739 = vpop.f32.mrb[0].mxu0
      %v740 = vadd.f32 0.0, %v739
      %v741 = vpop.f32.mrb[0].mxu0
      %742 = vmatprep.mubr.bf16.mxu0 0
      %743 = vmatmul.mubr.bf16.gmra.mrb[0].mxu0 %v694
      %v744 = vpop.f32.mrb[0].mxu0
      %v745 = vadd.f32 0.0, %v744
      %v746 = vpop.f32.mrb[0].mxu0
      %v747 = vpop.f32.mrb[0].mxu0
      %v748 = vpop.f32.mrb[0].mxu0
      %749 = vdwg.mxu0
      %750 = vrot.lane.b32.xlu0 %v573, 120
      %v751 = vpop.permute.xlu0 %750
      %752 = vrot.lane.b32.xlu0 %v574, 120
      %v753 = vpop.permute.xlu0 %752
      %754 = vrot.lane.b32.xlu0 %v573, 88
      %v755 = vpop.permute.xlu0 %754
      %756 = vrot.lane.b32.xlu0 %v574, 88
      %v757 = vpop.permute.xlu0 %756
      %v759 = vsel %vm587, %v751, 0
      %v762 = vsel %vm587, %v753, 0
      %v765 = vsel %vm587, %v755, 0
      %v768 = vsel %vm587, %v757, 0
      %770 = vmatprep.subr.bf16.mxu0 0
      %771 = vmatpush1.bf16.xpose.msra.mxu0 %v765
      %772 = vmatprep.subr.bf16.mxu0 0
      %773 = vmatpush1.bf16.xpose.msra.mxu0 %v768
      %774 = vmatprep.subr.bf16.mxu0 0
      %775 = vmatpush1.bf16.xpose.msra.mxu0 0
      %776 = vmatprep.subr.bf16.mxu0 0
      %777 = vmatpush1.bf16.xpose.msra.mxu0 0
      %778 = vmatprep.subr.bf16.mxu0 0
      %779 = vmatpush1.bf16.xpose.msra.mxu0 0
      %780 = vmatprep.subr.bf16.mxu0 0
      %781 = vmatpush1.bf16.xpose.msra.mxu0 0
      %782 = vmatprep.subr.bf16.mxu0 0
      %783 = vmatpush1.bf16.xpose.msra.mxu0 0
      %784 = vmatprep.subr.bf16.mxu0 0
      %785 = vmatpush1.bf16.xpose.msra.mxu0 0
      %786 = vmatprep.subr.bf16.mxu0 0
      %787 = vmatpush1.bf16.xpose.msra.mxu0 0
      %788 = vmatprep.subr.bf16.mxu0 0
      %789 = vmatpush1.bf16.xpose.msra.mxu0 0
      %790 = vmatprep.subr.bf16.mxu0 0
      %791 = vmatpush1.bf16.xpose.msra.mxu0 0
      %792 = vmatprep.subr.bf16.mxu0 0
      %793 = vmatpush1.bf16.xpose.msra.mxu0 0
      %794 = vmatprep.subr.bf16.mxu0 0
      %795 = vmatpush1.bf16.xpose.msra.mxu0 0
      %796 = vmatprep.subr.bf16.mxu0 0
      %797 = vmatpush1.bf16.xpose.msra.mxu0 0
      %798 = vmatprep.subr.bf16.mxu0 0
      %799 = vmatpush1.bf16.xpose.msra.mxu0 0
      %800 = vmatprep.subr.bf16.mxu0 0
      %801 = vmatpush1.bf16.xpose.msra.mxu0 0
      %802 = vmatprep.mubr.bf16.mxu0 0
      %803 = vmatmul.mubr.bf16.gmra.mrb[0].mxu0 %v759
      %v804 = vpop.f32.mrb[0].mxu0
      %v805 = vadd.f32 %v579, %v804
      %v806 = vpop.f32.mrb[0].mxu0
      %v807 = vpop.f32.mrb[0].mxu0
      %v808 = vadd.f32 %v579, %v807
      %v809 = vpop.f32.mrb[0].mxu0
      %810 = vmatprep.mubr.bf16.mxu0 0
      %811 = vmatmul.mubr.bf16.gmra.mrb[0].mxu0 %v762
      %v812 = vpop.f32.mrb[0].mxu0
      %v813 = vadd.f32 %v579, %v812
      %v814 = vpop.f32.mrb[0].mxu0
      %v815 = vpop.f32.mrb[0].mxu0
      %v816 = vpop.f32.mrb[0].mxu0
      %817 = vdwg.mxu0
      %v818 = vsel %vm648, %v805, -inf
      %819 = vmax.xlane.f32.xlu0 %v818
      %v820 = vpop.xlane.xlu0 %819
      %v821 = vsel %vm648, %v808, -inf
      %822 = vmax.xlane.f32.xlu0 %v821
      %v823 = vpop.xlane.xlu0 %822
      %v824 = vsel %vm655, %v813, -inf
      %825 = vmax.xlane.f32.xlu0 %v824
      %v826 = vpop.xlane.xlu0 %825
      %v827 = vsub.f32 %v805, %v820
      %v828 = vsub.f32 %v808, %v823
      %v829 = vsub.f32 %v813, %v826
      %v830 = vmul.f32 %v827, 1.442695
      %v831 = vpow.pop %v830
      %v832 = vmul.f32 %v828, 1.442695
      %v833 = vpow.pop %v832
      %v834 = vmul.f32 %v829, 1.442695
      %v835 = vpow.pop %v834
      %v836 = vsel %vm648, %v831, 0.0
      %837 = vadd.xlane.f32.xlu0 %v836
      %v838 = vpop.xlane.xlu0 %837
      %v839 = vsel %vm648, %v833, 0.0
      %840 = vadd.xlane.f32.xlu0 %v839
      %v841 = vpop.xlane.xlu0 %840
      %v842 = vsel %vm655, %v835, 0.0
      %843 = vadd.xlane.f32.xlu0 %v842
      %v844 = vpop.xlane.xlu0 %843
      %v845 = vrcp.pop %v838
      %v846 = vrcp.pop %v841
      %v847 = vrcp.pop %v844
      %v848 = vmul.f32 %v831, %v845
      %v849 = vmul.f32 %v833, %v846
      %v850 = vmul.f32 %v835, %v847
      %v851 = vpack.c.bf16 %v849, %v848
      %v852 = vpack.c.bf16 %v850, %v850
      %853 = vrot.lane.b32.xlu0 %v573, 56
      %v854 = vpop.permute.xlu0 %853
      %855 = vrot.lane.b32.xlu0 %v574, 56
      %v856 = vpop.permute.xlu0 %855
      %v859 = vsel %vm648, %v851, 0
      %v862 = vsel %vm648, %v852, 0
      %v865 = vand.u32 %v856, %v698
      %867 = vmatprep.subr.bf16.mxu0 0
      %868 = vmatpush1.bf16.msra.mxu0 %v854
      %869 = vmatprep.subr.bf16.mxu0 0
      %870 = vmatpush1.bf16.msra.mxu0 %v865
      %871 = vmatprep.subr.bf16.mxu0 0
      %872 = vmatpush1.bf16.msra.mxu0 0
      %873 = vmatprep.subr.bf16.mxu0 0
      %874 = vmatpush1.bf16.msra.mxu0 0
      %875 = vmatprep.subr.bf16.mxu0 0
      %876 = vmatpush1.bf16.msra.mxu0 0
      %877 = vmatprep.subr.bf16.mxu0 0
      %878 = vmatpush1.bf16.msra.mxu0 0
      %879 = vmatprep.subr.bf16.mxu0 0
      %880 = vmatpush1.bf16.msra.mxu0 0
      %881 = vmatprep.subr.bf16.mxu0 0
      %882 = vmatpush1.bf16.msra.mxu0 0
      %883 = vmatprep.subr.bf16.mxu0 0
      %884 = vmatpush1.bf16.msra.mxu0 0
      %885 = vmatprep.subr.bf16.mxu0 0
      %886 = vmatpush1.bf16.msra.mxu0 0
      %887 = vmatprep.subr.bf16.mxu0 0
      %888 = vmatpush1.bf16.msra.mxu0 0
      %889 = vmatprep.subr.bf16.mxu0 0
      %890 = vmatpush1.bf16.msra.mxu0 0
      %891 = vmatprep.subr.bf16.mxu0 0
      %892 = vmatpush1.bf16.msra.mxu0 0
      %893 = vmatprep.subr.bf16.mxu0 0
      %894 = vmatpush1.bf16.msra.mxu0 0
      %895 = vmatprep.subr.bf16.mxu0 0
      %896 = vmatpush1.bf16.msra.mxu0 0
      %897 = vmatprep.subr.bf16.mxu0 0
      %898 = vmatpush1.bf16.msra.mxu0 0
      %899 = vmatprep.mubr.bf16.mxu0 0
      %900 = vmatmul.mubr.bf16.gmra.mrb[0].mxu0 %v859
      %v901 = vpop.f32.mrb[0].mxu0
      %v902 = vadd.f32 0.0, %v901
      %v903 = vpop.f32.mrb[0].mxu0
      %v904 = vpop.f32.mrb[0].mxu0
      %v905 = vadd.f32 0.0, %v904
      %v906 = vpop.f32.mrb[0].mxu0
      %907 = vmatprep.mubr.bf16.mxu0 0
      %908 = vmatmul.mubr.bf16.gmra.mrb[0].mxu0 %v862
      %v909 = vpop.f32.mrb[0].mxu0
      %v910 = vadd.f32 0.0, %v909
      %v911 = vpop.f32.mrb[0].mxu0
      %v912 = vpop.f32.mrb[0].mxu0
      %v913 = vpop.f32.mrb[0].mxu0
      %914 = vdwg.mxu0
      %915 = vrot.lane.b32.xlu0 %v573, 112
      %v916 = vpop.permute.xlu0 %915
      %917 = vrot.lane.b32.xlu0 %v574, 112
      %v918 = vpop.permute.xlu0 %917
      %919 = vrot.lane.b32.xlu0 %v573, 80
      %v920 = vpop.permute.xlu0 %919
      %921 = vrot.lane.b32.xlu0 %v574, 80
      %v922 = vpop.permute.xlu0 %921
      %v924 = vsel %vm587, %v916, 0
      %v927 = vsel %vm587, %v918, 0
      %v930 = vsel %vm587, %v920, 0
      %v933 = vsel %vm587, %v922, 0
      %935 = vmatprep.subr.bf16.mxu0 0
      %936 = vmatpush1.bf16.xpose.msra.mxu0 %v930
      %937 = vmatprep.subr.bf16.mxu0 0
      %938 = vmatpush1.bf16.xpose.msra.mxu0 %v933
      %939 = vmatprep.subr.bf16.mxu0 0
      %940 = vmatpush1.bf16.xpose.msra.mxu0 0
      %941 = vmatprep.subr.bf16.mxu0 0
      %942 = vmatpush1.bf16.xpose.msra.mxu0 0
      %943 = vmatprep.subr.bf16.mxu0 0
      %944 = vmatpush1.bf16.xpose.msra.mxu0 0
      %945 = vmatprep.subr.bf16.mxu0 0
      %946 = vmatpush1.bf16.xpose.msra.mxu0 0
      %947 = vmatprep.subr.bf16.mxu0 0
      %948 = vmatpush1.bf16.xpose.msra.mxu0 0
      %949 = vmatprep.subr.bf16.mxu0 0
      %950 = vmatpush1.bf16.xpose.msra.mxu0 0
      %951 = vmatprep.subr.bf16.mxu0 0
      %952 = vmatpush1.bf16.xpose.msra.mxu0 0
      %953 = vmatprep.subr.bf16.mxu0 0
      %954 = vmatpush1.bf16.xpose.msra.mxu0 0
      %955 = vmatprep.subr.bf16.mxu0 0
      %956 = vmatpush1.bf16.xpose.msra.mxu0 0
      %957 = vmatprep.subr.bf16.mxu0 0
      %958 = vmatpush1.bf16.xpose.msra.mxu0 0
      %959 = vmatprep.subr.bf16.mxu0 0
      %960 = vmatpush1.bf16.xpose.msra.mxu0 0
      %961 = vmatprep.subr.bf16.mxu0 0
      %962 = vmatpush1.bf16.xpose.msra.mxu0 0
      %963 = vmatprep.subr.bf16.mxu0 0
      %964 = vmatpush1.bf16.xpose.msra.mxu0 0
      %965 = vmatprep.subr.bf16.mxu0 0
      %966 = vmatpush1.bf16.xpose.msra.mxu0 0
      %967 = vmatprep.mubr.bf16.mxu0 0
      %968 = vmatmul.mubr.bf16.gmra.mrb[0].mxu0 %v924
      %v969 = vpop.f32.mrb[0].mxu0
      %v970 = vadd.f32 %v579, %v969
      %v971 = vpop.f32.mrb[0].mxu0
      %v972 = vpop.f32.mrb[0].mxu0
      %v973 = vadd.f32 %v579, %v972
      %v974 = vpop.f32.mrb[0].mxu0
      %975 = vmatprep.mubr.bf16.mxu0 0
      %976 = vmatmul.mubr.bf16.gmra.mrb[0].mxu0 %v927
      %v977 = vpop.f32.mrb[0].mxu0
      %v978 = vadd.f32 %v579, %v977
      %v979 = vpop.f32.mrb[0].mxu0
      %v980 = vpop.f32.mrb[0].mxu0
      %v981 = vpop.f32.mrb[0].mxu0
      %982 = vdwg.mxu0
      %v983 = vsel %vm648, %v970, -inf
      %984 = vmax.xlane.f32.xlu0 %v983
      %v985 = vpop.xlane.xlu0 %984
      %v986 = vsel %vm648, %v973, -inf
      %987 = vmax.xlane.f32.xlu0 %v986
      %v988 = vpop.xlane.xlu0 %987
      %v989 = vsel %vm655, %v978, -inf
      %990 = vmax.xlane.f32.xlu0 %v989
      %v991 = vpop.xlane.xlu0 %990
      %v992 = vsub.f32 %v970, %v985
      %v993 = vsub.f32 %v973, %v988
      %v994 = vsub.f32 %v978, %v991
      %v995 = vmul.f32 %v992, 1.442695
      %v996 = vpow.pop %v995
      %v997 = vmul.f32 %v993, 1.442695
      %v998 = vpow.pop %v997
      %v999 = vmul.f32 %v994, 1.442695
      %v1000 = vpow.pop %v999
      %v1001 = vsel %vm648, %v996, 0.0
      %1002 = vadd.xlane.f32.xlu0 %v1001
      %v1003 = vpop.xlane.xlu0 %1002
      %v1004 = vsel %vm648, %v998, 0.0
      %1005 = vadd.xlane.f32.xlu0 %v1004
      %v1006 = vpop.xlane.xlu0 %1005
      %v1007 = vsel %vm655, %v1000, 0.0
      %1008 = vadd.xlane.f32.xlu0 %v1007
      %v1009 = vpop.xlane.xlu0 %1008
      %v1010 = vrcp.pop %v1003
      %v1011 = vrcp.pop %v1006
      %v1012 = vrcp.pop %v1009
      %v1013 = vmul.f32 %v996, %v1010
      %v1014 = vmul.f32 %v998, %v1011
      %v1015 = vmul.f32 %v1000, %v1012
      %v1016 = vpack.c.bf16 %v1014, %v1013
      %v1017 = vpack.c.bf16 %v1015, %v1015
      %1018 = vrot.lane.b32.xlu0 %v573, 48
      %v1019 = vpop.permute.xlu0 %1018
      %1020 = vrot.lane.b32.xlu0 %v574, 48
      %v1021 = vpop.permute.xlu0 %1020
      %v1024 = vsel %vm648, %v1016, 0
      %v1027 = vsel %vm648, %v1017, 0
      %v1030 = vand.u32 %v1021, %v698
      %1032 = vmatprep.subr.bf16.mxu0 0
      %1033 = vmatpush1.bf16.msra.mxu0 %v1019
      %1034 = vmatprep.subr.bf16.mxu0 0
      %1035 = vmatpush1.bf16.msra.mxu0 %v1030
      %1036 = vmatprep.subr.bf16.mxu0 0
      %1037 = vmatpush1.bf16.msra.mxu0 0
      %1038 = vmatprep.subr.bf16.mxu0 0
      %1039 = vmatpush1.bf16.msra.mxu0 0
      %1040 = vmatprep.subr.bf16.mxu0 0
      %1041 = vmatpush1.bf16.msra.mxu0 0
      %1042 = vmatprep.subr.bf16.mxu0 0
      %1043 = vmatpush1.bf16.msra.mxu0 0
      %1044 = vmatprep.subr.bf16.mxu0 0
      %1045 = vmatpush1.bf16.msra.mxu0 0
      %1046 = vmatprep.subr.bf16.mxu0 0
      %1047 = vmatpush1.bf16.msra.mxu0 0
      %1048 = vmatprep.subr.bf16.mxu0 0
      %1049 = vmatpush1.bf16.msra.mxu0 0
      %1050 = vmatprep.subr.bf16.mxu0 0
      %1051 = vmatpush1.bf16.msra.mxu0 0
      %1052 = vmatprep.subr.bf16.mxu0 0
      %1053 = vmatpush1.bf16.msra.mxu0 0
      %1054 = vmatprep.subr.bf16.mxu0 0
      %1055 = vmatpush1.bf16.msra.mxu0 0
      %1056 = vmatprep.subr.bf16.mxu0 0
      %1057 = vmatpush1.bf16.msra.mxu0 0
      %1058 = vmatprep.subr.bf16.mxu0 0
      %1059 = vmatpush1.bf16.msra.mxu0 0
      %1060 = vmatprep.subr.bf16.mxu0 0
      %1061 = vmatpush1.bf16.msra.mxu0 0
      %1062 = vmatprep.subr.bf16.mxu0 0
      %1063 = vmatpush1.bf16.msra.mxu0 0
      %1064 = vmatprep.mubr.bf16.mxu0 0
      %1065 = vmatmul.mubr.bf16.gmra.mrb[0].mxu0 %v1024
      %v1066 = vpop.f32.mrb[0].mxu0
      %v1067 = vadd.f32 0.0, %v1066
      %v1068 = vpop.f32.mrb[0].mxu0
      %v1069 = vpop.f32.mrb[0].mxu0
      %v1070 = vadd.f32 0.0, %v1069
      %v1071 = vpop.f32.mrb[0].mxu0
      %1072 = vmatprep.mubr.bf16.mxu0 0
      %1073 = vmatmul.mubr.bf16.gmra.mrb[0].mxu0 %v1027
      %v1074 = vpop.f32.mrb[0].mxu0
      %v1075 = vadd.f32 0.0, %v1074
      %v1076 = vpop.f32.mrb[0].mxu0
      %v1077 = vpop.f32.mrb[0].mxu0
      %v1078 = vpop.f32.mrb[0].mxu0
      %1079 = vdwg.mxu0
      %1080 = vrot.lane.b32.xlu0 %v573, 104
      %v1081 = vpop.permute.xlu0 %1080
      %1082 = vrot.lane.b32.xlu0 %v574, 104
      %v1083 = vpop.permute.xlu0 %1082
      %1084 = vrot.lane.b32.xlu0 %v573, 72
      %v1085 = vpop.permute.xlu0 %1084
      %1086 = vrot.lane.b32.xlu0 %v574, 72
      %v1087 = vpop.permute.xlu0 %1086
      %v1089 = vsel %vm587, %v1081, 0
      %v1092 = vsel %vm587, %v1083, 0
      %v1095 = vsel %vm587, %v1085, 0
      %v1098 = vsel %vm587, %v1087, 0
      %1100 = vmatprep.subr.bf16.mxu0 0
      %1101 = vmatpush1.bf16.xpose.msra.mxu0 %v1095
      %1102 = vmatprep.subr.bf16.mxu0 0
      %1103 = vmatpush1.bf16.xpose.msra.mxu0 %v1098
      %1104 = vmatprep.subr.bf16.mxu0 0
      %1105 = vmatpush1.bf16.xpose.msra.mxu0 0
      %1106 = vmatprep.subr.bf16.mxu0 0
      %1107 = vmatpush1.bf16.xpose.msra.mxu0 0
      %1108 = vmatprep.subr.bf16.mxu0 0
      %1109 = vmatpush1.bf16.xpose.msra.mxu0 0
      %1110 = vmatprep.subr.bf16.mxu0 0
      %1111 = vmatpush1.bf16.xpose.msra.mxu0 0
      %1112 = vmatprep.subr.bf16.mxu0 0
      %1113 = vmatpush1.bf16.xpose.msra.mxu0 0
      %1114 = vmatprep.subr.bf16.mxu0 0
      %1115 = vmatpush1.bf16.xpose.msra.mxu0 0
      %1116 = vmatprep.subr.bf16.mxu0 0
      %1117 = vmatpush1.bf16.xpose.msra.mxu0 0
      %1118 = vmatprep.subr.bf16.mxu0 0
      %1119 = vmatpush1.bf16.xpose.msra.mxu0 0
      %1120 = vmatprep.subr.bf16.mxu0 0
      %1121 = vmatpush1.bf16.xpose.msra.mxu0 0
      %1122 = vmatprep.subr.bf16.mxu0 0
      %1123 = vmatpush1.bf16.xpose.msra.mxu0 0
      %1124 = vmatprep.subr.bf16.mxu0 0
      %1125 = vmatpush1.bf16.xpose.msra.mxu0 0
      %1126 = vmatprep.subr.bf16.mxu0 0
      %1127 = vmatpush1.bf16.xpose.msra.mxu0 0
      %1128 = vmatprep.subr.bf16.mxu0 0
      %1129 = vmatpush1.bf16.xpose.msra.mxu0 0
      %1130 = vmatprep.subr.bf16.mxu0 0
      %1131 = vmatpush1.bf16.xpose.msra.mxu0 0
      %1132 = vmatprep.mubr.bf16.mxu0 0
      %1133 = vmatmul.mubr.bf16.gmra.mrb[0].mxu0 %v1089
      %v1134 = vpop.f32.mrb[0].mxu0
      %v1135 = vadd.f32 %v579, %v1134
      %v1136 = vpop.f32.mrb[0].mxu0
      %v1137 = vpop.f32.mrb[0].mxu0
      %v1138 = vadd.f32 %v579, %v1137
      %v1139 = vpop.f32.mrb[0].mxu0
      %1140 = vmatprep.mubr.bf16.mxu0 0
      %1141 = vmatmul.mubr.bf16.gmra.mrb[0].mxu0 %v1092
      %v1142 = vpop.f32.mrb[0].mxu0
      %v1143 = vadd.f32 %v579, %v1142
      %v1144 = vpop.f32.mrb[0].mxu0
      %v1145 = vpop.f32.mrb[0].mxu0
      %v1146 = vpop.f32.mrb[0].mxu0
      %1147 = vdwg.mxu0
      %v1148 = vsel %vm648, %v1135, -inf
      %1149 = vmax.xlane.f32.xlu0 %v1148
      %v1150 = vpop.xlane.xlu0 %1149
      %v1151 = vsel %vm648, %v1138, -inf
      %1152 = vmax.xlane.f32.xlu0 %v1151
      %v1153 = vpop.xlane.xlu0 %1152
      %v1154 = vsel %vm655, %v1143, -inf
      %1155 = vmax.xlane.f32.xlu0 %v1154
      %v1156 = vpop.xlane.xlu0 %1155
      %v1157 = vsub.f32 %v1135, %v1150
      %v1158 = vsub.f32 %v1138, %v1153
      %v1159 = vsub.f32 %v1143, %v1156
      %v1160 = vmul.f32 %v1157, 1.442695
      %v1161 = vpow.pop %v1160
      %v1162 = vmul.f32 %v1158, 1.442695
      %v1163 = vpow.pop %v1162
      %v1164 = vmul.f32 %v1159, 1.442695
      %v1165 = vpow.pop %v1164
      %v1166 = vsel %vm648, %v1161, 0.0
      %1167 = vadd.xlane.f32.xlu0 %v1166
      %v1168 = vpop.xlane.xlu0 %1167
      %v1169 = vsel %vm648, %v1163, 0.0
      %1170 = vadd.xlane.f32.xlu0 %v1169
      %v1171 = vpop.xlane.xlu0 %1170
      %v1172 = vsel %vm655, %v1165, 0.0
      %1173 = vadd.xlane.f32.xlu0 %v1172
      %v1174 = vpop.xlane.xlu0 %1173
      %v1175 = vrcp.pop %v1168
      %v1176 = vrcp.pop %v1171
      %v1177 = vrcp.pop %v1174
      %v1178 = vmul.f32 %v1161, %v1175
      %v1179 = vmul.f32 %v1163, %v1176
      %v1180 = vmul.f32 %v1165, %v1177
      %v1181 = vpack.c.bf16 %v1179, %v1178
      %v1182 = vpack.c.bf16 %v1180, %v1180
      %1183 = vrot.lane.b32.xlu0 %v573, 40
      %v1184 = vpop.permute.xlu0 %1183
      %1185 = vrot.lane.b32.xlu0 %v574, 40
      %v1186 = vpop.permute.xlu0 %1185
      %v1189 = vsel %vm648, %v1181, 0
      %v1192 = vsel %vm648, %v1182, 0
      %v1195 = vand.u32 %v1186, %v698
      %1197 = vmatprep.subr.bf16.mxu0 0
      %1198 = vmatpush1.bf16.msra.mxu0 %v1184
      %1199 = vmatprep.subr.bf16.mxu0 0
      %1200 = vmatpush1.bf16.msra.mxu0 %v1195
      %1201 = vmatprep.subr.bf16.mxu0 0
      %1202 = vmatpush1.bf16.msra.mxu0 0
      %1203 = vmatprep.subr.bf16.mxu0 0
      %1204 = vmatpush1.bf16.msra.mxu0 0
      %1205 = vmatprep.subr.bf16.mxu0 0
      %1206 = vmatpush1.bf16.msra.mxu0 0
      %1207 = vmatprep.subr.bf16.mxu0 0
      %1208 = vmatpush1.bf16.msra.mxu0 0
      %1209 = vmatprep.subr.bf16.mxu0 0
      %1210 = vmatpush1.bf16.msra.mxu0 0
      %1211 = vmatprep.subr.bf16.mxu0 0
      %1212 = vmatpush1.bf16.msra.mxu0 0
      %1213 = vmatprep.subr.bf16.mxu0 0
      %1214 = vmatpush1.bf16.msra.mxu0 0
      %1215 = vmatprep.subr.bf16.mxu0 0
      %1216 = vmatpush1.bf16.msra.mxu0 0
      %1217 = vmatprep.subr.bf16.mxu0 0
      %1218 = vmatpush1.bf16.msra.mxu0 0
      %1219 = vmatprep.subr.bf16.mxu0 0
      %1220 = vmatpush1.bf16.msra.mxu0 0
      %1221 = vmatprep.subr.bf16.mxu0 0
      %1222 = vmatpush1.bf16.msra.mxu0 0
      %1223 = vmatprep.subr.bf16.mxu0 0
      %1224 = vmatpush1.bf16.msra.mxu0 0
      %1225 = vmatprep.subr.bf16.mxu0 0
      %1226 = vmatpush1.bf16.msra.mxu0 0
      %1227 = vmatprep.subr.bf16.mxu0 0
      %1228 = vmatpush1.bf16.msra.mxu0 0
      %1229 = vmatprep.mubr.bf16.mxu0 0
      %1230 = vmatmul.mubr.bf16.gmra.mrb[0].mxu0 %v1189
      %v1231 = vpop.f32.mrb[0].mxu0
      %v1232 = vadd.f32 0.0, %v1231
      %v1233 = vpop.f32.mrb[0].mxu0
      %v1234 = vpop.f32.mrb[0].mxu0
      %v1235 = vadd.f32 0.0, %v1234
      %v1236 = vpop.f32.mrb[0].mxu0
      %1237 = vmatprep.mubr.bf16.mxu0 0
      %1238 = vmatmul.mubr.bf16.gmra.mrb[0].mxu0 %v1192
      %v1239 = vpop.f32.mrb[0].mxu0
      %v1240 = vadd.f32 0.0, %v1239
      %v1241 = vpop.f32.mrb[0].mxu0
      %v1242 = vpop.f32.mrb[0].mxu0
      %v1243 = vpop.f32.mrb[0].mxu0
      %1244 = vdwg.mxu0
      %1248 = vrot.lane.b32.xlu0 %v902, 8
      %v1249 = vpop.permute.xlu0 %1248
      %1250 = vrot.lane.b32.xlu0 %v905, 8
      %v1251 = vpop.permute.xlu0 %1250
      %1252 = vrot.lane.b32.xlu0 %v910, 8
      %v1253 = vpop.permute.xlu0 %1252
      %1260 = vrot.lane.b32.xlu0 %v1067, 16
      %v1261 = vpop.permute.xlu0 %1260
      %1262 = vrot.lane.b32.xlu0 %v1070, 16
      %v1263 = vpop.permute.xlu0 %1262
      %1264 = vrot.lane.b32.xlu0 %v1075, 16
      %v1265 = vpop.permute.xlu0 %1264
      %1272 = vrot.lane.b32.xlu0 %v1232, 24
      %v1273 = vpop.permute.xlu0 %1272
      %1274 = vrot.lane.b32.xlu0 %v1235, 24
      %v1275 = vpop.permute.xlu0 %1274
      %1276 = vrot.lane.b32.xlu0 %v1240, 24
      %v1277 = vpop.permute.xlu0 %1276
      %v1281 = vsel %vm587, %v737, %v1249
      %v1282 = vsel %vm587, %v740, %v1251
      %v1283 = vsel %vm587, %v745, %v1253
      %vm1284 = vcmask 130048
      %v1285 = vsel %vm1284, %v1281, %v1261
      %v1286 = vsel %vm1284, %v1282, %v1263
      %v1287 = vsel %vm1284, %v1283, %v1265
      %vm1288 = vcmask 195584
      %v1289 = vsel %vm1288, %v1285, %v1273
      %v1290 = vsel %vm1288, %v1286, %v1275
      %v1291 = vsel %vm1288, %v1287, %v1277
      %v1292 = vpack.c.bf16 %v1290, %v1289
      %v1293 = vpack.c.bf16 %v1291, %v1291
      %v1294 = vld [vmem:[%s4] sm:$0xf]
      %v1295 = vld [vmem:[%s4 + $0x4] sm:$0xf]
      %v1296 = vld [vmem:[%s4 + $0x8] sm:$0xf]
      %v1297 = vld [vmem:[%s4 + $0xc] sm:$0xf]
      %v1298 = vld [vmem:[%s5] sm:$0x1]
      %v1300 = vlaneseq
      %v1301 = vshrl.u32 %v1300, 7
      %v1302 = vsub.s32 0, %v1301
      %v1303 = vrot.slane %v1298, %v1302
      %v1309 = vunpack.c.l.b16 %v1294
      %v1310 = vunpack.c.l.b16 %v1295
      %v1311 = vunpack.c.l.b16 %v1296
      %v1312 = vunpack.c.l.b16 %v1297
      %v1313 = vpack.c.b16 %v1310, %v1309
      %v1314 = vpack.c.b16 %v1312, %v1311
      %v1318 = vsel %vm518, %v1292, 0
      %v1321 = vsel %vm518, %v1293, 0
      %1323 = vmatprep.subr.bf16.mxu0 0
      %1324 = vmatpush1.bf16.msra.mxu0 %v1313
      %1325 = vmatprep.subr.bf16.mxu0 0
      %1326 = vmatpush1.bf16.msra.mxu0 %v1314
      %1327 = vmatprep.subr.bf16.mxu0 0
      %1328 = vmatpush1.bf16.msra.mxu0 0
      %1329 = vmatprep.subr.bf16.mxu0 0
      %1330 = vmatpush1.bf16.msra.mxu0 0
      %1331 = vmatprep.subr.bf16.mxu0 0
      %1332 = vmatpush1.bf16.msra.mxu0 0
      %1333 = vmatprep.subr.bf16.mxu0 0
      %1334 = vmatpush1.bf16.msra.mxu0 0
      %1335 = vmatprep.subr.bf16.mxu0 0
      %1336 = vmatpush1.bf16.msra.mxu0 0
      %1337 = vmatprep.subr.bf16.mxu0 0
      %1338 = vmatpush1.bf16.msra.mxu0 0
      %1339 = vmatprep.subr.bf16.mxu0 0
      %1340 = vmatpush1.bf16.msra.mxu0 0
      %1341 = vmatprep.subr.bf16.mxu0 0
      %1342 = vmatpush1.bf16.msra.mxu0 0
      %1343 = vmatprep.subr.bf16.mxu0 0
      %1344 = vmatpush1.bf16.msra.mxu0 0
      %1345 = vmatprep.subr.bf16.mxu0 0
      %1346 = vmatpush1.bf16.msra.mxu0 0
      %1347 = vmatprep.subr.bf16.mxu0 0
      %1348 = vmatpush1.bf16.msra.mxu0 0
      %1349 = vmatprep.subr.bf16.mxu0 0
      %1350 = vmatpush1.bf16.msra.mxu0 0
      %1351 = vmatprep.subr.bf16.mxu0 0
      %1352 = vmatpush1.bf16.msra.mxu0 0
      %1353 = vmatprep.subr.bf16.mxu0 0
      %1354 = vmatpush1.bf16.msra.mxu0 0
      %1355 = vmatprep.mubr.bf16.mxu0 0
      %1356 = vmatmul.mubr.bf16.gmra.mrb[0].mxu0 %v1318
      %v1357 = vpop.f32.mrb[0].mxu0
      %v1358 = vadd.f32 %v1303, %v1357
      %v1359 = vpop.f32.mrb[0].mxu0
      %v1360 = vpop.f32.mrb[0].mxu0
      %v1361 = vadd.f32 %v1303, %v1360
      %v1362 = vpop.f32.mrb[0].mxu0
      %1363 = vmatprep.mubr.bf16.mxu0 0
      %1364 = vmatmul.mubr.bf16.gmra.mrb[0].mxu0 %v1321
      %v1365 = vpop.f32.mrb[0].mxu0
      %v1366 = vadd.f32 %v1303, %v1365
      %v1367 = vpop.f32.mrb[0].mxu0
      %v1368 = vpop.f32.mrb[0].mxu0
      %v1369 = vpop.f32.mrb[0].mxu0
      %1370 = vdwg.mxu0
      %v1371 = vunpack.c.l.bf16 %v483
      %v1372 = vunpack.c.l.bf16 %v484
      %v1373 = vunpack.c.l.bf16 %v485
      %v1374 = vadd.f32 %v1358, %v1371
      %v1375 = vadd.f32 %v1361, %v1372
      %v1376 = vadd.f32 %v1366, %v1373
      %v1377 = vsel %vm518, %v1374, 0.0
      %1378 = vadd.xlane.f32.xlu0 %v1377
      %v1379 = vpop.xlane.xlu0 %1378
      %v1380 = vsel %vm518, %v1375, 0.0
      %1381 = vadd.xlane.f32.xlu0 %v1380
      %v1382 = vpop.xlane.xlu0 %1381
      %vm1383 = vcmask 253952
      %v1384 = vsel %vm1383, %v1376, 0.0
      %1385 = vadd.xlane.f32.xlu0 %v1384
      %v1386 = vpop.xlane.xlu0 %1385
      %v1387 = vrcp.pop 32.0
      %v1388 = vmul.f32 %v1379, %v1387
      %v1389 = vmul.f32 %v1382, %v1387
      %v1390 = vmul.f32 %v1386, %v1387
      %v1391 = vsub.f32 %v1374, %v1388
      %v1392 = vsub.f32 %v1375, %v1389
      %v1393 = vsub.f32 %v1376, %v1390
      %v1394 = vmul.f32 %v1391, %v1391
      %v1395 = vmul.f32 %v1392, %v1392
      %v1396 = vmul.f32 %v1393, %v1393
      %v1397 = vsel %vm518, %v1394, 0.0
      %1398 = vadd.xlane.f32.xlu0 %v1397
      %v1399 = vpop.xlane.xlu0 %1398
      %v1400 = vsel %vm518, %v1395, 0.0
      %1401 = vadd.xlane.f32.xlu0 %v1400
      %v1402 = vpop.xlane.xlu0 %1401
      %v1403 = vsel %vm1383, %v1396, 0.0
      %1404 = vadd.xlane.f32.xlu0 %v1403
      %v1405 = vpop.xlane.xlu0 %1404
      %v1406 = vmul.f32 %v1399, %v1387
      %v1407 = vmul.f32 %v1402, %v1387
      %v1408 = vmul.f32 %v1405, %v1387
      %v1409 = vadd.f32 %v1406, 1e-05
      %v1410 = vadd.f32 %v1407, 1e-05
      %v1411 = vadd.f32 %v1408, 1e-05
      %v1412 = vrsqrt.pop %v1409
      %v1413 = vrsqrt.pop %v1410
      %v1414 = vrsqrt.pop %v1411
      %v1415 = vmul.f32 %v1391, %v1412
      %v1416 = vmul.f32 %v1392, %v1413
      %v1417 = vmul.f32 %v1393, %v1414
      %v1418 = vld [vmem:[%s6] sm:$0x1]
      %v1420 = vlaneseq
      %v1421 = vshrl.u32 %v1420, 7
      %v1422 = vsub.s32 0, %v1421
      %v1423 = vrot.slane %v1418, %v1422
      %v1425 = vmul.f32 %v1415, %v1423
      %v1426 = vmul.f32 %v1416, %v1423
      %v1427 = vmul.f32 %v1417, %v1423
      %v1428 = vld [vmem:[%s7] sm:$0x1]
      %v1430 = vlaneseq
      %v1431 = vshrl.u32 %v1430, 7
      %v1432 = vsub.s32 0, %v1431
      %v1433 = vrot.slane %v1428, %v1432
      %v1435 = vadd.f32 %v1425, %v1433
      %v1436 = vadd.f32 %v1426, %v1433
      %v1437 = vadd.f32 %v1427, %v1433
      %v1438 = vpack.c.bf16 %v1436, %v1435
      %v1439 = vpack.c.bf16 %v1437, %v1437
      %v1440 = vld [vmem:[%s8] sm:$0xf]
      %v1441 = vld [vmem:[%s8 + $0x4] sm:$0xf]
      %v1442 = vld [vmem:[%s8 + $0x8] sm:$0xf]
      %v1443 = vld [vmem:[%s8 + $0xc] sm:$0xf]
      %v1444 = vld [vmem:[%s9] sm:$0x1]
      %v1446 = vlaneseq
      %v1447 = vshrl.u32 %v1446, 7
      %v1448 = vsub.s32 0, %v1447
      %v1449 = vrot.slane %v1444, %v1448
      %v1455 = vunpack.c.l.b16 %v1440
      %v1456 = vunpack.c.l.b16 %v1441
      %v1457 = vunpack.c.l.b16 %v1442
      %v1458 = vunpack.c.l.b16 %v1443
      %v1459 = vpack.c.b16 %v1456, %v1455
      %v1460 = vpack.c.b16 %v1458, %v1457
      %v1464 = vsel %vm518, %v1438, 0
      %v1467 = vsel %vm518, %v1439, 0
      %1469 = vmatprep.subr.bf16.mxu0 0
      %1470 = vmatpush1.bf16.msra.mxu0 %v1459
      %1471 = vmatprep.subr.bf16.mxu0 0
      %1472 = vmatpush1.bf16.msra.mxu0 %v1460
      %1473 = vmatprep.subr.bf16.mxu0 0
      %1474 = vmatpush1.bf16.msra.mxu0 0
      %1475 = vmatprep.subr.bf16.mxu0 0
      %1476 = vmatpush1.bf16.msra.mxu0 0
      %1477 = vmatprep.subr.bf16.mxu0 0
      %1478 = vmatpush1.bf16.msra.mxu0 0
      %1479 = vmatprep.subr.bf16.mxu0 0
      %1480 = vmatpush1.bf16.msra.mxu0 0
      %1481 = vmatprep.subr.bf16.mxu0 0
      %1482 = vmatpush1.bf16.msra.mxu0 0
      %1483 = vmatprep.subr.bf16.mxu0 0
      %1484 = vmatpush1.bf16.msra.mxu0 0
      %1485 = vmatprep.subr.bf16.mxu0 0
      %1486 = vmatpush1.bf16.msra.mxu0 0
      %1487 = vmatprep.subr.bf16.mxu0 0
      %1488 = vmatpush1.bf16.msra.mxu0 0
      %1489 = vmatprep.subr.bf16.mxu0 0
      %1490 = vmatpush1.bf16.msra.mxu0 0
      %1491 = vmatprep.subr.bf16.mxu0 0
      %1492 = vmatpush1.bf16.msra.mxu0 0
      %1493 = vmatprep.subr.bf16.mxu0 0
      %1494 = vmatpush1.bf16.msra.mxu0 0
      %1495 = vmatprep.subr.bf16.mxu0 0
      %1496 = vmatpush1.bf16.msra.mxu0 0
      %1497 = vmatprep.subr.bf16.mxu0 0
      %1498 = vmatpush1.bf16.msra.mxu0 0
      %1499 = vmatprep.subr.bf16.mxu0 0
      %1500 = vmatpush1.bf16.msra.mxu0 0
      %1501 = vmatprep.mubr.bf16.mxu0 0
      %1502 = vmatmul.mubr.bf16.gmra.mrb[0].mxu0 %v1464
      %v1503 = vpop.f32.mrb[0].mxu0
      %v1504 = vadd.f32 %v1449, %v1503
      %v1505 = vpop.f32.mrb[0].mxu0
      %v1506 = vpop.f32.mrb[0].mxu0
      %v1507 = vadd.f32 %v1449, %v1506
      %v1508 = vpop.f32.mrb[0].mxu0
      %1509 = vmatprep.mubr.bf16.mxu0 0
      %1510 = vmatmul.mubr.bf16.gmra.mrb[0].mxu0 %v1467
      %v1511 = vpop.f32.mrb[0].mxu0
      %v1512 = vadd.f32 %v1449, %v1511
      %v1513 = vpop.f32.mrb[0].mxu0
      %v1514 = vpop.f32.mrb[0].mxu0
      %v1515 = vpop.f32.mrb[0].mxu0
      %1516 = vdwg.mxu0
      %v1517 = vmax.f32 %v1504, 0.0
      %v1518 = vmax.f32 %v1507, 0.0
      %v1519 = vmax.f32 %v1512, 0.0
      %v1520 = vpack.c.bf16 %v1518, %v1517
      %v1521 = vpack.c.bf16 %v1519, %v1519
      %v1522 = vld [vmem:[%s10] sm:$0xf]
      %v1523 = vld [vmem:[%s10 + $0x4] sm:$0xf]
      %v1524 = vld [vmem:[%s10 + $0x8] sm:$0xf]
      %v1525 = vld [vmem:[%s10 + $0xc] sm:$0xf]
      %v1526 = vld [vmem:[%s10 + $0x10] sm:$0xf]
      %v1527 = vld [vmem:[%s10 + $0x14] sm:$0xf]
      %v1528 = vld [vmem:[%s10 + $0x18] sm:$0xf]
      %v1529 = vld [vmem:[%s10 + $0x1c] sm:$0xf]
      %v1530 = vld [vmem:[%s10 + $0x20] sm:$0xf]
      %v1531 = vld [vmem:[%s10 + $0x24] sm:$0xf]
      %v1532 = vld [vmem:[%s10 + $0x28] sm:$0xf]
      %v1533 = vld [vmem:[%s10 + $0x2c] sm:$0xf]
      %v1534 = vld [vmem:[%s10 + $0x30] sm:$0xf]
      %v1535 = vld [vmem:[%s10 + $0x34] sm:$0xf]
      %v1536 = vld [vmem:[%s10 + $0x38] sm:$0xf]
      %v1537 = vld [vmem:[%s10 + $0x3c] sm:$0xf]
      %v1538 = vld [vmem:[%s11] sm:$0x1]
      %v1540 = vlaneseq
      %v1541 = vshrl.u32 %v1540, 7
      %v1542 = vsub.s32 0, %v1541
      %v1543 = vrot.slane %v1538, %v1542
      %v1561 = vunpack.c.l.b16 %v1522
      %v1562 = vunpack.c.l.b16 %v1523
      %v1563 = vunpack.c.l.b16 %v1524
      %v1564 = vunpack.c.l.b16 %v1525
      %v1565 = vunpack.c.l.b16 %v1526
      %v1566 = vunpack.c.l.b16 %v1527
      %v1567 = vunpack.c.l.b16 %v1528
      %v1568 = vunpack.c.l.b16 %v1529
      %v1569 = vunpack.c.l.b16 %v1530
      %v1570 = vunpack.c.l.b16 %v1531
      %v1571 = vunpack.c.l.b16 %v1532
      %v1572 = vunpack.c.l.b16 %v1533
      %v1573 = vunpack.c.l.b16 %v1534
      %v1574 = vunpack.c.l.b16 %v1535
      %v1575 = vunpack.c.l.b16 %v1536
      %v1576 = vunpack.c.l.b16 %v1537
      %v1577 = vpack.c.b16 %v1562, %v1561
      %v1578 = vpack.c.b16 %v1564, %v1563
      %v1579 = vpack.c.b16 %v1566, %v1565
      %v1580 = vpack.c.b16 %v1568, %v1567
      %v1581 = vpack.c.b16 %v1570, %v1569
      %v1582 = vpack.c.b16 %v1572, %v1571
      %v1583 = vpack.c.b16 %v1574, %v1573
      %v1584 = vpack.c.b16 %v1576, %v1575
      %1593 = vmatprep.subr.bf16.mxu0 0
      %1594 = vmatpush1.bf16.msra.mxu0 %v1577
      %1595 = vmatprep.subr.bf16.mxu0 0
      %1596 = vmatpush1.bf16.msra.mxu0 %v1578
      %1597 = vmatprep.subr.bf16.mxu0 0
      %1598 = vmatpush1.bf16.msra.mxu0 %v1579
      %1599 = vmatprep.subr.bf16.mxu0 0
      %1600 = vmatpush1.bf16.msra.mxu0 %v1580
      %1601 = vmatprep.subr.bf16.mxu0 0
      %1602 = vmatpush1.bf16.msra.mxu0 %v1581
      %1603 = vmatprep.subr.bf16.mxu0 0
      %1604 = vmatpush1.bf16.msra.mxu0 %v1582
      %1605 = vmatprep.subr.bf16.mxu0 0
      %1606 = vmatpush1.bf16.msra.mxu0 %v1583
      %1607 = vmatprep.subr.bf16.mxu0 0
      %1608 = vmatpush1.bf16.msra.mxu0 %v1584
      %1609 = vmatprep.subr.bf16.mxu0 0
      %1610 = vmatpush1.bf16.msra.mxu0 0
      %1611 = vmatprep.subr.bf16.mxu0 0
      %1612 = vmatpush1.bf16.msra.mxu0 0
      %1613 = vmatprep.subr.bf16.mxu0 0
      %1614 = vmatpush1.bf16.msra.mxu0 0
      %1615 = vmatprep.subr.bf16.mxu0 0
      %1616 = vmatpush1.bf16.msra.mxu0 0
      %1617 = vmatprep.subr.bf16.mxu0 0
      %1618 = vmatpush1.bf16.msra.mxu0 0
      %1619 = vmatprep.subr.bf16.mxu0 0
      %1620 = vmatpush1.bf16.msra.mxu0 0
      %1621 = vmatprep.subr.bf16.mxu0 0
      %1622 = vmatpush1.bf16.msra.mxu0 0
      %1623 = vmatprep.subr.bf16.mxu0 0
      %1624 = vmatpush1.bf16.msra.mxu0 0
      %1625 = vmatprep.mubr.bf16.mxu0 0
      %1626 = vmatmul.mubr.bf16.gmra.mrb[0].mxu0 %v1520
      %v1627 = vpop.f32.mrb[0].mxu0
      %v1628 = vadd.f32 %v1543, %v1627
      %v1629 = vpop.f32.mrb[0].mxu0
      %v1630 = vpop.f32.mrb[0].mxu0
      %v1631 = vadd.f32 %v1543, %v1630
      %v1632 = vpop.f32.mrb[0].mxu0
      %1633 = vmatprep.mubr.bf16.mxu0 0
      %1634 = vmatmul.mubr.bf16.gmra.mrb[0].mxu0 %v1521
      %v1635 = vpop.f32.mrb[0].mxu0
      %v1636 = vadd.f32 %v1543, %v1635
      %v1637 = vpop.f32.mrb[0].mxu0
      %v1638 = vpop.f32.mrb[0].mxu0
      %v1639 = vpop.f32.mrb[0].mxu0
      %1640 = vdwg.mxu0
      %v1641 = vadd.f32 %v1628, %v1435
      %v1642 = vadd.f32 %v1631, %v1436
      %v1643 = vadd.f32 %v1636, %v1437
      %v1644 = vsel %vm518, %v1641, 0.0
      %1645 = vadd.xlane.f32.xlu0 %v1644
      %v1646 = vpop.xlane.xlu0 %1645
      %v1647 = vsel %vm518, %v1642, 0.0
      %1648 = vadd.xlane.f32.xlu0 %v1647
      %v1649 = vpop.xlane.xlu0 %1648
      %v1650 = vsel %vm1383, %v1643, 0.0
      %1651 = vadd.xlane.f32.xlu0 %v1650
      %v1652 = vpop.xlane.xlu0 %1651
      %v1653 = vmul.f32 %v1646, %v1387
      %v1654 = vmul.f32 %v1649, %v1387
      %v1655 = vmul.f32 %v1652, %v1387
      %v1656 = vsub.f32 %v1641, %v1653
      %v1657 = vsub.f32 %v1642, %v1654
      %v1658 = vsub.f32 %v1643, %v1655
      %v1659 = vmul.f32 %v1656, %v1656
      %v1660 = vmul.f32 %v1657, %v1657
      %v1661 = vmul.f32 %v1658, %v1658
      %v1662 = vsel %vm518, %v1659, 0.0
      %1663 = vadd.xlane.f32.xlu0 %v1662
      %v1664 = vpop.xlane.xlu0 %1663
      %v1665 = vsel %vm518, %v1660, 0.0
      %1666 = vadd.xlane.f32.xlu0 %v1665
      %v1667 = vpop.xlane.xlu0 %1666
      %v1668 = vsel %vm1383, %v1661, 0.0
      %1669 = vadd.xlane.f32.xlu0 %v1668
      %v1670 = vpop.xlane.xlu0 %1669
      %v1671 = vmul.f32 %v1664, %v1387
      %v1672 = vmul.f32 %v1667, %v1387
      %v1673 = vmul.f32 %v1670, %v1387
      %v1674 = vadd.f32 %v1671, 1e-05
      %v1675 = vadd.f32 %v1672, 1e-05
      %v1676 = vadd.f32 %v1673, 1e-05
      %v1677 = vrsqrt.pop %v1674
      %v1678 = vrsqrt.pop %v1675
      %v1679 = vrsqrt.pop %v1676
      %v1680 = vmul.f32 %v1656, %v1677
      %v1681 = vmul.f32 %v1657, %v1678
      %v1682 = vmul.f32 %v1658, %v1679
      %v1683 = vld [vmem:[%s12] sm:$0x1]
      %v1685 = vlaneseq
      %v1686 = vshrl.u32 %v1685, 7
      %v1687 = vsub.s32 0, %v1686
      %v1688 = vrot.slane %v1683, %v1687
      %v1690 = vmul.f32 %v1680, %v1688
      %v1691 = vmul.f32 %v1681, %v1688
      %v1692 = vmul.f32 %v1682, %v1688
      %v1693 = vld [vmem:[%s13] sm:$0x1]
      %v1695 = vlaneseq
      %v1696 = vshrl.u32 %v1695, 7
      %v1697 = vsub.s32 0, %v1696
      %v1698 = vrot.slane %v1693, %v1697
      %v1700 = vadd.f32 %v1690, %v1698
      %v1701 = vadd.f32 %v1691, %v1698
      %v1702 = vadd.f32 %v1692, %v1698
      %v1703 = vpack.c.bf16 %v1701, %v1700
      %v1704 = vpack.c.bf16 %v1702, %v1702
      %v1707 = vunpack.c.l.b16 %v1703
      %v1708 = vunpack.c.h.b16 %v1703
      %v1709 = vunpack.c.l.b16 %v1704
      %v1710 = vpack.c.b16 %v1707, %v1707
      %v1711 = vpack.c.b16 %v1708, %v1708
      %v1712 = vpack.c.b16 %v1709, %v1709
      %vm1716 = vcmask 257024
      %1717 = vst.msk [vmem:[%s481] sm:$0xf] %vm1716, %v1710
      %1718 = vst.msk [vmem:[%s481 + $0x4] sm:$0xf] %vm1716, %v1711
      %vm1719 = vcmask 253952
      %vm1720 = vsmask.f32 256
      %vm1721 = vmand %vm1719, %vm1720
      %v1722 = vld [vmem:[%s481 + $0x8] sm:$0x1]
      %v1723 = vsel %vm1721, %v1712, %v1722
      %1724 = vst [vmem:[%s481 + $0x8] sm:$0x1] %v1723
      %p1725 = scmp.lt.s32.totalorder %s25, 1
      %s1726 = scalar_select %p1725, %s25, 1
      %s1727 = smul.addr %s1726, 3
      %s1728 = smul.addr %s1727, 4
      %s1729 = scalar_lea.vmem %s14, %s1728
      // Predicated region
      $region77: #{tri_mt_v1_forward.17} parent=75 // pred_check
        %p1730 = pneg %p347
      $region78: #{tri_mt_v1_forward.17} parent=75 // pred_check_branch
        %1732 = sbr.rel (%p1730) target = $region80
      $region79: #{tri_mt_v1_forward.17} parent=75 // pred_region
        _
      $region80: #{tri_mt_v1_forward.17} parent=75 // pred_fallthru
        _
    $region76: #{tri_mt_v1_forward.17} parent=5 // pred_fallthru
      _
    %p1733 = scmp.le.s32.totalorder 2, %s20
    // Predicated region
    $region81: #{tri_mt_v1_forward.17} parent=5 // pred_check
      %p1734 = pneg %p1733
    $region82: #{tri_mt_v1_forward.17} parent=5 // pred_check_branch
      %1736 = sbr.rel (%p1734) target = $region84
    $region83: #{tri_mt_v1_forward.17} parent=5 // pred_region
      %s1737 = ssub.s32 %s20, 2
      // Predicated region
      $region85: #{tri_mt_v1_forward.17} parent=83 // pred_check
        %p1738 = pneg %p353
      $region86: #{tri_mt_v1_forward.17} parent=83 // pred_check_branch
        %1740 = sbr.rel (%p1738) target = $region88
      $region87: #{tri_mt_v1_forward.17} parent=83 // pred_region
        %p1741 = scmp.lt.s32.totalorder %s26, 1
        %s1742 = scalar_select %p1741, %s26, 1
        %s1743 = smul.addr %s1742, 3
        %s1744 = smul.addr %s1743, 4
        %s1745 = scalar_lea.vmem %s14, %s1744
      $region88: #{tri_mt_v1_forward.17} parent=83 // pred_fallthru
        _
    $region84: #{tri_mt_v1_forward.17} parent=5 // pred_fallthru
      _
  $region6: #{tri_mt_v1_forward.17} parent=0 // loop_footer
    %s24 = sadd.s32 1, %s20
  $region7: #{tri_mt_v1_forward.17} parent=0 // loop_footer_branch
    %19 = sbr.rel target = $region3
  $region8: #{tri_mt_v1_forward.17} parent=0 // loop_exit
    _

</llo_original>
